<compile_context>
chip_gen: v7x
topology: tpu7x:2x2x1
jax: 0.10.0
libtpu: 0.0.40
codegen_flags: <defaults>
</compile_context>

<pallas_src>
import math

import jax
import jax.numpy as jnp
import numpy as np
from jax.experimental import pallas as pl
from jax.experimental.pallas import tpu as pltpu


# -----------------------------------------------------------------------------
# Deterministic Clebsch-Gordan coefficients (Racah formula).
# TODO(synk): rascaline/metatensor works in the real-spherical-harmonic basis; the fixed
# unitary basis change is not applied here (contraction structure is identical).
# -----------------------------------------------------------------------------
def _clebsch_gordan(j1, m1, j2, m2, j, m):
    if m != m1 + m2:
        return 0.0
    if not (abs(j1 - j2) <= j <= j1 + j2):
        return 0.0
    if abs(m1) > j1 or abs(m2) > j2 or abs(m) > j:
        return 0.0
    f = math.factorial
    pref = math.sqrt(
        (2 * j + 1)
        * f(j + j1 - j2) * f(j - j1 + j2) * f(j1 + j2 - j)
        / f(j1 + j2 + j + 1)
    )
    pref *= math.sqrt(
        f(j + m) * f(j - m) * f(j1 - m1) * f(j1 + m1) * f(j2 - m2) * f(j2 + m2)
    )
    total = 0.0
    for k in range(0, j1 + j2 + 1):
        args = [k, j1 + j2 - j - k, j1 - m1 - k, j2 + m2 - k,
                j - j2 + m1 + k, j - j1 - m2 + k]
        if any(a < 0 for a in args):
            continue
        denom = 1
        for a in args:
            denom *= f(a)
        total += (-1) ** k / denom
    return pref * total


def _cg_tensor(l1, l2, lam):
    cg = np.zeros((2 * l1 + 1, 2 * l2 + 1, 2 * lam + 1), dtype=np.float64)
    for i1, m1 in enumerate(range(-l1, l1 + 1)):
        for i2, m2 in enumerate(range(-l2, l2 + 1)):
            M = m1 + m2
            if abs(M) > lam:
                continue
            cg[i1, i2, M + lam] = _clebsch_gordan(l1, m1, l2, m2, lam, M)
    return cg


# -----------------------------------------------------------------------------
# Pallas kernel: fused CG tensor product for one l1 against all l2, all lambdas.
# CG coefficients are static compile-time constants; zero terms are skipped at
# trace time.  Layout: samples on the lane (last) axis; register-resident
# [P2_block, TILE] accumulators; one unmasked slab store per (o, p1).
# -----------------------------------------------------------------------------
def _make_cg_kernel(terms_by_o, P1):
    """terms_by_o[o] = [(m1, m2_global, c), ...] with c != 0 for output row o."""

    def kernel(r1_ref, r2_ref, out_ref):
        # r1_ref: [M1, P1, TILE], r2_ref: [M2cat, P2_blk, TILE],
        # out_ref: [TotM, P1, P2_blk, TILE]
        for o, terms in enumerate(terms_by_o):
            for p1 in range(P1):
                acc = None
                for (m1, m2, c) in terms:
                    row = r1_ref[m1, p1:p1 + 1, :]        # [1, TILE]
                    t = (c * row) * r2_ref[m2, :, :]      # [P2_blk, TILE]
                    acc = t if acc is None else acc + t
                if acc is None:   # all-zero CG row (does not occur in practice)
                    acc = jnp.zeros(out_ref.shape[2:], jnp.float32)
                out_ref[o, p1, :, :] = acc.astype(out_ref.dtype)

    return kernel


# -----------------------------------------------------------------------------
# Tiling / VMEM planning
# -----------------------------------------------------------------------------
def _round_up(x, m):
    return ((x + m - 1) // m) * m


def _vmem_plan():
    """Generation-aware VMEM budgeting (v7x has 64 MiB/TC, v5e/v6e 128 MiB)."""
    try:
        cap = int(pltpu.get_tpu_info().vmem_capacity_bytes)
    except Exception:
        cap = 64 * 1024 * 1024  # conservative fallback
    limit = max(24 * 1024 * 1024, min(int(cap * 0.65), cap - 16 * 1024 * 1024))
    budget = int(limit * 0.85)              # tile selection consistent with the limit
    max_tile = 1024 if cap >= 96 * 1024 * 1024 else 512
    return budget, int(limit), max_tile


def _plan_tiles(S, M1, M2, P1, P2, TotM, budget, max_tile):
    """Pick (sample tile, P2 block, padded sample count) under the VMEM budget."""
    S128 = _round_up(max(int(S), 1), 128)

    def step_bytes(tile, bp2):
        # double-buffered input + output blocks per grid step (f32)
        return 2 * 4 * tile * (M1 * P1 + M2 * bp2 + TotM * P1 * bp2)

    # P2-axis block candidates: full P2 first, then multiples of 8 dividing P2.
    bp2_cands = [P2] + [d for d in range(8 * (P2 // 8), 7, -8)
                        if d < P2 and P2 % d == 0]

    tile, bp2 = 128, bp2_cands[-1]
    for cand in bp2_cands:
        t = max_tile
        while t > 128 and step_bytes(t, cand) > budget:
            t //= 2
        if step_bytes(t, cand) <= budget:
            tile, bp2 = t, cand
            break

    tile = min(tile, S128)                              # multiple of 128 either way
    # Keep >= 2 parallel sample steps when possible so v7x megacore can shard.
    if S128 // tile < 2 and tile > 128:
        tile = max(128, ((S128 // 2) // 128) * 128)
    S_pad = _round_up(S, tile)
    return tile, bp2, S_pad


# -----------------------------------------------------------------------------
# pallas_call wrapper: one call per l1, all (l2, lambda) outputs stacked.
# -----------------------------------------------------------------------------
def _cg_couple_l1_fused(rho1_t, rho2_t, terms_by_o, *, tile, bp2, vmem_limit,
                        out_dtype=jnp.float32):
    """
    rho1_t: f32[M1, P1, S_pad]      (samples on lanes)
    rho2_t: f32[M2cat, P2, S_pad]   (all l2 stacked along the m axis)
    Returns out_dtype[TotM, P1, P2, S_pad].
    """
    M1, P1, S_pad = rho1_t.shape
    M2, P2, _ = rho2_t.shape
    TotM = len(terms_by_o)
    assert S_pad % tile == 0 and P2 % bp2 == 0
    grid = (S_pad // tile, P2 // bp2)

    nnz = sum(len(t) for t in terms_by_o)
    out_isize = jnp.dtype(out_dtype).itemsize
    cost = pl.CostEstimate(
        flops=int(3 * nnz * P1 * P2 * S_pad),
        transcendentals=0,
        bytes_accessed=int(4 * S_pad * (M1 * P1 + M2 * P2)
                           + out_isize * S_pad * TotM * P1 * P2),
    )

    return pl.pallas_call(
        _make_cg_kernel(terms_by_o, P1),
        out_shape=jax.ShapeDtypeStruct((TotM, P1, P2, S_pad), out_dtype),
        grid=grid,
        in_specs=[
            pl.BlockSpec((M1, P1, tile), lambda i, j: (0, 0, i)),
            pl.BlockSpec((M2, bp2, tile), lambda i, j: (0, j, i)),
        ],
        out_specs=pl.BlockSpec((TotM, P1, bp2, tile), lambda i, j: (0, 0, j, i)),
        compiler_params=pltpu.CompilerParams(
            dimension_semantics=("parallel", "parallel"),
            vmem_limit_bytes=int(vmem_limit),
        ),
        cost_estimate=cost,
    )(rho1_t, rho2_t)


@jax.jit
def _gather_structure(out_t, idx):
    """Per-structure sample gather + relayout fused into one XLA pass.

    out_t: [TotM, P1, P2, S_pad] (samples last); idx: int32[n_atoms].
    Returns [n_atoms, TotM, P1*P2].  Padded sample columns are never gathered.
    """
    g = jnp.take(out_t, idx, axis=3)                      # [TotM, P1, P2, n]
    return jnp.transpose(g, (3, 0, 1, 2)).reshape(
        idx.shape[0], out_t.shape[0], -1)


# -----------------------------------------------------------------------------
# Module analogue
# -----------------------------------------------------------------------------
class LambdaSoapCalculatorPallas:
    def __init__(self, atom_types, spherical_expansion_hypers,
                 density_correlations_hypers):
        self._atom_types = list(atom_types)
        self._max_angular = spherical_expansion_hypers["max_angular"]
        self._max_radial = spherical_expansion_hypers["max_radial"]
        self._out_max_angular = density_correlations_hypers["max_angular"]

        self._l_list = list(range(self._max_angular + 1))
        # Offsets of each l2 inside the m-concatenated rho_cat array.
        self._m2_offsets, off = {}, 0
        for l2 in self._l_list:
            self._m2_offsets[l2] = off
            off += 2 * l2 + 1
        self._M2cat = off

        # Per output key (lambda, l1, l2) CG tensors (reference / inspection).
        self._cg = {}
        # Per l1: all (l2, lambda) outputs fused into one kernel.
        self._per_l1 = {}
        for l1 in self._l_list:
            terms_by_o, slices, o_off = [], [], 0
            for l2 in self._l_list:
                for lam in range(self._out_max_angular + 1):
                    if not (abs(l1 - l2) <= lam <= l1 + l2):
                        continue
                    cg = _cg_tensor(l1, l2, lam)
                    self._cg[(lam, l1, l2)] = cg
                    for Mi in range(2 * lam + 1):
                        terms = []
                        for i1 in range(2 * l1 + 1):
                            for i2 in range(2 * l2 + 1):
                                c = cg[i1, i2, Mi]
                                if abs(c) > 1e-12:
                                    terms.append(
                                        (i1, self._m2_offsets[l2] + i2, float(c)))
                        terms_by_o.append(terms)
                    slices.append((lam, l2, o_off, 2 * lam + 1))
                    o_off += 2 * lam + 1
            self._per_l1[l1] = {"terms": terms_by_o, "slices": slices,
                                "tot_m": o_off}

    def forward(self, density_by_neighbor, structure_index, *,
                structure_id=None, out_dtype=jnp.float32):
        """
        density_by_neighbor: {l: f32[S, 2l+1, n_species_neighbor, n_max]}
            synthetic stand-in for the SphericalExpansion output blocks.
        structure_index: int[S] mapping each sample (atom) to its structure.
        out_dtype: set to jnp.bfloat16 to halve the dominant HBM write stream
            if downstream tolerates it (default float32 preserves semantics).
        """
        # TODO(synk): the rascaline SphericalExpansion calculator (neighbour lists,
        # radial integrals, spherical harmonics) has no clean Pallas equivalent; its
        # output density coefficients are taken as inputs here.

        # keys_to_properties('species_neighbor') -> merge neighbour species into the
        # property axis (metadata reshape, glue).
        density = {
            l: jnp.asarray(v, jnp.float32).reshape(v.shape[0], v.shape[1], -1)
            for l, v in density_by_neighbor.items()
        }
        S = density[self._l_list[0]].shape[0]
        P = density[self._l_list[0]].shape[2]

        tot_m_max = max(info["tot_m"] for info in self._per_l1.values())
        budget, vmem_limit, max_tile = _vmem_plan()
        tile, bp2, S_pad = _plan_tiles(
            S, 2 * self._max_angular + 1, self._M2cat, P, P, tot_m_max,
            budget, max_tile)

        # Samples-on-lanes layout; zero-pad samples onto the tile grid
        # (wrapper-side layout plumbing for the small inputs only).
        rho_t = {}
        for l in self._l_list:
            r = jnp.transpose(density[l], (1, 2, 0))         # [2l+1, P, S]
            if S_pad != S:
                r = jnp.pad(r, ((0, 0), (0, 0), (0, S_pad - S)))
            rho_t[l] = r
        rho_cat = jnp.concatenate([rho_t[l] for l in self._l_list], axis=0)

        # DensityCorrelations (CG tensor product): one fused pallas_call per l1.
        out_by_l1 = {}
        for l1 in self._l_list:
            info = self._per_l1[l1]
            out_by_l1[l1] = _cg_couple_l1_fused(
                rho_t[l1], rho_cat, info["terms"],
                tile=tile, bp2=bp2, vmem_limit=vmem_limit, out_dtype=out_dtype)

        # Per-structure split + relayout to [n_atoms, 2*lam+1, P1*P2] blocks.
        # (The split exists in the reference module too; the relayout is fused with
        # the per-structure gather rather than a monolithic transpose pass.)
        structure_index = np.asarray(structure_index)
        ids = np.unique(structure_index)
        if (structure_id is None
                or (len(structure_id) == len(ids)
                    and np.all(np.asarray(structure_id) == ids))):
            structure_id = [int(a) for a in ids]

        per_structure = []
        for A, old in zip(structure_id, ids):
            idx = jnp.asarray(np.nonzero(structure_index == old)[0], jnp.int32)
            blocks = {}
            for l1 in self._l_list:
                arr = _gather_structure(out_by_l1[l1], idx)  # [n, TotM_l1, P*P]
                for (lam, l2, off, m) in self._per_l1[l1]["slices"]:
                    blocks[(lam, l1, l2)] = arr[:, off:off + m, :]
            per_structure.append({"structure": int(A), "blocks": blocks})
        return per_structure


# -----------------------------------------------------------------------------
# Main
# -----------------------------------------------------------------------------
if __name__ == "__main__":
    key = jax.random.PRNGKey(0)

    atom_types = [1, 8]
    spherical_expansion_hypers = {"cutoff": 3.0, "max_radial": 4, "max_angular": 2}
    density_correlations_hypers = {"max_angular": 2, "correlation_order": 2}

    n_structures = 2
    atoms_per_structure = 8
    S = n_structures * atoms_per_structure          # total samples (atoms)
    n_species = len(atom_types)
    n_max = spherical_expansion_hypers["max_radial"]
    max_l = spherical_expansion_hypers["max_angular"]

    structure_index = np.repeat(np.arange(n_structures), atoms_per_structure)

    # Synthetic, deterministic spherical-expansion density coefficients.
    density_by_neighbor = {}
    for l in range(max_l + 1):
        key, sub = jax.random.split(key)
        density_by_neighbor[l] = jax.random.normal(
            sub, (S, 2 * l + 1, n_species, n_max), dtype=jnp.float32
        )

    calc = LambdaSoapCalculatorPallas(
        atom_types, spherical_expansion_hypers, density_correlations_hypers
    )
    lsoap = calc.forward(density_by_neighbor, structure_index,
                         structure_id=[10, 11])
    jax.block_until_ready([d["blocks"] for d in lsoap])

    # Correctness check against a plain-JAX einsum reference.
    dens = {l: v.reshape(S, 2 * l + 1, -1) for l, v in density_by_neighbor.items()}
    ok = True
    for (lam, l1, l2), cg in calc._cg.items():
        ref = jnp.einsum(
            "abM,sap,sbq->sMpq",
            jnp.asarray(cg, jnp.float32), dens[l1], dens[l2],
        ).reshape(S, 2 * lam + 1, -1)
        got = jnp.concatenate([d["blocks"][(lam, l1, l2)] for d in lsoap], axis=0)
        if not np.allclose(np.asarray(got), np.asarray(ref), atol=1e-4, rtol=1e-4):
            ok = False

    print("KERNEL_OK" if ok else "KERNEL_MISMATCH")
</pallas_src>

<mosaic_0001>
module attributes {stable_mosaic.version = 11 : i64} {
  func.func @kernel(%arg0: i32, %arg1: i32, %arg2: memref<1x8x128xf32, #tpu.memory_space<vmem>>, %arg3: memref<9x8x128xf32, #tpu.memory_space<vmem>>, %arg4: memref<9x8x8x128xf32, #tpu.memory_space<vmem>>) attributes {dimension_semantics = [#tpu.dimension_semantics<parallel>, #tpu.dimension_semantics<parallel>], iteration_bounds = array<i64: 1, 1>, scalar_prefetch = 0 : i64, scratch_operands = 0 : i64, tpu.core_type = #tpu.core_type<tc>, window_params = [{transform_indices = @transform_0, window_bounds = array<i64: 1, 8, 128>}, {transform_indices = @transform_1, window_bounds = array<i64: 9, 8, 128>}, {transform_indices = @transform_2, window_bounds = array<i64: 9, 8, 8, 128>}]} {
    %c0 = arith.constant 0 : index
    %c0_0 = arith.constant 0 : index
    %c0_1 = arith.constant 0 : index
    %0 = vector.load %arg2[%c0, %c0_0, %c0_1] : memref<1x8x128xf32, #tpu.memory_space<vmem>>, vector<1x1x128xf32>
    %1 = vector.shape_cast %0 : vector<1x1x128xf32> to vector<1x128xf32>
    %cst = arith.constant 1.000000e+00 : f32
    %2 = vector.broadcast %cst : f32 to vector<1x128xf32>
    %3 = arith.mulf %2, %1 : vector<1x128xf32>
    %c0_2 = arith.constant 0 : index
    %c0_3 = arith.constant 0 : index
    %c0_4 = arith.constant 0 : index
    %4 = vector.load %arg3[%c0_2, %c0_3, %c0_4] : memref<9x8x128xf32, #tpu.memory_space<vmem>>, vector<1x8x128xf32>
    %5 = vector.shape_cast %4 : vector<1x8x128xf32> to vector<8x128xf32>
    %6 = vector.broadcast %3 : vector<1x128xf32> to vector<8x128xf32>
    %7 = arith.mulf %6, %5 : vector<8x128xf32>
    %c0_5 = arith.constant 0 : index
    %c0_6 = arith.constant 0 : index
    %c0_7 = arith.constant 0 : index
    %c0_8 = arith.constant 0 : index
    %8 = vector.load %arg4[%c0_5, %c0_6, %c0_7, %c0_8] : memref<9x8x8x128xf32, #tpu.memory_space<vmem>>, vector<1x1x8x128xf32>
    %9 = vector.shape_cast %8 : vector<1x1x8x128xf32> to vector<8x128xf32>
    %10 = vector.shape_cast %7 : vector<8x128xf32> to vector<1x1x8x128xf32>
    tpu.vector_store %arg4[%c0_5, %c0_6, %c0_7, %c0_8], %10 {strides = array<i32>} : memref<9x8x8x128xf32, #tpu.memory_space<vmem>>, vector<1x1x8x128xf32>,
    %c0_9 = arith.constant 0 : index
    %c1 = arith.constant 1 : index
    %c0_10 = arith.constant 0 : index
    %11 = vector.load %arg2[%c0_9, %c1, %c0_10] : memref<1x8x128xf32, #tpu.memory_space<vmem>>, vector<1x1x128xf32>
    %12 = vector.shape_cast %11 : vector<1x1x128xf32> to vector<1x128xf32>
    %cst_11 = arith.constant 1.000000e+00 : f32
    %13 = vector.broadcast %cst_11 : f32 to vector<1x128xf32>
    %14 = arith.mulf %13, %12 : vector<1x128xf32>
    %c0_12 = arith.constant 0 : index
    %c0_13 = arith.constant 0 : index
    %c0_14 = arith.constant 0 : index
    %15 = vector.load %arg3[%c0_12, %c0_13, %c0_14] : memref<9x8x128xf32, #tpu.memory_space<vmem>>, vector<1x8x128xf32>
    %16 = vector.shape_cast %15 : vector<1x8x128xf32> to vector<8x128xf32>
    %17 = vector.broadcast %14 : vector<1x128xf32> to vector<8x128xf32>
    %18 = arith.mulf %17, %16 : vector<8x128xf32>
    %c0_15 = arith.constant 0 : index
    %c1_16 = arith.constant 1 : index
    %c0_17 = arith.constant 0 : index
    %c0_18 = arith.constant 0 : index
    %19 = vector.load %arg4[%c0_15, %c1_16, %c0_17, %c0_18] : memref<9x8x8x128xf32, #tpu.memory_space<vmem>>, vector<1x1x8x128xf32>
    %20 = vector.shape_cast %19 : vector<1x1x8x128xf32> to vector<8x128xf32>
    %21 = vector.shape_cast %18 : vector<8x128xf32> to vector<1x1x8x128xf32>
    tpu.vector_store %arg4[%c0_15, %c1_16, %c0_17, %c0_18], %21 {strides = array<i32>} : memref<9x8x8x128xf32, #tpu.memory_space<vmem>>, vector<1x1x8x128xf32>,
    %c0_19 = arith.constant 0 : index
    %c2 = arith.constant 2 : index
    %c0_20 = arith.constant 0 : index
    %22 = vector.load %arg2[%c0_19, %c2, %c0_20] : memref<1x8x128xf32, #tpu.memory_space<vmem>>, vector<1x1x128xf32>
    %23 = vector.shape_cast %22 : vector<1x1x128xf32> to vector<1x128xf32>
    %cst_21 = arith.constant 1.000000e+00 : f32
    %24 = vector.broadcast %cst_21 : f32 to vector<1x128xf32>
    %25 = arith.mulf %24, %23 : vector<1x128xf32>
    %c0_22 = arith.constant 0 : index
    %c0_23 = arith.constant 0 : index
    %c0_24 = arith.constant 0 : index
    %26 = vector.load %arg3[%c0_22, %c0_23, %c0_24] : memref<9x8x128xf32, #tpu.memory_space<vmem>>, vector<1x8x128xf32>
    %27 = vector.shape_cast %26 : vector<1x8x128xf32> to vector<8x128xf32>
    %28 = vector.broadcast %25 : vector<1x128xf32> to vector<8x128xf32>
    %29 = arith.mulf %28, %27 : vector<8x128xf32>
    %c0_25 = arith.constant 0 : index
    %c2_26 = arith.constant 2 : index
    %c0_27 = arith.constant 0 : index
    %c0_28 = arith.constant 0 : index
    %30 = vector.load %arg4[%c0_25, %c2_26, %c0_27, %c0_28] : memref<9x8x8x128xf32, #tpu.memory_space<vmem>>, vector<1x1x8x128xf32>
    %31 = vector.shape_cast %30 : vector<1x1x8x128xf32> to vector<8x128xf32>
    %32 = vector.shape_cast %29 : vector<8x128xf32> to vector<1x1x8x128xf32>
    tpu.vector_store %arg4[%c0_25, %c2_26, %c0_27, %c0_28], %32 {strides = array<i32>} : memref<9x8x8x128xf32, #tpu.memory_space<vmem>>, vector<1x1x8x128xf32>,
    %c0_29 = arith.constant 0 : index
    %c3 = arith.constant 3 : index
    %c0_30 = arith.constant 0 : index
    %33 = vector.load %arg2[%c0_29, %c3, %c0_30] : memref<1x8x128xf32, #tpu.memory_space<vmem>>, vector<1x1x128xf32>
    %34 = vector.shape_cast %33 : vector<1x1x128xf32> to vector<1x128xf32>
    %cst_31 = arith.constant 1.000000e+00 : f32
    %35 = vector.broadcast %cst_31 : f32 to vector<1x128xf32>
    %36 = arith.mulf %35, %34 : vector<1x128xf32>
    %c0_32 = arith.constant 0 : index
    %c0_33 = arith.constant 0 : index
    %c0_34 = arith.constant 0 : index
    %37 = vector.load %arg3[%c0_32, %c0_33, %c0_34] : memref<9x8x128xf32, #tpu.memory_space<vmem>>, vector<1x8x128xf32>
    %38 = vector.shape_cast %37 : vector<1x8x128xf32> to vector<8x128xf32>
    %39 = vector.broadcast %36 : vector<1x128xf32> to vector<8x128xf32>
    %40 = arith.mulf %39, %38 : vector<8x128xf32>
    %c0_35 = arith.constant 0 : index
    %c3_36 = arith.constant 3 : index
    %c0_37 = arith.constant 0 : index
    %c0_38 = arith.constant 0 : index
    %41 = vector.load %arg4[%c0_35, %c3_36, %c0_37, %c0_38] : memref<9x8x8x128xf32, #tpu.memory_space<vmem>>, vector<1x1x8x128xf32>
    %42 = vector.shape_cast %41 : vector<1x1x8x128xf32> to vector<8x128xf32>
    %43 = vector.shape_cast %40 : vector<8x128xf32> to vector<1x1x8x128xf32>
    tpu.vector_store %arg4[%c0_35, %c3_36, %c0_37, %c0_38], %43 {strides = array<i32>} : memref<9x8x8x128xf32, #tpu.memory_space<vmem>>, vector<1x1x8x128xf32>,
    %c0_39 = arith.constant 0 : index
    %c4 = arith.constant 4 : index
    %c0_40 = arith.constant 0 : index
    %44 = vector.load %arg2[%c0_39, %c4, %c0_40] : memref<1x8x128xf32, #tpu.memory_space<vmem>>, vector<1x1x128xf32>
    %45 = vector.shape_cast %44 : vector<1x1x128xf32> to vector<1x128xf32>
    %cst_41 = arith.constant 1.000000e+00 : f32
    %46 = vector.broadcast %cst_41 : f32 to vector<1x128xf32>
    %47 = arith.mulf %46, %45 : vector<1x128xf32>
    %c0_42 = arith.constant 0 : index
    %c0_43 = arith.constant 0 : index
    %c0_44 = arith.constant 0 : index
    %48 = vector.load %arg3[%c0_42, %c0_43, %c0_44] : memref<9x8x128xf32, #tpu.memory_space<vmem>>, vector<1x8x128xf32>
    %49 = vector.shape_cast %48 : vector<1x8x128xf32> to vector<8x128xf32>
    %50 = vector.broadcast %47 : vector<1x128xf32> to vector<8x128xf32>
    %51 = arith.mulf %50, %49 : vector<8x128xf32>
    %c0_45 = arith.constant 0 : index
    %c4_46 = arith.constant 4 : index
    %c0_47 = arith.constant 0 : index
    %c0_48 = arith.constant 0 : index
    %52 = vector.load %arg4[%c0_45, %c4_46, %c0_47, %c0_48] : memref<9x8x8x128xf32, #tpu.memory_space<vmem>>, vector<1x1x8x128xf32>
    %53 = vector.shape_cast %52 : vector<1x1x8x128xf32> to vector<8x128xf32>
    %54 = vector.shape_cast %51 : vector<8x128xf32> to vector<1x1x8x128xf32>
    tpu.vector_store %arg4[%c0_45, %c4_46, %c0_47, %c0_48], %54 {strides = array<i32>} : memref<9x8x8x128xf32, #tpu.memory_space<vmem>>, vector<1x1x8x128xf32>,
    %c0_49 = arith.constant 0 : index
    %c5 = arith.constant 5 : index
    %c0_50 = arith.constant 0 : index
    %55 = vector.load %arg2[%c0_49, %c5, %c0_50] : memref<1x8x128xf32, #tpu.memory_space<vmem>>, vector<1x1x128xf32>
    %56 = vector.shape_cast %55 : vector<1x1x128xf32> to vector<1x128xf32>
    %cst_51 = arith.constant 1.000000e+00 : f32
    %57 = vector.broadcast %cst_51 : f32 to vector<1x128xf32>
    %58 = arith.mulf %57, %56 : vector<1x128xf32>
    %c0_52 = arith.constant 0 : index
    %c0_53 = arith.constant 0 : index
    %c0_54 = arith.constant 0 : index
    %59 = vector.load %arg3[%c0_52, %c0_53, %c0_54] : memref<9x8x128xf32, #tpu.memory_space<vmem>>, vector<1x8x128xf32>
    %60 = vector.shape_cast %59 : vector<1x8x128xf32> to vector<8x128xf32>
    %61 = vector.broadcast %58 : vector<1x128xf32> to vector<8x128xf32>
    %62 = arith.mulf %61, %60 : vector<8x128xf32>
    %c0_55 = arith.constant 0 : index
    %c5_56 = arith.constant 5 : index
    %c0_57 = arith.constant 0 : index
    %c0_58 = arith.constant 0 : index
    %63 = vector.load %arg4[%c0_55, %c5_56, %c0_57, %c0_58] : memref<9x8x8x128xf32, #tpu.memory_space<vmem>>, vector<1x1x8x128xf32>
    %64 = vector.shape_cast %63 : vector<1x1x8x128xf32> to vector<8x128xf32>
    %65 = vector.shape_cast %62 : vector<8x128xf32> to vector<1x1x8x128xf32>
    tpu.vector_store %arg4[%c0_55, %c5_56, %c0_57, %c0_58], %65 {strides = array<i32>} : memref<9x8x8x128xf32, #tpu.memory_space<vmem>>, vector<1x1x8x128xf32>,
    %c0_59 = arith.constant 0 : index
    %c6 = arith.constant 6 : index
    %c0_60 = arith.constant 0 : index
    %66 = vector.load %arg2[%c0_59, %c6, %c0_60] : memref<1x8x128xf32, #tpu.memory_space<vmem>>, vector<1x1x128xf32>
    %67 = vector.shape_cast %66 : vector<1x1x128xf32> to vector<1x128xf32>
    %cst_61 = arith.constant 1.000000e+00 : f32
    %68 = vector.broadcast %cst_61 : f32 to vector<1x128xf32>
    %69 = arith.mulf %68, %67 : vector<1x128xf32>
    %c0_62 = arith.constant 0 : index
    %c0_63 = arith.constant 0 : index
    %c0_64 = arith.constant 0 : index
    %70 = vector.load %arg3[%c0_62, %c0_63, %c0_64] : memref<9x8x128xf32, #tpu.memory_space<vmem>>, vector<1x8x128xf32>
    %71 = vector.shape_cast %70 : vector<1x8x128xf32> to vector<8x128xf32>
    %72 = vector.broadcast %69 : vector<1x128xf32> to vector<8x128xf32>
    %73 = arith.mulf %72, %71 : vector<8x128xf32>
    %c0_65 = arith.constant 0 : index
    %c6_66 = arith.constant 6 : index
    %c0_67 = arith.constant 0 : index
    %c0_68 = arith.constant 0 : index
    %74 = vector.load %arg4[%c0_65, %c6_66, %c0_67, %c0_68] : memref<9x8x8x128xf32, #tpu.memory_space<vmem>>, vector<1x1x8x128xf32>
    %75 = vector.shape_cast %74 : vector<1x1x8x128xf32> to vector<8x128xf32>
    %76 = vector.shape_cast %73 : vector<8x128xf32> to vector<1x1x8x128xf32>
    tpu.vector_store %arg4[%c0_65, %c6_66, %c0_67, %c0_68], %76 {strides = array<i32>} : memref<9x8x8x128xf32, #tpu.memory_space<vmem>>, vector<1x1x8x128xf32>,
    %c0_69 = arith.constant 0 : index
    %c7 = arith.constant 7 : index
    %c0_70 = arith.constant 0 : index
    %77 = vector.load %arg2[%c0_69, %c7, %c0_70] : memref<1x8x128xf32, #tpu.memory_space<vmem>>, vector<1x1x128xf32>
    %78 = vector.shape_cast %77 : vector<1x1x128xf32> to vector<1x128xf32>
    %cst_71 = arith.constant 1.000000e+00 : f32
    %79 = vector.broadcast %cst_71 : f32 to vector<1x128xf32>
    %80 = arith.mulf %79, %78 : vector<1x128xf32>
    %c0_72 = arith.constant 0 : index
    %c0_73 = arith.constant 0 : index
    %c0_74 = arith.constant 0 : index
    %81 = vector.load %arg3[%c0_72, %c0_73, %c0_74] : memref<9x8x128xf32, #tpu.memory_space<vmem>>, vector<1x8x128xf32>
    %82 = vector.shape_cast %81 : vector<1x8x128xf32> to vector<8x128xf32>
    %83 = vector.broadcast %80 : vector<1x128xf32> to vector<8x128xf32>
    %84 = arith.mulf %83, %82 : vector<8x128xf32>
    %c0_75 = arith.constant 0 : index
    %c7_76 = arith.constant 7 : index
    %c0_77 = arith.constant 0 : index
    %c0_78 = arith.constant 0 : index
    %85 = vector.load %arg4[%c0_75, %c7_76, %c0_77, %c0_78] : memref<9x8x8x128xf32, #tpu.memory_space<vmem>>, vector<1x1x8x128xf32>
    %86 = vector.shape_cast %85 : vector<1x1x8x128xf32> to vector<8x128xf32>
    %87 = vector.shape_cast %84 : vector<8x128xf32> to vector<1x1x8x128xf32>
    tpu.vector_store %arg4[%c0_75, %c7_76, %c0_77, %c0_78], %87 {strides = array<i32>} : memref<9x8x8x128xf32, #tpu.memory_space<vmem>>, vector<1x1x8x128xf32>,
    %c0_79 = arith.constant 0 : index
    %c0_80 = arith.constant 0 : index
    %c0_81 = arith.constant 0 : index
    %88 = vector.load %arg2[%c0_79, %c0_80, %c0_81] : memref<1x8x128xf32, #tpu.memory_space<vmem>>, vector<1x1x128xf32>
    %89 = vector.shape_cast %88 : vector<1x1x128xf32> to vector<1x128xf32>
    %cst_82 = arith.constant 1.000000e+00 : f32
    %90 = vector.broadcast %cst_82 : f32 to vector<1x128xf32>
    %91 = arith.mulf %90, %89 : vector<1x128xf32>
    %c1_83 = arith.constant 1 : index
    %c0_84 = arith.constant 0 : index
    %c0_85 = arith.constant 0 : index
    %92 = vector.load %arg3[%c1_83, %c0_84, %c0_85] : memref<9x8x128xf32, #tpu.memory_space<vmem>>, vector<1x8x128xf32>
    %93 = vector.shape_cast %92 : vector<1x8x128xf32> to vector<8x128xf32>
    %94 = vector.broadcast %91 : vector<1x128xf32> to vector<8x128xf32>
    %95 = arith.mulf %94, %93 : vector<8x128xf32>
    %c1_86 = arith.constant 1 : index
    %c0_87 = arith.constant 0 : index
    %c0_88 = arith.constant 0 : index
    %c0_89 = arith.constant 0 : index
    %96 = vector.load %arg4[%c1_86, %c0_87, %c0_88, %c0_89] : memref<9x8x8x128xf32, #tpu.memory_space<vmem>>, vector<1x1x8x128xf32>
    %97 = vector.shape_cast %96 : vector<1x1x8x128xf32> to vector<8x128xf32>
    %98 = vector.shape_cast %95 : vector<8x128xf32> to vector<1x1x8x128xf32>
    tpu.vector_store %arg4[%c1_86, %c0_87, %c0_88, %c0_89], %98 {strides = array<i32>} : memref<9x8x8x128xf32, #tpu.memory_space<vmem>>, vector<1x1x8x128xf32>,
    %c0_90 = arith.constant 0 : index
    %c1_91 = arith.constant 1 : index
    %c0_92 = arith.constant 0 : index
    %99 = vector.load %arg2[%c0_90, %c1_91, %c0_92] : memref<1x8x128xf32, #tpu.memory_space<vmem>>, vector<1x1x128xf32>
    %100 = vector.shape_cast %99 : vector<1x1x128xf32> to vector<1x128xf32>
    %cst_93 = arith.constant 1.000000e+00 : f32
    %101 = vector.broadcast %cst_93 : f32 to vector<1x128xf32>
    %102 = arith.mulf %101, %100 : vector<1x128xf32>
    %c1_94 = arith.constant 1 : index
    %c0_95 = arith.constant 0 : index
    %c0_96 = arith.constant 0 : index
    %103 = vector.load %arg3[%c1_94, %c0_95, %c0_96] : memref<9x8x128xf32, #tpu.memory_space<vmem>>, vector<1x8x128xf32>
    %104 = vector.shape_cast %103 : vector<1x8x128xf32> to vector<8x128xf32>
    %105 = vector.broadcast %102 : vector<1x128xf32> to vector<8x128xf32>
    %106 = arith.mulf %105, %104 : vector<8x128xf32>
    %c1_97 = arith.constant 1 : index
    %c1_98 = arith.constant 1 : index
    %c0_99 = arith.constant 0 : index
    %c0_100 = arith.constant 0 : index
    %107 = vector.load %arg4[%c1_97, %c1_98, %c0_99, %c0_100] : memref<9x8x8x128xf32, #tpu.memory_space<vmem>>, vector<1x1x8x128xf32>
    %108 = vector.shape_cast %107 : vector<1x1x8x128xf32> to vector<8x128xf32>
    %109 = vector.shape_cast %106 : vector<8x128xf32> to vector<1x1x8x128xf32>
    tpu.vector_store %arg4[%c1_97, %c1_98, %c0_99, %c0_100], %109 {strides = array<i32>} : memref<9x8x8x128xf32, #tpu.memory_space<vmem>>, vector<1x1x8x128xf32>,
    %c0_101 = arith.constant 0 : index
    %c2_102 = arith.constant 2 : index
    %c0_103 = arith.constant 0 : index
    %110 = vector.load %arg2[%c0_101, %c2_102, %c0_103] : memref<1x8x128xf32, #tpu.memory_space<vmem>>, vector<1x1x128xf32>
    %111 = vector.shape_cast %110 : vector<1x1x128xf32> to vector<1x128xf32>
    %cst_104 = arith.constant 1.000000e+00 : f32
    %112 = vector.broadcast %cst_104 : f32 to vector<1x128xf32>
    %113 = arith.mulf %112, %111 : vector<1x128xf32>
    %c1_105 = arith.constant 1 : index
    %c0_106 = arith.constant 0 : index
    %c0_107 = arith.constant 0 : index
    %114 = vector.load %arg3[%c1_105, %c0_106, %c0_107] : memref<9x8x128xf32, #tpu.memory_space<vmem>>, vector<1x8x128xf32>
    %115 = vector.shape_cast %114 : vector<1x8x128xf32> to vector<8x128xf32>
    %116 = vector.broadcast %113 : vector<1x128xf32> to vector<8x128xf32>
    %117 = arith.mulf %116, %115 : vector<8x128xf32>
    %c1_108 = arith.constant 1 : index
    %c2_109 = arith.constant 2 : index
    %c0_110 = arith.constant 0 : index
    %c0_111 = arith.constant 0 : index
    %118 = vector.load %arg4[%c1_108, %c2_109, %c0_110, %c0_111] : memref<9x8x8x128xf32, #tpu.memory_space<vmem>>, vector<1x1x8x128xf32>
    %119 = vector.shape_cast %118 : vector<1x1x8x128xf32> to vector<8x128xf32>
    %120 = vector.shape_cast %117 : vector<8x128xf32> to vector<1x1x8x128xf32>
    tpu.vector_store %arg4[%c1_108, %c2_109, %c0_110, %c0_111], %120 {strides = array<i32>} : memref<9x8x8x128xf32, #tpu.memory_space<vmem>>, vector<1x1x8x128xf32>,
    %c0_112 = arith.constant 0 : index
    %c3_113 = arith.constant 3 : index
    %c0_114 = arith.constant 0 : index
    %121 = vector.load %arg2[%c0_112, %c3_113, %c0_114] : memref<1x8x128xf32, #tpu.memory_space<vmem>>, vector<1x1x128xf32>
    %122 = vector.shape_cast %121 : vector<1x1x128xf32> to vector<1x128xf32>
    %cst_115 = arith.constant 1.000000e+00 : f32
    %123 = vector.broadcast %cst_115 : f32 to vector<1x128xf32>
    %124 = arith.mulf %123, %122 : vector<1x128xf32>
    %c1_116 = arith.constant 1 : index
    %c0_117 = arith.constant 0 : index
    %c0_118 = arith.constant 0 : index
    %125 = vector.load %arg3[%c1_116, %c0_117, %c0_118] : memref<9x8x128xf32, #tpu.memory_space<vmem>>, vector<1x8x128xf32>
    %126 = vector.shape_cast %125 : vector<1x8x128xf32> to vector<8x128xf32>
    %127 = vector.broadcast %124 : vector<1x128xf32> to vector<8x128xf32>
    %128 = arith.mulf %127, %126 : vector<8x128xf32>
    %c1_119 = arith.constant 1 : index
    %c3_120 = arith.constant 3 : index
    %c0_121 = arith.constant 0 : index
    %c0_122 = arith.constant 0 : index
    %129 = vector.load %arg4[%c1_119, %c3_120, %c0_121, %c0_122] : memref<9x8x8x128xf32, #tpu.memory_space<vmem>>, vector<1x1x8x128xf32>
    %130 = vector.shape_cast %129 : vector<1x1x8x128xf32> to vector<8x128xf32>
    %131 = vector.shape_cast %128 : vector<8x128xf32> to vector<1x1x8x128xf32>
    tpu.vector_store %arg4[%c1_119, %c3_120, %c0_121, %c0_122], %131 {strides = array<i32>} : memref<9x8x8x128xf32, #tpu.memory_space<vmem>>, vector<1x1x8x128xf32>,
    %c0_123 = arith.constant 0 : index
    %c4_124 = arith.constant 4 : index
    %c0_125 = arith.constant 0 : index
    %132 = vector.load %arg2[%c0_123, %c4_124, %c0_125] : memref<1x8x128xf32, #tpu.memory_space<vmem>>, vector<1x1x128xf32>
    %133 = vector.shape_cast %132 : vector<1x1x128xf32> to vector<1x128xf32>
    %cst_126 = arith.constant 1.000000e+00 : f32
    %134 = vector.broadcast %cst_126 : f32 to vector<1x128xf32>
    %135 = arith.mulf %134, %133 : vector<1x128xf32>
    %c1_127 = arith.constant 1 : index
    %c0_128 = arith.constant 0 : index
    %c0_129 = arith.constant 0 : index
    %136 = vector.load %arg3[%c1_127, %c0_128, %c0_129] : memref<9x8x128xf32, #tpu.memory_space<vmem>>, vector<1x8x128xf32>
    %137 = vector.shape_cast %136 : vector<1x8x128xf32> to vector<8x128xf32>
    %138 = vector.broadcast %135 : vector<1x128xf32> to vector<8x128xf32>
    %139 = arith.mulf %138, %137 : vector<8x128xf32>
    %c1_130 = arith.constant 1 : index
    %c4_131 = arith.constant 4 : index
    %c0_132 = arith.constant 0 : index
    %c0_133 = arith.constant 0 : index
    %140 = vector.load %arg4[%c1_130, %c4_131, %c0_132, %c0_133] : memref<9x8x8x128xf32, #tpu.memory_space<vmem>>, vector<1x1x8x128xf32>
    %141 = vector.shape_cast %140 : vector<1x1x8x128xf32> to vector<8x128xf32>
    %142 = vector.shape_cast %139 : vector<8x128xf32> to vector<1x1x8x128xf32>
    tpu.vector_store %arg4[%c1_130, %c4_131, %c0_132, %c0_133], %142 {strides = array<i32>} : memref<9x8x8x128xf32, #tpu.memory_space<vmem>>, vector<1x1x8x128xf32>,
    %c0_134 = arith.constant 0 : index
    %c5_135 = arith.constant 5 : index
    %c0_136 = arith.constant 0 : index
    %143 = vector.load %arg2[%c0_134, %c5_135, %c0_136] : memref<1x8x128xf32, #tpu.memory_space<vmem>>, vector<1x1x128xf32>
    %144 = vector.shape_cast %143 : vector<1x1x128xf32> to vector<1x128xf32>
    %cst_137 = arith.constant 1.000000e+00 : f32
    %145 = vector.broadcast %cst_137 : f32 to vector<1x128xf32>
    %146 = arith.mulf %145, %144 : vector<1x128xf32>
    %c1_138 = arith.constant 1 : index
    %c0_139 = arith.constant 0 : index
    %c0_140 = arith.constant 0 : index
    %147 = vector.load %arg3[%c1_138, %c0_139, %c0_140] : memref<9x8x128xf32, #tpu.memory_space<vmem>>, vector<1x8x128xf32>
    %148 = vector.shape_cast %147 : vector<1x8x128xf32> to vector<8x128xf32>
    %149 = vector.broadcast %146 : vector<1x128xf32> to vector<8x128xf32>
    %150 = arith.mulf %149, %148 : vector<8x128xf32>
    %c1_141 = arith.constant 1 : index
    %c5_142 = arith.constant 5 : index
    %c0_143 = arith.constant 0 : index
    %c0_144 = arith.constant 0 : index
    %151 = vector.load %arg4[%c1_141, %c5_142, %c0_143, %c0_144] : memref<9x8x8x128xf32, #tpu.memory_space<vmem>>, vector<1x1x8x128xf32>
    %152 = vector.shape_cast %151 : vector<1x1x8x128xf32> to vector<8x128xf32>
    %153 = vector.shape_cast %150 : vector<8x128xf32> to vector<1x1x8x128xf32>
    tpu.vector_store %arg4[%c1_141, %c5_142, %c0_143, %c0_144], %153 {strides = array<i32>} : memref<9x8x8x128xf32, #tpu.memory_space<vmem>>, vector<1x1x8x128xf32>,
    %c0_145 = arith.constant 0 : index
    %c6_146 = arith.constant 6 : index
    %c0_147 = arith.constant 0 : index
    %154 = vector.load %arg2[%c0_145, %c6_146, %c0_147] : memref<1x8x128xf32, #tpu.memory_space<vmem>>, vector<1x1x128xf32>
    %155 = vector.shape_cast %154 : vector<1x1x128xf32> to vector<1x128xf32>
    %cst_148 = arith.constant 1.000000e+00 : f32
    %156 = vector.broadcast %cst_148 : f32 to vector<1x128xf32>
    %157 = arith.mulf %156, %155 : vector<1x128xf32>
    %c1_149 = arith.constant 1 : index
    %c0_150 = arith.constant 0 : index
    %c0_151 = arith.constant 0 : index
    %158 = vector.load %arg3[%c1_149, %c0_150, %c0_151] : memref<9x8x128xf32, #tpu.memory_space<vmem>>, vector<1x8x128xf32>
    %159 = vector.shape_cast %158 : vector<1x8x128xf32> to vector<8x128xf32>
    %160 = vector.broadcast %157 : vector<1x128xf32> to vector<8x128xf32>
    %161 = arith.mulf %160, %159 : vector<8x128xf32>
    %c1_152 = arith.constant 1 : index
    %c6_153 = arith.constant 6 : index
    %c0_154 = arith.constant 0 : index
    %c0_155 = arith.constant 0 : index
    %162 = vector.load %arg4[%c1_152, %c6_153, %c0_154, %c0_155] : memref<9x8x8x128xf32, #tpu.memory_space<vmem>>, vector<1x1x8x128xf32>
    %163 = vector.shape_cast %162 : vector<1x1x8x128xf32> to vector<8x128xf32>
    %164 = vector.shape_cast %161 : vector<8x128xf32> to vector<1x1x8x128xf32>
    tpu.vector_store %arg4[%c1_152, %c6_153, %c0_154, %c0_155], %164 {strides = array<i32>} : memref<9x8x8x128xf32, #tpu.memory_space<vmem>>, vector<1x1x8x128xf32>,
    %c0_156 = arith.constant 0 : index
    %c7_157 = arith.constant 7 : index
    %c0_158 = arith.constant 0 : index
    %165 = vector.load %arg2[%c0_156, %c7_157, %c0_158] : memref<1x8x128xf32, #tpu.memory_space<vmem>>, vector<1x1x128xf32>
    %166 = vector.shape_cast %165 : vector<1x1x128xf32> to vector<1x128xf32>
    %cst_159 = arith.constant 1.000000e+00 : f32
    %167 = vector.broadcast %cst_159 : f32 to vector<1x128xf32>
    %168 = arith.mulf %167, %166 : vector<1x128xf32>
    %c1_160 = arith.constant 1 : index
    %c0_161 = arith.constant 0 : index
    %c0_162 = arith.constant 0 : index
    %169 = vector.load %arg3[%c1_160, %c0_161, %c0_162] : memref<9x8x128xf32, #tpu.memory_space<vmem>>, vector<1x8x128xf32>
    %170 = vector.shape_cast %169 : vector<1x8x128xf32> to vector<8x128xf32>
    %171 = vector.broadcast %168 : vector<1x128xf32> to vector<8x128xf32>
    %172 = arith.mulf %171, %170 : vector<8x128xf32>
    %c1_163 = arith.constant 1 : index
    %c7_164 = arith.constant 7 : index
    %c0_165 = arith.constant 0 : index
    %c0_166 = arith.constant 0 : index
    %173 = vector.load %arg4[%c1_163, %c7_164, %c0_165, %c0_166] : memref<9x8x8x128xf32, #tpu.memory_space<vmem>>, vector<1x1x8x128xf32>
    %174 = vector.shape_cast %173 : vector<1x1x8x128xf32> to vector<8x128xf32>
    %175 = vector.shape_cast %172 : vector<8x128xf32> to vector<1x1x8x128xf32>
    tpu.vector_store %arg4[%c1_163, %c7_164, %c0_165, %c0_166], %175 {strides = array<i32>} : memref<9x8x8x128xf32, #tpu.memory_space<vmem>>, vector<1x1x8x128xf32>,
    %c0_167 = arith.constant 0 : index
    %c0_168 = arith.constant 0 : index
    %c0_169 = arith.constant 0 : index
    %176 = vector.load %arg2[%c0_167, %c0_168, %c0_169] : memref<1x8x128xf32, #tpu.memory_space<vmem>>, vector<1x1x128xf32>
    %177 = vector.shape_cast %176 : vector<1x1x128xf32> to vector<1x128xf32>
    %cst_170 = arith.constant 1.000000e+00 : f32
    %178 = vector.broadcast %cst_170 : f32 to vector<1x128xf32>
    %179 = arith.mulf %178, %177 : vector<1x128xf32>
    %c2_171 = arith.constant 2 : index
    %c0_172 = arith.constant 0 : index
    %c0_173 = arith.constant 0 : index
    %180 = vector.load %arg3[%c2_171, %c0_172, %c0_173] : memref<9x8x128xf32, #tpu.memory_space<vmem>>, vector<1x8x128xf32>
    %181 = vector.shape_cast %180 : vector<1x8x128xf32> to vector<8x128xf32>
    %182 = vector.broadcast %179 : vector<1x128xf32> to vector<8x128xf32>
    %183 = arith.mulf %182, %181 : vector<8x128xf32>
    %c2_174 = arith.constant 2 : index
    %c0_175 = arith.constant 0 : index
    %c0_176 = arith.constant 0 : index
    %c0_177 = arith.constant 0 : index
    %184 = vector.load %arg4[%c2_174, %c0_175, %c0_176, %c0_177] : memref<9x8x8x128xf32, #tpu.memory_space<vmem>>, vector<1x1x8x128xf32>
    %185 = vector.shape_cast %184 : vector<1x1x8x128xf32> to vector<8x128xf32>
    %186 = vector.shape_cast %183 : vector<8x128xf32> to vector<1x1x8x128xf32>
    tpu.vector_store %arg4[%c2_174, %c0_175, %c0_176, %c0_177], %186 {strides = array<i32>} : memref<9x8x8x128xf32, #tpu.memory_space<vmem>>, vector<1x1x8x128xf32>,
    %c0_178 = arith.constant 0 : index
    %c1_179 = arith.constant 1 : index
    %c0_180 = arith.constant 0 : index
    %187 = vector.load %arg2[%c0_178, %c1_179, %c0_180] : memref<1x8x128xf32, #tpu.memory_space<vmem>>, vector<1x1x128xf32>
    %188 = vector.shape_cast %187 : vector<1x1x128xf32> to vector<1x128xf32>
    %cst_181 = arith.constant 1.000000e+00 : f32
    %189 = vector.broadcast %cst_181 : f32 to vector<1x128xf32>
    %190 = arith.mulf %189, %188 : vector<1x128xf32>
    %c2_182 = arith.constant 2 : index
    %c0_183 = arith.constant 0 : index
    %c0_184 = arith.constant 0 : index
    %191 = vector.load %arg3[%c2_182, %c0_183, %c0_184] : memref<9x8x128xf32, #tpu.memory_space<vmem>>, vector<1x8x128xf32>
    %192 = vector.shape_cast %191 : vector<1x8x128xf32> to vector<8x128xf32>
    %193 = vector.broadcast %190 : vector<1x128xf32> to vector<8x128xf32>
    %194 = arith.mulf %193, %192 : vector<8x128xf32>
    %c2_185 = arith.constant 2 : index
    %c1_186 = arith.constant 1 : index
    %c0_187 = arith.constant 0 : index
    %c0_188 = arith.constant 0 : index
    %195 = vector.load %arg4[%c2_185, %c1_186, %c0_187, %c0_188] : memref<9x8x8x128xf32, #tpu.memory_space<vmem>>, vector<1x1x8x128xf32>
    %196 = vector.shape_cast %195 : vector<1x1x8x128xf32> to vector<8x128xf32>
    %197 = vector.shape_cast %194 : vector<8x128xf32> to vector<1x1x8x128xf32>
    tpu.vector_store %arg4[%c2_185, %c1_186, %c0_187, %c0_188], %197 {strides = array<i32>} : memref<9x8x8x128xf32, #tpu.memory_space<vmem>>, vector<1x1x8x128xf32>,
    %c0_189 = arith.constant 0 : index
    %c2_190 = arith.constant 2 : index
    %c0_191 = arith.constant 0 : index
    %198 = vector.load %arg2[%c0_189, %c2_190, %c0_191] : memref<1x8x128xf32, #tpu.memory_space<vmem>>, vector<1x1x128xf32>
    %199 = vector.shape_cast %198 : vector<1x1x128xf32> to vector<1x128xf32>
    %cst_192 = arith.constant 1.000000e+00 : f32
    %200 = vector.broadcast %cst_192 : f32 to vector<1x128xf32>
    %201 = arith.mulf %200, %199 : vector<1x128xf32>
    %c2_193 = arith.constant 2 : index
    %c0_194 = arith.constant 0 : index
    %c0_195 = arith.constant 0 : index
    %202 = vector.load %arg3[%c2_193, %c0_194, %c0_195] : memref<9x8x128xf32, #tpu.memory_space<vmem>>, vector<1x8x128xf32>
    %203 = vector.shape_cast %202 : vector<1x8x128xf32> to vector<8x128xf32>
    %204 = vector.broadcast %201 : vector<1x128xf32> to vector<8x128xf32>
    %205 = arith.mulf %204, %203 : vector<8x128xf32>
    %c2_196 = arith.constant 2 : index
    %c2_197 = arith.constant 2 : index
    %c0_198 = arith.constant 0 : index
    %c0_199 = arith.constant 0 : index
    %206 = vector.load %arg4[%c2_196, %c2_197, %c0_198, %c0_199] : memref<9x8x8x128xf32, #tpu.memory_space<vmem>>, vector<1x1x8x128xf32>
    %207 = vector.shape_cast %206 : vector<1x1x8x128xf32> to vector<8x128xf32>
    %208 = vector.shape_cast %205 : vector<8x128xf32> to vector<1x1x8x128xf32>
    tpu.vector_store %arg4[%c2_196, %c2_197, %c0_198, %c0_199], %208 {strides = array<i32>} : memref<9x8x8x128xf32, #tpu.memory_space<vmem>>, vector<1x1x8x128xf32>,
    %c0_200 = arith.constant 0 : index
    %c3_201 = arith.constant 3 : index
    %c0_202 = arith.constant 0 : index
    %209 = vector.load %arg2[%c0_200, %c3_201, %c0_202] : memref<1x8x128xf32, #tpu.memory_space<vmem>>, vector<1x1x128xf32>
    %210 = vector.shape_cast %209 : vector<1x1x128xf32> to vector<1x128xf32>
    %cst_203 = arith.constant 1.000000e+00 : f32
    %211 = vector.broadcast %cst_203 : f32 to vector<1x128xf32>
    %212 = arith.mulf %211, %210 : vector<1x128xf32>
    %c2_204 = arith.constant 2 : index
    %c0_205 = arith.constant 0 : index
    %c0_206 = arith.constant 0 : index
    %213 = vector.load %arg3[%c2_204, %c0_205, %c0_206] : memref<9x8x128xf32, #tpu.memory_space<vmem>>, vector<1x8x128xf32>
    %214 = vector.shape_cast %213 : vector<1x8x128xf32> to vector<8x128xf32>
    %215 = vector.broadcast %212 : vector<1x128xf32> to vector<8x128xf32>
    %216 = arith.mulf %215, %214 : vector<8x128xf32>
    %c2_207 = arith.constant 2 : index
    %c3_208 = arith.constant 3 : index
    %c0_209 = arith.constant 0 : index
    %c0_210 = arith.constant 0 : index
    %217 = vector.load %arg4[%c2_207, %c3_208, %c0_209, %c0_210] : memref<9x8x8x128xf32, #tpu.memory_space<vmem>>, vector<1x1x8x128xf32>
    %218 = vector.shape_cast %217 : vector<1x1x8x128xf32> to vector<8x128xf32>
    %219 = vector.shape_cast %216 : vector<8x128xf32> to vector<1x1x8x128xf32>
    tpu.vector_store %arg4[%c2_207, %c3_208, %c0_209, %c0_210], %219 {strides = array<i32>} : memref<9x8x8x128xf32, #tpu.memory_space<vmem>>, vector<1x1x8x128xf32>,
    %c0_211 = arith.constant 0 : index
    %c4_212 = arith.constant 4 : index
    %c0_213 = arith.constant 0 : index
    %220 = vector.load %arg2[%c0_211, %c4_212, %c0_213] : memref<1x8x128xf32, #tpu.memory_space<vmem>>, vector<1x1x128xf32>
    %221 = vector.shape_cast %220 : vector<1x1x128xf32> to vector<1x128xf32>
    %cst_214 = arith.constant 1.000000e+00 : f32
    %222 = vector.broadcast %cst_214 : f32 to vector<1x128xf32>
    %223 = arith.mulf %222, %221 : vector<1x128xf32>
    %c2_215 = arith.constant 2 : index
    %c0_216 = arith.constant 0 : index
    %c0_217 = arith.constant 0 : index
    %224 = vector.load %arg3[%c2_215, %c0_216, %c0_217] : memref<9x8x128xf32, #tpu.memory_space<vmem>>, vector<1x8x128xf32>
    %225 = vector.shape_cast %224 : vector<1x8x128xf32> to vector<8x128xf32>
    %226 = vector.broadcast %223 : vector<1x128xf32> to vector<8x128xf32>
    %227 = arith.mulf %226, %225 : vector<8x128xf32>
    %c2_218 = arith.constant 2 : index
    %c4_219 = arith.constant 4 : index
    %c0_220 = arith.constant 0 : index
    %c0_221 = arith.constant 0 : index
    %228 = vector.load %arg4[%c2_218, %c4_219, %c0_220, %c0_221] : memref<9x8x8x128xf32, #tpu.memory_space<vmem>>, vector<1x1x8x128xf32>
    %229 = vector.shape_cast %228 : vector<1x1x8x128xf32> to vector<8x128xf32>
    %230 = vector.shape_cast %227 : vector<8x128xf32> to vector<1x1x8x128xf32>
    tpu.vector_store %arg4[%c2_218, %c4_219, %c0_220, %c0_221], %230 {strides = array<i32>} : memref<9x8x8x128xf32, #tpu.memory_space<vmem>>, vector<1x1x8x128xf32>,
    %c0_222 = arith.constant 0 : index
    %c5_223 = arith.constant 5 : index
    %c0_224 = arith.constant 0 : index
    %231 = vector.load %arg2[%c0_222, %c5_223, %c0_224] : memref<1x8x128xf32, #tpu.memory_space<vmem>>, vector<1x1x128xf32>
    %232 = vector.shape_cast %231 : vector<1x1x128xf32> to vector<1x128xf32>
    %cst_225 = arith.constant 1.000000e+00 : f32
    %233 = vector.broadcast %cst_225 : f32 to vector<1x128xf32>
    %234 = arith.mulf %233, %232 : vector<1x128xf32>
    %c2_226 = arith.constant 2 : index
    %c0_227 = arith.constant 0 : index
    %c0_228 = arith.constant 0 : index
    %235 = vector.load %arg3[%c2_226, %c0_227, %c0_228] : memref<9x8x128xf32, #tpu.memory_space<vmem>>, vector<1x8x128xf32>
    %236 = vector.shape_cast %235 : vector<1x8x128xf32> to vector<8x128xf32>
    %237 = vector.broadcast %234 : vector<1x128xf32> to vector<8x128xf32>
    %238 = arith.mulf %237, %236 : vector<8x128xf32>
    %c2_229 = arith.constant 2 : index
    %c5_230 = arith.constant 5 : index
    %c0_231 = arith.constant 0 : index
    %c0_232 = arith.constant 0 : index
    %239 = vector.load %arg4[%c2_229, %c5_230, %c0_231, %c0_232] : memref<9x8x8x128xf32, #tpu.memory_space<vmem>>, vector<1x1x8x128xf32>
    %240 = vector.shape_cast %239 : vector<1x1x8x128xf32> to vector<8x128xf32>
    %241 = vector.shape_cast %238 : vector<8x128xf32> to vector<1x1x8x128xf32>
    tpu.vector_store %arg4[%c2_229, %c5_230, %c0_231, %c0_232], %241 {strides = array<i32>} : memref<9x8x8x128xf32, #tpu.memory_space<vmem>>, vector<1x1x8x128xf32>,
    %c0_233 = arith.constant 0 : index
    %c6_234 = arith.constant 6 : index
    %c0_235 = arith.constant 0 : index
    %242 = vector.load %arg2[%c0_233, %c6_234, %c0_235] : memref<1x8x128xf32, #tpu.memory_space<vmem>>, vector<1x1x128xf32>
    %243 = vector.shape_cast %242 : vector<1x1x128xf32> to vector<1x128xf32>
    %cst_236 = arith.constant 1.000000e+00 : f32
    %244 = vector.broadcast %cst_236 : f32 to vector<1x128xf32>
    %245 = arith.mulf %244, %243 : vector<1x128xf32>
    %c2_237 = arith.constant 2 : index
    %c0_238 = arith.constant 0 : index
    %c0_239 = arith.constant 0 : index
    %246 = vector.load %arg3[%c2_237, %c0_238, %c0_239] : memref<9x8x128xf32, #tpu.memory_space<vmem>>, vector<1x8x128xf32>
    %247 = vector.shape_cast %246 : vector<1x8x128xf32> to vector<8x128xf32>
    %248 = vector.broadcast %245 : vector<1x128xf32> to vector<8x128xf32>
    %249 = arith.mulf %248, %247 : vector<8x128xf32>
    %c2_240 = arith.constant 2 : index
    %c6_241 = arith.constant 6 : index
    %c0_242 = arith.constant 0 : index
    %c0_243 = arith.constant 0 : index
    %250 = vector.load %arg4[%c2_240, %c6_241, %c0_242, %c0_243] : memref<9x8x8x128xf32, #tpu.memory_space<vmem>>, vector<1x1x8x128xf32>
    %251 = vector.shape_cast %250 : vector<1x1x8x128xf32> to vector<8x128xf32>
    %252 = vector.shape_cast %249 : vector<8x128xf32> to vector<1x1x8x128xf32>
    tpu.vector_store %arg4[%c2_240, %c6_241, %c0_242, %c0_243], %252 {strides = array<i32>} : memref<9x8x8x128xf32, #tpu.memory_space<vmem>>, vector<1x1x8x128xf32>,
    %c0_244 = arith.constant 0 : index
    %c7_245 = arith.constant 7 : index
    %c0_246 = arith.constant 0 : index
    %253 = vector.load %arg2[%c0_244, %c7_245, %c0_246] : memref<1x8x128xf32, #tpu.memory_space<vmem>>, vector<1x1x128xf32>
    %254 = vector.shape_cast %253 : vector<1x1x128xf32> to vector<1x128xf32>
    %cst_247 = arith.constant 1.000000e+00 : f32
    %255 = vector.broadcast %cst_247 : f32 to vector<1x128xf32>
    %256 = arith.mulf %255, %254 : vector<1x128xf32>
    %c2_248 = arith.constant 2 : index
    %c0_249 = arith.constant 0 : index
    %c0_250 = arith.constant 0 : index
    %257 = vector.load %arg3[%c2_248, %c0_249, %c0_250] : memref<9x8x128xf32, #tpu.memory_space<vmem>>, vector<1x8x128xf32>
    %258 = vector.shape_cast %257 : vector<1x8x128xf32> to vector<8x128xf32>
    %259 = vector.broadcast %256 : vector<1x128xf32> to vector<8x128xf32>
    %260 = arith.mulf %259, %258 : vector<8x128xf32>
    %c2_251 = arith.constant 2 : index
    %c7_252 = arith.constant 7 : index
    %c0_253 = arith.constant 0 : index
    %c0_254 = arith.constant 0 : index
    %261 = vector.load %arg4[%c2_251, %c7_252, %c0_253, %c0_254] : memref<9x8x8x128xf32, #tpu.memory_space<vmem>>, vector<1x1x8x128xf32>
    %262 = vector.shape_cast %261 : vector<1x1x8x128xf32> to vector<8x128xf32>
    %263 = vector.shape_cast %260 : vector<8x128xf32> to vector<1x1x8x128xf32>
    tpu.vector_store %arg4[%c2_251, %c7_252, %c0_253, %c0_254], %263 {strides = array<i32>} : memref<9x8x8x128xf32, #tpu.memory_space<vmem>>, vector<1x1x8x128xf32>,
    %c0_255 = arith.constant 0 : index
    %c0_256 = arith.constant 0 : index
    %c0_257 = arith.constant 0 : index
    %264 = vector.load %arg2[%c0_255, %c0_256, %c0_257] : memref<1x8x128xf32, #tpu.memory_space<vmem>>, vector<1x1x128xf32>
    %265 = vector.shape_cast %264 : vector<1x1x128xf32> to vector<1x128xf32>
    %cst_258 = arith.constant 1.000000e+00 : f32
    %266 = vector.broadcast %cst_258 : f32 to vector<1x128xf32>
    %267 = arith.mulf %266, %265 : vector<1x128xf32>
    %c3_259 = arith.constant 3 : index
    %c0_260 = arith.constant 0 : index
    %c0_261 = arith.constant 0 : index
    %268 = vector.load %arg3[%c3_259, %c0_260, %c0_261] : memref<9x8x128xf32, #tpu.memory_space<vmem>>, vector<1x8x128xf32>
    %269 = vector.shape_cast %268 : vector<1x8x128xf32> to vector<8x128xf32>
    %270 = vector.broadcast %267 : vector<1x128xf32> to vector<8x128xf32>
    %271 = arith.mulf %270, %269 : vector<8x128xf32>
    %c3_262 = arith.constant 3 : index
    %c0_263 = arith.constant 0 : index
    %c0_264 = arith.constant 0 : index
    %c0_265 = arith.constant 0 : index
    %272 = vector.load %arg4[%c3_262, %c0_263, %c0_264, %c0_265] : memref<9x8x8x128xf32, #tpu.memory_space<vmem>>, vector<1x1x8x128xf32>
    %273 = vector.shape_cast %272 : vector<1x1x8x128xf32> to vector<8x128xf32>
    %274 = vector.shape_cast %271 : vector<8x128xf32> to vector<1x1x8x128xf32>
    tpu.vector_store %arg4[%c3_262, %c0_263, %c0_264, %c0_265], %274 {strides = array<i32>} : memref<9x8x8x128xf32, #tpu.memory_space<vmem>>, vector<1x1x8x128xf32>,
    %c0_266 = arith.constant 0 : index
    %c1_267 = arith.constant 1 : index
    %c0_268 = arith.constant 0 : index
    %275 = vector.load %arg2[%c0_266, %c1_267, %c0_268] : memref<1x8x128xf32, #tpu.memory_space<vmem>>, vector<1x1x128xf32>
    %276 = vector.shape_cast %275 : vector<1x1x128xf32> to vector<1x128xf32>
    %cst_269 = arith.constant 1.000000e+00 : f32
    %277 = vector.broadcast %cst_269 : f32 to vector<1x128xf32>
    %278 = arith.mulf %277, %276 : vector<1x128xf32>
    %c3_270 = arith.constant 3 : index
    %c0_271 = arith.constant 0 : index
    %c0_272 = arith.constant 0 : index
    %279 = vector.load %arg3[%c3_270, %c0_271, %c0_272] : memref<9x8x128xf32, #tpu.memory_space<vmem>>, vector<1x8x128xf32>
    %280 = vector.shape_cast %279 : vector<1x8x128xf32> to vector<8x128xf32>
    %281 = vector.broadcast %278 : vector<1x128xf32> to vector<8x128xf32>
    %282 = arith.mulf %281, %280 : vector<8x128xf32>
    %c3_273 = arith.constant 3 : index
    %c1_274 = arith.constant 1 : index
    %c0_275 = arith.constant 0 : index
    %c0_276 = arith.constant 0 : index
    %283 = vector.load %arg4[%c3_273, %c1_274, %c0_275, %c0_276] : memref<9x8x8x128xf32, #tpu.memory_space<vmem>>, vector<1x1x8x128xf32>
    %284 = vector.shape_cast %283 : vector<1x1x8x128xf32> to vector<8x128xf32>
    %285 = vector.shape_cast %282 : vector<8x128xf32> to vector<1x1x8x128xf32>
    tpu.vector_store %arg4[%c3_273, %c1_274, %c0_275, %c0_276], %285 {strides = array<i32>} : memref<9x8x8x128xf32, #tpu.memory_space<vmem>>, vector<1x1x8x128xf32>,
    %c0_277 = arith.constant 0 : index
    %c2_278 = arith.constant 2 : index
    %c0_279 = arith.constant 0 : index
    %286 = vector.load %arg2[%c0_277, %c2_278, %c0_279] : memref<1x8x128xf32, #tpu.memory_space<vmem>>, vector<1x1x128xf32>
    %287 = vector.shape_cast %286 : vector<1x1x128xf32> to vector<1x128xf32>
    %cst_280 = arith.constant 1.000000e+00 : f32
    %288 = vector.broadcast %cst_280 : f32 to vector<1x128xf32>
    %289 = arith.mulf %288, %287 : vector<1x128xf32>
    %c3_281 = arith.constant 3 : index
    %c0_282 = arith.constant 0 : index
    %c0_283 = arith.constant 0 : index
    %290 = vector.load %arg3[%c3_281, %c0_282, %c0_283] : memref<9x8x128xf32, #tpu.memory_space<vmem>>, vector<1x8x128xf32>
    %291 = vector.shape_cast %290 : vector<1x8x128xf32> to vector<8x128xf32>
    %292 = vector.broadcast %289 : vector<1x128xf32> to vector<8x128xf32>
    %293 = arith.mulf %292, %291 : vector<8x128xf32>
    %c3_284 = arith.constant 3 : index
    %c2_285 = arith.constant 2 : index
    %c0_286 = arith.constant 0 : index
    %c0_287 = arith.constant 0 : index
    %294 = vector.load %arg4[%c3_284, %c2_285, %c0_286, %c0_287] : memref<9x8x8x128xf32, #tpu.memory_space<vmem>>, vector<1x1x8x128xf32>
    %295 = vector.shape_cast %294 : vector<1x1x8x128xf32> to vector<8x128xf32>
    %296 = vector.shape_cast %293 : vector<8x128xf32> to vector<1x1x8x128xf32>
    tpu.vector_store %arg4[%c3_284, %c2_285, %c0_286, %c0_287], %296 {strides = array<i32>} : memref<9x8x8x128xf32, #tpu.memory_space<vmem>>, vector<1x1x8x128xf32>,
    %c0_288 = arith.constant 0 : index
    %c3_289 = arith.constant 3 : index
    %c0_290 = arith.constant 0 : index
    %297 = vector.load %arg2[%c0_288, %c3_289, %c0_290] : memref<1x8x128xf32, #tpu.memory_space<vmem>>, vector<1x1x128xf32>
    %298 = vector.shape_cast %297 : vector<1x1x128xf32> to vector<1x128xf32>
    %cst_291 = arith.constant 1.000000e+00 : f32
    %299 = vector.broadcast %cst_291 : f32 to vector<1x128xf32>
    %300 = arith.mulf %299, %298 : vector<1x128xf32>
    %c3_292 = arith.constant 3 : index
    %c0_293 = arith.constant 0 : index
    %c0_294 = arith.constant 0 : index
    %301 = vector.load %arg3[%c3_292, %c0_293, %c0_294] : memref<9x8x128xf32, #tpu.memory_space<vmem>>, vector<1x8x128xf32>
    %302 = vector.shape_cast %301 : vector<1x8x128xf32> to vector<8x128xf32>
    %303 = vector.broadcast %300 : vector<1x128xf32> to vector<8x128xf32>
    %304 = arith.mulf %303, %302 : vector<8x128xf32>
    %c3_295 = arith.constant 3 : index
    %c3_296 = arith.constant 3 : index
    %c0_297 = arith.constant 0 : index
    %c0_298 = arith.constant 0 : index
    %305 = vector.load %arg4[%c3_295, %c3_296, %c0_297, %c0_298] : memref<9x8x8x128xf32, #tpu.memory_space<vmem>>, vector<1x1x8x128xf32>
    %306 = vector.shape_cast %305 : vector<1x1x8x128xf32> to vector<8x128xf32>
    %307 = vector.shape_cast %304 : vector<8x128xf32> to vector<1x1x8x128xf32>
    tpu.vector_store %arg4[%c3_295, %c3_296, %c0_297, %c0_298], %307 {strides = array<i32>} : memref<9x8x8x128xf32, #tpu.memory_space<vmem>>, vector<1x1x8x128xf32>,
    %c0_299 = arith.constant 0 : index
    %c4_300 = arith.constant 4 : index
    %c0_301 = arith.constant 0 : index
    %308 = vector.load %arg2[%c0_299, %c4_300, %c0_301] : memref<1x8x128xf32, #tpu.memory_space<vmem>>, vector<1x1x128xf32>
    %309 = vector.shape_cast %308 : vector<1x1x128xf32> to vector<1x128xf32>
    %cst_302 = arith.constant 1.000000e+00 : f32
    %310 = vector.broadcast %cst_302 : f32 to vector<1x128xf32>
    %311 = arith.mulf %310, %309 : vector<1x128xf32>
    %c3_303 = arith.constant 3 : index
    %c0_304 = arith.constant 0 : index
    %c0_305 = arith.constant 0 : index
    %312 = vector.load %arg3[%c3_303, %c0_304, %c0_305] : memref<9x8x128xf32, #tpu.memory_space<vmem>>, vector<1x8x128xf32>
    %313 = vector.shape_cast %312 : vector<1x8x128xf32> to vector<8x128xf32>
    %314 = vector.broadcast %311 : vector<1x128xf32> to vector<8x128xf32>
    %315 = arith.mulf %314, %313 : vector<8x128xf32>
    %c3_306 = arith.constant 3 : index
    %c4_307 = arith.constant 4 : index
    %c0_308 = arith.constant 0 : index
    %c0_309 = arith.constant 0 : index
    %316 = vector.load %arg4[%c3_306, %c4_307, %c0_308, %c0_309] : memref<9x8x8x128xf32, #tpu.memory_space<vmem>>, vector<1x1x8x128xf32>
    %317 = vector.shape_cast %316 : vector<1x1x8x128xf32> to vector<8x128xf32>
    %318 = vector.shape_cast %315 : vector<8x128xf32> to vector<1x1x8x128xf32>
    tpu.vector_store %arg4[%c3_306, %c4_307, %c0_308, %c0_309], %318 {strides = array<i32>} : memref<9x8x8x128xf32, #tpu.memory_space<vmem>>, vector<1x1x8x128xf32>,
    %c0_310 = arith.constant 0 : index
    %c5_311 = arith.constant 5 : index
    %c0_312 = arith.constant 0 : index
    %319 = vector.load %arg2[%c0_310, %c5_311, %c0_312] : memref<1x8x128xf32, #tpu.memory_space<vmem>>, vector<1x1x128xf32>
    %320 = vector.shape_cast %319 : vector<1x1x128xf32> to vector<1x128xf32>
    %cst_313 = arith.constant 1.000000e+00 : f32
    %321 = vector.broadcast %cst_313 : f32 to vector<1x128xf32>
    %322 = arith.mulf %321, %320 : vector<1x128xf32>
    %c3_314 = arith.constant 3 : index
    %c0_315 = arith.constant 0 : index
    %c0_316 = arith.constant 0 : index
    %323 = vector.load %arg3[%c3_314, %c0_315, %c0_316] : memref<9x8x128xf32, #tpu.memory_space<vmem>>, vector<1x8x128xf32>
    %324 = vector.shape_cast %323 : vector<1x8x128xf32> to vector<8x128xf32>
    %325 = vector.broadcast %322 : vector<1x128xf32> to vector<8x128xf32>
    %326 = arith.mulf %325, %324 : vector<8x128xf32>
    %c3_317 = arith.constant 3 : index
    %c5_318 = arith.constant 5 : index
    %c0_319 = arith.constant 0 : index
    %c0_320 = arith.constant 0 : index
    %327 = vector.load %arg4[%c3_317, %c5_318, %c0_319, %c0_320] : memref<9x8x8x128xf32, #tpu.memory_space<vmem>>, vector<1x1x8x128xf32>
    %328 = vector.shape_cast %327 : vector<1x1x8x128xf32> to vector<8x128xf32>
    %329 = vector.shape_cast %326 : vector<8x128xf32> to vector<1x1x8x128xf32>
    tpu.vector_store %arg4[%c3_317, %c5_318, %c0_319, %c0_320], %329 {strides = array<i32>} : memref<9x8x8x128xf32, #tpu.memory_space<vmem>>, vector<1x1x8x128xf32>,
    %c0_321 = arith.constant 0 : index
    %c6_322 = arith.constant 6 : index
    %c0_323 = arith.constant 0 : index
    %330 = vector.load %arg2[%c0_321, %c6_322, %c0_323] : memref<1x8x128xf32, #tpu.memory_space<vmem>>, vector<1x1x128xf32>
    %331 = vector.shape_cast %330 : vector<1x1x128xf32> to vector<1x128xf32>
    %cst_324 = arith.constant 1.000000e+00 : f32
    %332 = vector.broadcast %cst_324 : f32 to vector<1x128xf32>
    %333 = arith.mulf %332, %331 : vector<1x128xf32>
    %c3_325 = arith.constant 3 : index
    %c0_326 = arith.constant 0 : index
    %c0_327 = arith.constant 0 : index
    %334 = vector.load %arg3[%c3_325, %c0_326, %c0_327] : memref<9x8x128xf32, #tpu.memory_space<vmem>>, vector<1x8x128xf32>
    %335 = vector.shape_cast %334 : vector<1x8x128xf32> to vector<8x128xf32>
    %336 = vector.broadcast %333 : vector<1x128xf32> to vector<8x128xf32>
    %337 = arith.mulf %336, %335 : vector<8x128xf32>
    %c3_328 = arith.constant 3 : index
    %c6_329 = arith.constant 6 : index
    %c0_330 = arith.constant 0 : index
    %c0_331 = arith.constant 0 : index
    %338 = vector.load %arg4[%c3_328, %c6_329, %c0_330, %c0_331] : memref<9x8x8x128xf32, #tpu.memory_space<vmem>>, vector<1x1x8x128xf32>
    %339 = vector.shape_cast %338 : vector<1x1x8x128xf32> to vector<8x128xf32>
    %340 = vector.shape_cast %337 : vector<8x128xf32> to vector<1x1x8x128xf32>
    tpu.vector_store %arg4[%c3_328, %c6_329, %c0_330, %c0_331], %340 {strides = array<i32>} : memref<9x8x8x128xf32, #tpu.memory_space<vmem>>, vector<1x1x8x128xf32>,
    %c0_332 = arith.constant 0 : index
    %c7_333 = arith.constant 7 : index
    %c0_334 = arith.constant 0 : index
    %341 = vector.load %arg2[%c0_332, %c7_333, %c0_334] : memref<1x8x128xf32, #tpu.memory_space<vmem>>, vector<1x1x128xf32>
    %342 = vector.shape_cast %341 : vector<1x1x128xf32> to vector<1x128xf32>
    %cst_335 = arith.constant 1.000000e+00 : f32
    %343 = vector.broadcast %cst_335 : f32 to vector<1x128xf32>
    %344 = arith.mulf %343, %342 : vector<1x128xf32>
    %c3_336 = arith.constant 3 : index
    %c0_337 = arith.constant 0 : index
    %c0_338 = arith.constant 0 : index
    %345 = vector.load %arg3[%c3_336, %c0_337, %c0_338] : memref<9x8x128xf32, #tpu.memory_space<vmem>>, vector<1x8x128xf32>
    %346 = vector.shape_cast %345 : vector<1x8x128xf32> to vector<8x128xf32>
    %347 = vector.broadcast %344 : vector<1x128xf32> to vector<8x128xf32>
    %348 = arith.mulf %347, %346 : vector<8x128xf32>
    %c3_339 = arith.constant 3 : index
    %c7_340 = arith.constant 7 : index
    %c0_341 = arith.constant 0 : index
    %c0_342 = arith.constant 0 : index
    %349 = vector.load %arg4[%c3_339, %c7_340, %c0_341, %c0_342] : memref<9x8x8x128xf32, #tpu.memory_space<vmem>>, vector<1x1x8x128xf32>
    %350 = vector.shape_cast %349 : vector<1x1x8x128xf32> to vector<8x128xf32>
    %351 = vector.shape_cast %348 : vector<8x128xf32> to vector<1x1x8x128xf32>
    tpu.vector_store %arg4[%c3_339, %c7_340, %c0_341, %c0_342], %351 {strides = array<i32>} : memref<9x8x8x128xf32, #tpu.memory_space<vmem>>, vector<1x1x8x128xf32>,
    %c0_343 = arith.constant 0 : index
    %c0_344 = arith.constant 0 : index
    %c0_345 = arith.constant 0 : index
    %352 = vector.load %arg2[%c0_343, %c0_344, %c0_345] : memref<1x8x128xf32, #tpu.memory_space<vmem>>, vector<1x1x128xf32>
    %353 = vector.shape_cast %352 : vector<1x1x128xf32> to vector<1x128xf32>
    %cst_346 = arith.constant 1.000000e+00 : f32
    %354 = vector.broadcast %cst_346 : f32 to vector<1x128xf32>
    %355 = arith.mulf %354, %353 : vector<1x128xf32>
    %c4_347 = arith.constant 4 : index
    %c0_348 = arith.constant 0 : index
    %c0_349 = arith.constant 0 : index
    %356 = vector.load %arg3[%c4_347, %c0_348, %c0_349] : memref<9x8x128xf32, #tpu.memory_space<vmem>>, vector<1x8x128xf32>
    %357 = vector.shape_cast %356 : vector<1x8x128xf32> to vector<8x128xf32>
    %358 = vector.broadcast %355 : vector<1x128xf32> to vector<8x128xf32>
    %359 = arith.mulf %358, %357 : vector<8x128xf32>
    %c4_350 = arith.constant 4 : index
    %c0_351 = arith.constant 0 : index
    %c0_352 = arith.constant 0 : index
    %c0_353 = arith.constant 0 : index
    %360 = vector.load %arg4[%c4_350, %c0_351, %c0_352, %c0_353] : memref<9x8x8x128xf32, #tpu.memory_space<vmem>>, vector<1x1x8x128xf32>
    %361 = vector.shape_cast %360 : vector<1x1x8x128xf32> to vector<8x128xf32>
    %362 = vector.shape_cast %359 : vector<8x128xf32> to vector<1x1x8x128xf32>
    tpu.vector_store %arg4[%c4_350, %c0_351, %c0_352, %c0_353], %362 {strides = array<i32>} : memref<9x8x8x128xf32, #tpu.memory_space<vmem>>, vector<1x1x8x128xf32>,
    %c0_354 = arith.constant 0 : index
    %c1_355 = arith.constant 1 : index
    %c0_356 = arith.constant 0 : index
    %363 = vector.load %arg2[%c0_354, %c1_355, %c0_356] : memref<1x8x128xf32, #tpu.memory_space<vmem>>, vector<1x1x128xf32>
    %364 = vector.shape_cast %363 : vector<1x1x128xf32> to vector<1x128xf32>
    %cst_357 = arith.constant 1.000000e+00 : f32
    %365 = vector.broadcast %cst_357 : f32 to vector<1x128xf32>
    %366 = arith.mulf %365, %364 : vector<1x128xf32>
    %c4_358 = arith.constant 4 : index
    %c0_359 = arith.constant 0 : index
    %c0_360 = arith.constant 0 : index
    %367 = vector.load %arg3[%c4_358, %c0_359, %c0_360] : memref<9x8x128xf32, #tpu.memory_space<vmem>>, vector<1x8x128xf32>
    %368 = vector.shape_cast %367 : vector<1x8x128xf32> to vector<8x128xf32>
    %369 = vector.broadcast %366 : vector<1x128xf32> to vector<8x128xf32>
    %370 = arith.mulf %369, %368 : vector<8x128xf32>
    %c4_361 = arith.constant 4 : index
    %c1_362 = arith.constant 1 : index
    %c0_363 = arith.constant 0 : index
    %c0_364 = arith.constant 0 : index
    %371 = vector.load %arg4[%c4_361, %c1_362, %c0_363, %c0_364] : memref<9x8x8x128xf32, #tpu.memory_space<vmem>>, vector<1x1x8x128xf32>
    %372 = vector.shape_cast %371 : vector<1x1x8x128xf32> to vector<8x128xf32>
    %373 = vector.shape_cast %370 : vector<8x128xf32> to vector<1x1x8x128xf32>
    tpu.vector_store %arg4[%c4_361, %c1_362, %c0_363, %c0_364], %373 {strides = array<i32>} : memref<9x8x8x128xf32, #tpu.memory_space<vmem>>, vector<1x1x8x128xf32>,
    %c0_365 = arith.constant 0 : index
    %c2_366 = arith.constant 2 : index
    %c0_367 = arith.constant 0 : index
    %374 = vector.load %arg2[%c0_365, %c2_366, %c0_367] : memref<1x8x128xf32, #tpu.memory_space<vmem>>, vector<1x1x128xf32>
    %375 = vector.shape_cast %374 : vector<1x1x128xf32> to vector<1x128xf32>
    %cst_368 = arith.constant 1.000000e+00 : f32
    %376 = vector.broadcast %cst_368 : f32 to vector<1x128xf32>
    %377 = arith.mulf %376, %375 : vector<1x128xf32>
    %c4_369 = arith.constant 4 : index
    %c0_370 = arith.constant 0 : index
    %c0_371 = arith.constant 0 : index
    %378 = vector.load %arg3[%c4_369, %c0_370, %c0_371] : memref<9x8x128xf32, #tpu.memory_space<vmem>>, vector<1x8x128xf32>
    %379 = vector.shape_cast %378 : vector<1x8x128xf32> to vector<8x128xf32>
    %380 = vector.broadcast %377 : vector<1x128xf32> to vector<8x128xf32>
    %381 = arith.mulf %380, %379 : vector<8x128xf32>
    %c4_372 = arith.constant 4 : index
    %c2_373 = arith.constant 2 : index
    %c0_374 = arith.constant 0 : index
    %c0_375 = arith.constant 0 : index
    %382 = vector.load %arg4[%c4_372, %c2_373, %c0_374, %c0_375] : memref<9x8x8x128xf32, #tpu.memory_space<vmem>>, vector<1x1x8x128xf32>
    %383 = vector.shape_cast %382 : vector<1x1x8x128xf32> to vector<8x128xf32>
    %384 = vector.shape_cast %381 : vector<8x128xf32> to vector<1x1x8x128xf32>
    tpu.vector_store %arg4[%c4_372, %c2_373, %c0_374, %c0_375], %384 {strides = array<i32>} : memref<9x8x8x128xf32, #tpu.memory_space<vmem>>, vector<1x1x8x128xf32>,
    %c0_376 = arith.constant 0 : index
    %c3_377 = arith.constant 3 : index
    %c0_378 = arith.constant 0 : index
    %385 = vector.load %arg2[%c0_376, %c3_377, %c0_378] : memref<1x8x128xf32, #tpu.memory_space<vmem>>, vector<1x1x128xf32>
    %386 = vector.shape_cast %385 : vector<1x1x128xf32> to vector<1x128xf32>
    %cst_379 = arith.constant 1.000000e+00 : f32
    %387 = vector.broadcast %cst_379 : f32 to vector<1x128xf32>
    %388 = arith.mulf %387, %386 : vector<1x128xf32>
    %c4_380 = arith.constant 4 : index
    %c0_381 = arith.constant 0 : index
    %c0_382 = arith.constant 0 : index
    %389 = vector.load %arg3[%c4_380, %c0_381, %c0_382] : memref<9x8x128xf32, #tpu.memory_space<vmem>>, vector<1x8x128xf32>
    %390 = vector.shape_cast %389 : vector<1x8x128xf32> to vector<8x128xf32>
    %391 = vector.broadcast %388 : vector<1x128xf32> to vector<8x128xf32>
    %392 = arith.mulf %391, %390 : vector<8x128xf32>
    %c4_383 = arith.constant 4 : index
    %c3_384 = arith.constant 3 : index
    %c0_385 = arith.constant 0 : index
    %c0_386 = arith.constant 0 : index
    %393 = vector.load %arg4[%c4_383, %c3_384, %c0_385, %c0_386] : memref<9x8x8x128xf32, #tpu.memory_space<vmem>>, vector<1x1x8x128xf32>
    %394 = vector.shape_cast %393 : vector<1x1x8x128xf32> to vector<8x128xf32>
    %395 = vector.shape_cast %392 : vector<8x128xf32> to vector<1x1x8x128xf32>
    tpu.vector_store %arg4[%c4_383, %c3_384, %c0_385, %c0_386], %395 {strides = array<i32>} : memref<9x8x8x128xf32, #tpu.memory_space<vmem>>, vector<1x1x8x128xf32>,
    %c0_387 = arith.constant 0 : index
    %c4_388 = arith.constant 4 : index
    %c0_389 = arith.constant 0 : index
    %396 = vector.load %arg2[%c0_387, %c4_388, %c0_389] : memref<1x8x128xf32, #tpu.memory_space<vmem>>, vector<1x1x128xf32>
    %397 = vector.shape_cast %396 : vector<1x1x128xf32> to vector<1x128xf32>
    %cst_390 = arith.constant 1.000000e+00 : f32
    %398 = vector.broadcast %cst_390 : f32 to vector<1x128xf32>
    %399 = arith.mulf %398, %397 : vector<1x128xf32>
    %c4_391 = arith.constant 4 : index
    %c0_392 = arith.constant 0 : index
    %c0_393 = arith.constant 0 : index
    %400 = vector.load %arg3[%c4_391, %c0_392, %c0_393] : memref<9x8x128xf32, #tpu.memory_space<vmem>>, vector<1x8x128xf32>
    %401 = vector.shape_cast %400 : vector<1x8x128xf32> to vector<8x128xf32>
    %402 = vector.broadcast %399 : vector<1x128xf32> to vector<8x128xf32>
    %403 = arith.mulf %402, %401 : vector<8x128xf32>
    %c4_394 = arith.constant 4 : index
    %c4_395 = arith.constant 4 : index
    %c0_396 = arith.constant 0 : index
    %c0_397 = arith.constant 0 : index
    %404 = vector.load %arg4[%c4_394, %c4_395, %c0_396, %c0_397] : memref<9x8x8x128xf32, #tpu.memory_space<vmem>>, vector<1x1x8x128xf32>
    %405 = vector.shape_cast %404 : vector<1x1x8x128xf32> to vector<8x128xf32>
    %406 = vector.shape_cast %403 : vector<8x128xf32> to vector<1x1x8x128xf32>
    tpu.vector_store %arg4[%c4_394, %c4_395, %c0_396, %c0_397], %406 {strides = array<i32>} : memref<9x8x8x128xf32, #tpu.memory_space<vmem>>, vector<1x1x8x128xf32>,
    %c0_398 = arith.constant 0 : index
    %c5_399 = arith.constant 5 : index
    %c0_400 = arith.constant 0 : index
    %407 = vector.load %arg2[%c0_398, %c5_399, %c0_400] : memref<1x8x128xf32, #tpu.memory_space<vmem>>, vector<1x1x128xf32>
    %408 = vector.shape_cast %407 : vector<1x1x128xf32> to vector<1x128xf32>
    %cst_401 = arith.constant 1.000000e+00 : f32
    %409 = vector.broadcast %cst_401 : f32 to vector<1x128xf32>
    %410 = arith.mulf %409, %408 : vector<1x128xf32>
    %c4_402 = arith.constant 4 : index
    %c0_403 = arith.constant 0 : index
    %c0_404 = arith.constant 0 : index
    %411 = vector.load %arg3[%c4_402, %c0_403, %c0_404] : memref<9x8x128xf32, #tpu.memory_space<vmem>>, vector<1x8x128xf32>
    %412 = vector.shape_cast %411 : vector<1x8x128xf32> to vector<8x128xf32>
    %413 = vector.broadcast %410 : vector<1x128xf32> to vector<8x128xf32>
    %414 = arith.mulf %413, %412 : vector<8x128xf32>
    %c4_405 = arith.constant 4 : index
    %c5_406 = arith.constant 5 : index
    %c0_407 = arith.constant 0 : index
    %c0_408 = arith.constant 0 : index
    %415 = vector.load %arg4[%c4_405, %c5_406, %c0_407, %c0_408] : memref<9x8x8x128xf32, #tpu.memory_space<vmem>>, vector<1x1x8x128xf32>
    %416 = vector.shape_cast %415 : vector<1x1x8x128xf32> to vector<8x128xf32>
    %417 = vector.shape_cast %414 : vector<8x128xf32> to vector<1x1x8x128xf32>
    tpu.vector_store %arg4[%c4_405, %c5_406, %c0_407, %c0_408], %417 {strides = array<i32>} : memref<9x8x8x128xf32, #tpu.memory_space<vmem>>, vector<1x1x8x128xf32>,
    %c0_409 = arith.constant 0 : index
    %c6_410 = arith.constant 6 : index
    %c0_411 = arith.constant 0 : index
    %418 = vector.load %arg2[%c0_409, %c6_410, %c0_411] : memref<1x8x128xf32, #tpu.memory_space<vmem>>, vector<1x1x128xf32>
    %419 = vector.shape_cast %418 : vector<1x1x128xf32> to vector<1x128xf32>
    %cst_412 = arith.constant 1.000000e+00 : f32
    %420 = vector.broadcast %cst_412 : f32 to vector<1x128xf32>
    %421 = arith.mulf %420, %419 : vector<1x128xf32>
    %c4_413 = arith.constant 4 : index
    %c0_414 = arith.constant 0 : index
    %c0_415 = arith.constant 0 : index
    %422 = vector.load %arg3[%c4_413, %c0_414, %c0_415] : memref<9x8x128xf32, #tpu.memory_space<vmem>>, vector<1x8x128xf32>
    %423 = vector.shape_cast %422 : vector<1x8x128xf32> to vector<8x128xf32>
    %424 = vector.broadcast %421 : vector<1x128xf32> to vector<8x128xf32>
    %425 = arith.mulf %424, %423 : vector<8x128xf32>
    %c4_416 = arith.constant 4 : index
    %c6_417 = arith.constant 6 : index
    %c0_418 = arith.constant 0 : index
    %c0_419 = arith.constant 0 : index
    %426 = vector.load %arg4[%c4_416, %c6_417, %c0_418, %c0_419] : memref<9x8x8x128xf32, #tpu.memory_space<vmem>>, vector<1x1x8x128xf32>
    %427 = vector.shape_cast %426 : vector<1x1x8x128xf32> to vector<8x128xf32>
    %428 = vector.shape_cast %425 : vector<8x128xf32> to vector<1x1x8x128xf32>
    tpu.vector_store %arg4[%c4_416, %c6_417, %c0_418, %c0_419], %428 {strides = array<i32>} : memref<9x8x8x128xf32, #tpu.memory_space<vmem>>, vector<1x1x8x128xf32>,
    %c0_420 = arith.constant 0 : index
    %c7_421 = arith.constant 7 : index
    %c0_422 = arith.constant 0 : index
    %429 = vector.load %arg2[%c0_420, %c7_421, %c0_422] : memref<1x8x128xf32, #tpu.memory_space<vmem>>, vector<1x1x128xf32>
    %430 = vector.shape_cast %429 : vector<1x1x128xf32> to vector<1x128xf32>
    %cst_423 = arith.constant 1.000000e+00 : f32
    %431 = vector.broadcast %cst_423 : f32 to vector<1x128xf32>
    %432 = arith.mulf %431, %430 : vector<1x128xf32>
    %c4_424 = arith.constant 4 : index
    %c0_425 = arith.constant 0 : index
    %c0_426 = arith.constant 0 : index
    %433 = vector.load %arg3[%c4_424, %c0_425, %c0_426] : memref<9x8x128xf32, #tpu.memory_space<vmem>>, vector<1x8x128xf32>
    %434 = vector.shape_cast %433 : vector<1x8x128xf32> to vector<8x128xf32>
    %435 = vector.broadcast %432 : vector<1x128xf32> to vector<8x128xf32>
    %436 = arith.mulf %435, %434 : vector<8x128xf32>
    %c4_427 = arith.constant 4 : index
    %c7_428 = arith.constant 7 : index
    %c0_429 = arith.constant 0 : index
    %c0_430 = arith.constant 0 : index
    %437 = vector.load %arg4[%c4_427, %c7_428, %c0_429, %c0_430] : memref<9x8x8x128xf32, #tpu.memory_space<vmem>>, vector<1x1x8x128xf32>
    %438 = vector.shape_cast %437 : vector<1x1x8x128xf32> to vector<8x128xf32>
    %439 = vector.shape_cast %436 : vector<8x128xf32> to vector<1x1x8x128xf32>
    tpu.vector_store %arg4[%c4_427, %c7_428, %c0_429, %c0_430], %439 {strides = array<i32>} : memref<9x8x8x128xf32, #tpu.memory_space<vmem>>, vector<1x1x8x128xf32>,
    %c0_431 = arith.constant 0 : index
    %c0_432 = arith.constant 0 : index
    %c0_433 = arith.constant 0 : index
    %440 = vector.load %arg2[%c0_431, %c0_432, %c0_433] : memref<1x8x128xf32, #tpu.memory_space<vmem>>, vector<1x1x128xf32>
    %441 = vector.shape_cast %440 : vector<1x1x128xf32> to vector<1x128xf32>
    %cst_434 = arith.constant 1.000000e+00 : f32
    %442 = vector.broadcast %cst_434 : f32 to vector<1x128xf32>
    %443 = arith.mulf %442, %441 : vector<1x128xf32>
    %c5_435 = arith.constant 5 : index
    %c0_436 = arith.constant 0 : index
    %c0_437 = arith.constant 0 : index
    %444 = vector.load %arg3[%c5_435, %c0_436, %c0_437] : memref<9x8x128xf32, #tpu.memory_space<vmem>>, vector<1x8x128xf32>
    %445 = vector.shape_cast %444 : vector<1x8x128xf32> to vector<8x128xf32>
    %446 = vector.broadcast %443 : vector<1x128xf32> to vector<8x128xf32>
    %447 = arith.mulf %446, %445 : vector<8x128xf32>
    %c5_438 = arith.constant 5 : index
    %c0_439 = arith.constant 0 : index
    %c0_440 = arith.constant 0 : index
    %c0_441 = arith.constant 0 : index
    %448 = vector.load %arg4[%c5_438, %c0_439, %c0_440, %c0_441] : memref<9x8x8x128xf32, #tpu.memory_space<vmem>>, vector<1x1x8x128xf32>
    %449 = vector.shape_cast %448 : vector<1x1x8x128xf32> to vector<8x128xf32>
    %450 = vector.shape_cast %447 : vector<8x128xf32> to vector<1x1x8x128xf32>
    tpu.vector_store %arg4[%c5_438, %c0_439, %c0_440, %c0_441], %450 {strides = array<i32>} : memref<9x8x8x128xf32, #tpu.memory_space<vmem>>, vector<1x1x8x128xf32>,
    %c0_442 = arith.constant 0 : index
    %c1_443 = arith.constant 1 : index
    %c0_444 = arith.constant 0 : index
    %451 = vector.load %arg2[%c0_442, %c1_443, %c0_444] : memref<1x8x128xf32, #tpu.memory_space<vmem>>, vector<1x1x128xf32>
    %452 = vector.shape_cast %451 : vector<1x1x128xf32> to vector<1x128xf32>
    %cst_445 = arith.constant 1.000000e+00 : f32
    %453 = vector.broadcast %cst_445 : f32 to vector<1x128xf32>
    %454 = arith.mulf %453, %452 : vector<1x128xf32>
    %c5_446 = arith.constant 5 : index
    %c0_447 = arith.constant 0 : index
    %c0_448 = arith.constant 0 : index
    %455 = vector.load %arg3[%c5_446, %c0_447, %c0_448] : memref<9x8x128xf32, #tpu.memory_space<vmem>>, vector<1x8x128xf32>
    %456 = vector.shape_cast %455 : vector<1x8x128xf32> to vector<8x128xf32>
    %457 = vector.broadcast %454 : vector<1x128xf32> to vector<8x128xf32>
    %458 = arith.mulf %457, %456 : vector<8x128xf32>
    %c5_449 = arith.constant 5 : index
    %c1_450 = arith.constant 1 : index
    %c0_451 = arith.constant 0 : index
    %c0_452 = arith.constant 0 : index
    %459 = vector.load %arg4[%c5_449, %c1_450, %c0_451, %c0_452] : memref<9x8x8x128xf32, #tpu.memory_space<vmem>>, vector<1x1x8x128xf32>
    %460 = vector.shape_cast %459 : vector<1x1x8x128xf32> to vector<8x128xf32>
    %461 = vector.shape_cast %458 : vector<8x128xf32> to vector<1x1x8x128xf32>
    tpu.vector_store %arg4[%c5_449, %c1_450, %c0_451, %c0_452], %461 {strides = array<i32>} : memref<9x8x8x128xf32, #tpu.memory_space<vmem>>, vector<1x1x8x128xf32>,
    %c0_453 = arith.constant 0 : index
    %c2_454 = arith.constant 2 : index
    %c0_455 = arith.constant 0 : index
    %462 = vector.load %arg2[%c0_453, %c2_454, %c0_455] : memref<1x8x128xf32, #tpu.memory_space<vmem>>, vector<1x1x128xf32>
    %463 = vector.shape_cast %462 : vector<1x1x128xf32> to vector<1x128xf32>
    %cst_456 = arith.constant 1.000000e+00 : f32
    %464 = vector.broadcast %cst_456 : f32 to vector<1x128xf32>
    %465 = arith.mulf %464, %463 : vector<1x128xf32>
    %c5_457 = arith.constant 5 : index
    %c0_458 = arith.constant 0 : index
    %c0_459 = arith.constant 0 : index
    %466 = vector.load %arg3[%c5_457, %c0_458, %c0_459] : memref<9x8x128xf32, #tpu.memory_space<vmem>>, vector<1x8x128xf32>
    %467 = vector.shape_cast %466 : vector<1x8x128xf32> to vector<8x128xf32>
    %468 = vector.broadcast %465 : vector<1x128xf32> to vector<8x128xf32>
    %469 = arith.mulf %468, %467 : vector<8x128xf32>
    %c5_460 = arith.constant 5 : index
    %c2_461 = arith.constant 2 : index
    %c0_462 = arith.constant 0 : index
    %c0_463 = arith.constant 0 : index
    %470 = vector.load %arg4[%c5_460, %c2_461, %c0_462, %c0_463] : memref<9x8x8x128xf32, #tpu.memory_space<vmem>>, vector<1x1x8x128xf32>
    %471 = vector.shape_cast %470 : vector<1x1x8x128xf32> to vector<8x128xf32>
    %472 = vector.shape_cast %469 : vector<8x128xf32> to vector<1x1x8x128xf32>
    tpu.vector_store %arg4[%c5_460, %c2_461, %c0_462, %c0_463], %472 {strides = array<i32>} : memref<9x8x8x128xf32, #tpu.memory_space<vmem>>, vector<1x1x8x128xf32>,
    %c0_464 = arith.constant 0 : index
    %c3_465 = arith.constant 3 : index
    %c0_466 = arith.constant 0 : index
    %473 = vector.load %arg2[%c0_464, %c3_465, %c0_466] : memref<1x8x128xf32, #tpu.memory_space<vmem>>, vector<1x1x128xf32>
    %474 = vector.shape_cast %473 : vector<1x1x128xf32> to vector<1x128xf32>
    %cst_467 = arith.constant 1.000000e+00 : f32
    %475 = vector.broadcast %cst_467 : f32 to vector<1x128xf32>
    %476 = arith.mulf %475, %474 : vector<1x128xf32>
    %c5_468 = arith.constant 5 : index
    %c0_469 = arith.constant 0 : index
    %c0_470 = arith.constant 0 : index
    %477 = vector.load %arg3[%c5_468, %c0_469, %c0_470] : memref<9x8x128xf32, #tpu.memory_space<vmem>>, vector<1x8x128xf32>
    %478 = vector.shape_cast %477 : vector<1x8x128xf32> to vector<8x128xf32>
    %479 = vector.broadcast %476 : vector<1x128xf32> to vector<8x128xf32>
    %480 = arith.mulf %479, %478 : vector<8x128xf32>
    %c5_471 = arith.constant 5 : index
    %c3_472 = arith.constant 3 : index
    %c0_473 = arith.constant 0 : index
    %c0_474 = arith.constant 0 : index
    %481 = vector.load %arg4[%c5_471, %c3_472, %c0_473, %c0_474] : memref<9x8x8x128xf32, #tpu.memory_space<vmem>>, vector<1x1x8x128xf32>
    %482 = vector.shape_cast %481 : vector<1x1x8x128xf32> to vector<8x128xf32>
    %483 = vector.shape_cast %480 : vector<8x128xf32> to vector<1x1x8x128xf32>
    tpu.vector_store %arg4[%c5_471, %c3_472, %c0_473, %c0_474], %483 {strides = array<i32>} : memref<9x8x8x128xf32, #tpu.memory_space<vmem>>, vector<1x1x8x128xf32>,
    %c0_475 = arith.constant 0 : index
    %c4_476 = arith.constant 4 : index
    %c0_477 = arith.constant 0 : index
    %484 = vector.load %arg2[%c0_475, %c4_476, %c0_477] : memref<1x8x128xf32, #tpu.memory_space<vmem>>, vector<1x1x128xf32>
    %485 = vector.shape_cast %484 : vector<1x1x128xf32> to vector<1x128xf32>
    %cst_478 = arith.constant 1.000000e+00 : f32
    %486 = vector.broadcast %cst_478 : f32 to vector<1x128xf32>
    %487 = arith.mulf %486, %485 : vector<1x128xf32>
    %c5_479 = arith.constant 5 : index
    %c0_480 = arith.constant 0 : index
    %c0_481 = arith.constant 0 : index
    %488 = vector.load %arg3[%c5_479, %c0_480, %c0_481] : memref<9x8x128xf32, #tpu.memory_space<vmem>>, vector<1x8x128xf32>
    %489 = vector.shape_cast %488 : vector<1x8x128xf32> to vector<8x128xf32>
    %490 = vector.broadcast %487 : vector<1x128xf32> to vector<8x128xf32>
    %491 = arith.mulf %490, %489 : vector<8x128xf32>
    %c5_482 = arith.constant 5 : index
    %c4_483 = arith.constant 4 : index
    %c0_484 = arith.constant 0 : index
    %c0_485 = arith.constant 0 : index
    %492 = vector.load %arg4[%c5_482, %c4_483, %c0_484, %c0_485] : memref<9x8x8x128xf32, #tpu.memory_space<vmem>>, vector<1x1x8x128xf32>
    %493 = vector.shape_cast %492 : vector<1x1x8x128xf32> to vector<8x128xf32>
    %494 = vector.shape_cast %491 : vector<8x128xf32> to vector<1x1x8x128xf32>
    tpu.vector_store %arg4[%c5_482, %c4_483, %c0_484, %c0_485], %494 {strides = array<i32>} : memref<9x8x8x128xf32, #tpu.memory_space<vmem>>, vector<1x1x8x128xf32>,
    %c0_486 = arith.constant 0 : index
    %c5_487 = arith.constant 5 : index
    %c0_488 = arith.constant 0 : index
    %495 = vector.load %arg2[%c0_486, %c5_487, %c0_488] : memref<1x8x128xf32, #tpu.memory_space<vmem>>, vector<1x1x128xf32>
    %496 = vector.shape_cast %495 : vector<1x1x128xf32> to vector<1x128xf32>
    %cst_489 = arith.constant 1.000000e+00 : f32
    %497 = vector.broadcast %cst_489 : f32 to vector<1x128xf32>
    %498 = arith.mulf %497, %496 : vector<1x128xf32>
    %c5_490 = arith.constant 5 : index
    %c0_491 = arith.constant 0 : index
    %c0_492 = arith.constant 0 : index
    %499 = vector.load %arg3[%c5_490, %c0_491, %c0_492] : memref<9x8x128xf32, #tpu.memory_space<vmem>>, vector<1x8x128xf32>
    %500 = vector.shape_cast %499 : vector<1x8x128xf32> to vector<8x128xf32>
    %501 = vector.broadcast %498 : vector<1x128xf32> to vector<8x128xf32>
    %502 = arith.mulf %501, %500 : vector<8x128xf32>
    %c5_493 = arith.constant 5 : index
    %c5_494 = arith.constant 5 : index
    %c0_495 = arith.constant 0 : index
    %c0_496 = arith.constant 0 : index
    %503 = vector.load %arg4[%c5_493, %c5_494, %c0_495, %c0_496] : memref<9x8x8x128xf32, #tpu.memory_space<vmem>>, vector<1x1x8x128xf32>
    %504 = vector.shape_cast %503 : vector<1x1x8x128xf32> to vector<8x128xf32>
    %505 = vector.shape_cast %502 : vector<8x128xf32> to vector<1x1x8x128xf32>
    tpu.vector_store %arg4[%c5_493, %c5_494, %c0_495, %c0_496], %505 {strides = array<i32>} : memref<9x8x8x128xf32, #tpu.memory_space<vmem>>, vector<1x1x8x128xf32>,
    %c0_497 = arith.constant 0 : index
    %c6_498 = arith.constant 6 : index
    %c0_499 = arith.constant 0 : index
    %506 = vector.load %arg2[%c0_497, %c6_498, %c0_499] : memref<1x8x128xf32, #tpu.memory_space<vmem>>, vector<1x1x128xf32>
    %507 = vector.shape_cast %506 : vector<1x1x128xf32> to vector<1x128xf32>
    %cst_500 = arith.constant 1.000000e+00 : f32
    %508 = vector.broadcast %cst_500 : f32 to vector<1x128xf32>
    %509 = arith.mulf %508, %507 : vector<1x128xf32>
    %c5_501 = arith.constant 5 : index
    %c0_502 = arith.constant 0 : index
    %c0_503 = arith.constant 0 : index
    %510 = vector.load %arg3[%c5_501, %c0_502, %c0_503] : memref<9x8x128xf32, #tpu.memory_space<vmem>>, vector<1x8x128xf32>
    %511 = vector.shape_cast %510 : vector<1x8x128xf32> to vector<8x128xf32>
    %512 = vector.broadcast %509 : vector<1x128xf32> to vector<8x128xf32>
    %513 = arith.mulf %512, %511 : vector<8x128xf32>
    %c5_504 = arith.constant 5 : index
    %c6_505 = arith.constant 6 : index
    %c0_506 = arith.constant 0 : index
    %c0_507 = arith.constant 0 : index
    %514 = vector.load %arg4[%c5_504, %c6_505, %c0_506, %c0_507] : memref<9x8x8x128xf32, #tpu.memory_space<vmem>>, vector<1x1x8x128xf32>
    %515 = vector.shape_cast %514 : vector<1x1x8x128xf32> to vector<8x128xf32>
    %516 = vector.shape_cast %513 : vector<8x128xf32> to vector<1x1x8x128xf32>
    tpu.vector_store %arg4[%c5_504, %c6_505, %c0_506, %c0_507], %516 {strides = array<i32>} : memref<9x8x8x128xf32, #tpu.memory_space<vmem>>, vector<1x1x8x128xf32>,
    %c0_508 = arith.constant 0 : index
    %c7_509 = arith.constant 7 : index
    %c0_510 = arith.constant 0 : index
    %517 = vector.load %arg2[%c0_508, %c7_509, %c0_510] : memref<1x8x128xf32, #tpu.memory_space<vmem>>, vector<1x1x128xf32>
    %518 = vector.shape_cast %517 : vector<1x1x128xf32> to vector<1x128xf32>
    %cst_511 = arith.constant 1.000000e+00 : f32
    %519 = vector.broadcast %cst_511 : f32 to vector<1x128xf32>
    %520 = arith.mulf %519, %518 : vector<1x128xf32>
    %c5_512 = arith.constant 5 : index
    %c0_513 = arith.constant 0 : index
    %c0_514 = arith.constant 0 : index
    %521 = vector.load %arg3[%c5_512, %c0_513, %c0_514] : memref<9x8x128xf32, #tpu.memory_space<vmem>>, vector<1x8x128xf32>
    %522 = vector.shape_cast %521 : vector<1x8x128xf32> to vector<8x128xf32>
    %523 = vector.broadcast %520 : vector<1x128xf32> to vector<8x128xf32>
    %524 = arith.mulf %523, %522 : vector<8x128xf32>
    %c5_515 = arith.constant 5 : index
    %c7_516 = arith.constant 7 : index
    %c0_517 = arith.constant 0 : index
    %c0_518 = arith.constant 0 : index
    %525 = vector.load %arg4[%c5_515, %c7_516, %c0_517, %c0_518] : memref<9x8x8x128xf32, #tpu.memory_space<vmem>>, vector<1x1x8x128xf32>
    %526 = vector.shape_cast %525 : vector<1x1x8x128xf32> to vector<8x128xf32>
    %527 = vector.shape_cast %524 : vector<8x128xf32> to vector<1x1x8x128xf32>
    tpu.vector_store %arg4[%c5_515, %c7_516, %c0_517, %c0_518], %527 {strides = array<i32>} : memref<9x8x8x128xf32, #tpu.memory_space<vmem>>, vector<1x1x8x128xf32>,
    %c0_519 = arith.constant 0 : index
    %c0_520 = arith.constant 0 : index
    %c0_521 = arith.constant 0 : index
    %528 = vector.load %arg2[%c0_519, %c0_520, %c0_521] : memref<1x8x128xf32, #tpu.memory_space<vmem>>, vector<1x1x128xf32>
    %529 = vector.shape_cast %528 : vector<1x1x128xf32> to vector<1x128xf32>
    %cst_522 = arith.constant 1.000000e+00 : f32
    %530 = vector.broadcast %cst_522 : f32 to vector<1x128xf32>
    %531 = arith.mulf %530, %529 : vector<1x128xf32>
    %c6_523 = arith.constant 6 : index
    %c0_524 = arith.constant 0 : index
    %c0_525 = arith.constant 0 : index
    %532 = vector.load %arg3[%c6_523, %c0_524, %c0_525] : memref<9x8x128xf32, #tpu.memory_space<vmem>>, vector<1x8x128xf32>
    %533 = vector.shape_cast %532 : vector<1x8x128xf32> to vector<8x128xf32>
    %534 = vector.broadcast %531 : vector<1x128xf32> to vector<8x128xf32>
    %535 = arith.mulf %534, %533 : vector<8x128xf32>
    %c6_526 = arith.constant 6 : index
    %c0_527 = arith.constant 0 : index
    %c0_528 = arith.constant 0 : index
    %c0_529 = arith.constant 0 : index
    %536 = vector.load %arg4[%c6_526, %c0_527, %c0_528, %c0_529] : memref<9x8x8x128xf32, #tpu.memory_space<vmem>>, vector<1x1x8x128xf32>
    %537 = vector.shape_cast %536 : vector<1x1x8x128xf32> to vector<8x128xf32>
    %538 = vector.shape_cast %535 : vector<8x128xf32> to vector<1x1x8x128xf32>
    tpu.vector_store %arg4[%c6_526, %c0_527, %c0_528, %c0_529], %538 {strides = array<i32>} : memref<9x8x8x128xf32, #tpu.memory_space<vmem>>, vector<1x1x8x128xf32>,
    %c0_530 = arith.constant 0 : index
    %c1_531 = arith.constant 1 : index
    %c0_532 = arith.constant 0 : index
    %539 = vector.load %arg2[%c0_530, %c1_531, %c0_532] : memref<1x8x128xf32, #tpu.memory_space<vmem>>, vector<1x1x128xf32>
    %540 = vector.shape_cast %539 : vector<1x1x128xf32> to vector<1x128xf32>
    %cst_533 = arith.constant 1.000000e+00 : f32
    %541 = vector.broadcast %cst_533 : f32 to vector<1x128xf32>
    %542 = arith.mulf %541, %540 : vector<1x128xf32>
    %c6_534 = arith.constant 6 : index
    %c0_535 = arith.constant 0 : index
    %c0_536 = arith.constant 0 : index
    %543 = vector.load %arg3[%c6_534, %c0_535, %c0_536] : memref<9x8x128xf32, #tpu.memory_space<vmem>>, vector<1x8x128xf32>
    %544 = vector.shape_cast %543 : vector<1x8x128xf32> to vector<8x128xf32>
    %545 = vector.broadcast %542 : vector<1x128xf32> to vector<8x128xf32>
    %546 = arith.mulf %545, %544 : vector<8x128xf32>
    %c6_537 = arith.constant 6 : index
    %c1_538 = arith.constant 1 : index
    %c0_539 = arith.constant 0 : index
    %c0_540 = arith.constant 0 : index
    %547 = vector.load %arg4[%c6_537, %c1_538, %c0_539, %c0_540] : memref<9x8x8x128xf32, #tpu.memory_space<vmem>>, vector<1x1x8x128xf32>
    %548 = vector.shape_cast %547 : vector<1x1x8x128xf32> to vector<8x128xf32>
    %549 = vector.shape_cast %546 : vector<8x128xf32> to vector<1x1x8x128xf32>
    tpu.vector_store %arg4[%c6_537, %c1_538, %c0_539, %c0_540], %549 {strides = array<i32>} : memref<9x8x8x128xf32, #tpu.memory_space<vmem>>, vector<1x1x8x128xf32>,
    %c0_541 = arith.constant 0 : index
    %c2_542 = arith.constant 2 : index
    %c0_543 = arith.constant 0 : index
    %550 = vector.load %arg2[%c0_541, %c2_542, %c0_543] : memref<1x8x128xf32, #tpu.memory_space<vmem>>, vector<1x1x128xf32>
    %551 = vector.shape_cast %550 : vector<1x1x128xf32> to vector<1x128xf32>
    %cst_544 = arith.constant 1.000000e+00 : f32
    %552 = vector.broadcast %cst_544 : f32 to vector<1x128xf32>
    %553 = arith.mulf %552, %551 : vector<1x128xf32>
    %c6_545 = arith.constant 6 : index
    %c0_546 = arith.constant 0 : index
    %c0_547 = arith.constant 0 : index
    %554 = vector.load %arg3[%c6_545, %c0_546, %c0_547] : memref<9x8x128xf32, #tpu.memory_space<vmem>>, vector<1x8x128xf32>
    %555 = vector.shape_cast %554 : vector<1x8x128xf32> to vector<8x128xf32>
    %556 = vector.broadcast %553 : vector<1x128xf32> to vector<8x128xf32>
    %557 = arith.mulf %556, %555 : vector<8x128xf32>
    %c6_548 = arith.constant 6 : index
    %c2_549 = arith.constant 2 : index
    %c0_550 = arith.constant 0 : index
    %c0_551 = arith.constant 0 : index
    %558 = vector.load %arg4[%c6_548, %c2_549, %c0_550, %c0_551] : memref<9x8x8x128xf32, #tpu.memory_space<vmem>>, vector<1x1x8x128xf32>
    %559 = vector.shape_cast %558 : vector<1x1x8x128xf32> to vector<8x128xf32>
    %560 = vector.shape_cast %557 : vector<8x128xf32> to vector<1x1x8x128xf32>
    tpu.vector_store %arg4[%c6_548, %c2_549, %c0_550, %c0_551], %560 {strides = array<i32>} : memref<9x8x8x128xf32, #tpu.memory_space<vmem>>, vector<1x1x8x128xf32>,
    %c0_552 = arith.constant 0 : index
    %c3_553 = arith.constant 3 : index
    %c0_554 = arith.constant 0 : index
    %561 = vector.load %arg2[%c0_552, %c3_553, %c0_554] : memref<1x8x128xf32, #tpu.memory_space<vmem>>, vector<1x1x128xf32>
    %562 = vector.shape_cast %561 : vector<1x1x128xf32> to vector<1x128xf32>
    %cst_555 = arith.constant 1.000000e+00 : f32
    %563 = vector.broadcast %cst_555 : f32 to vector<1x128xf32>
    %564 = arith.mulf %563, %562 : vector<1x128xf32>
    %c6_556 = arith.constant 6 : index
    %c0_557 = arith.constant 0 : index
    %c0_558 = arith.constant 0 : index
    %565 = vector.load %arg3[%c6_556, %c0_557, %c0_558] : memref<9x8x128xf32, #tpu.memory_space<vmem>>, vector<1x8x128xf32>
    %566 = vector.shape_cast %565 : vector<1x8x128xf32> to vector<8x128xf32>
    %567 = vector.broadcast %564 : vector<1x128xf32> to vector<8x128xf32>
    %568 = arith.mulf %567, %566 : vector<8x128xf32>
    %c6_559 = arith.constant 6 : index
    %c3_560 = arith.constant 3 : index
    %c0_561 = arith.constant 0 : index
    %c0_562 = arith.constant 0 : index
    %569 = vector.load %arg4[%c6_559, %c3_560, %c0_561, %c0_562] : memref<9x8x8x128xf32, #tpu.memory_space<vmem>>, vector<1x1x8x128xf32>
    %570 = vector.shape_cast %569 : vector<1x1x8x128xf32> to vector<8x128xf32>
    %571 = vector.shape_cast %568 : vector<8x128xf32> to vector<1x1x8x128xf32>
    tpu.vector_store %arg4[%c6_559, %c3_560, %c0_561, %c0_562], %571 {strides = array<i32>} : memref<9x8x8x128xf32, #tpu.memory_space<vmem>>, vector<1x1x8x128xf32>,
    %c0_563 = arith.constant 0 : index
    %c4_564 = arith.constant 4 : index
    %c0_565 = arith.constant 0 : index
    %572 = vector.load %arg2[%c0_563, %c4_564, %c0_565] : memref<1x8x128xf32, #tpu.memory_space<vmem>>, vector<1x1x128xf32>
    %573 = vector.shape_cast %572 : vector<1x1x128xf32> to vector<1x128xf32>
    %cst_566 = arith.constant 1.000000e+00 : f32
    %574 = vector.broadcast %cst_566 : f32 to vector<1x128xf32>
    %575 = arith.mulf %574, %573 : vector<1x128xf32>
    %c6_567 = arith.constant 6 : index
    %c0_568 = arith.constant 0 : index
    %c0_569 = arith.constant 0 : index
    %576 = vector.load %arg3[%c6_567, %c0_568, %c0_569] : memref<9x8x128xf32, #tpu.memory_space<vmem>>, vector<1x8x128xf32>
    %577 = vector.shape_cast %576 : vector<1x8x128xf32> to vector<8x128xf32>
    %578 = vector.broadcast %575 : vector<1x128xf32> to vector<8x128xf32>
    %579 = arith.mulf %578, %577 : vector<8x128xf32>
    %c6_570 = arith.constant 6 : index
    %c4_571 = arith.constant 4 : index
    %c0_572 = arith.constant 0 : index
    %c0_573 = arith.constant 0 : index
    %580 = vector.load %arg4[%c6_570, %c4_571, %c0_572, %c0_573] : memref<9x8x8x128xf32, #tpu.memory_space<vmem>>, vector<1x1x8x128xf32>
    %581 = vector.shape_cast %580 : vector<1x1x8x128xf32> to vector<8x128xf32>
    %582 = vector.shape_cast %579 : vector<8x128xf32> to vector<1x1x8x128xf32>
    tpu.vector_store %arg4[%c6_570, %c4_571, %c0_572, %c0_573], %582 {strides = array<i32>} : memref<9x8x8x128xf32, #tpu.memory_space<vmem>>, vector<1x1x8x128xf32>,
    %c0_574 = arith.constant 0 : index
    %c5_575 = arith.constant 5 : index
    %c0_576 = arith.constant 0 : index
    %583 = vector.load %arg2[%c0_574, %c5_575, %c0_576] : memref<1x8x128xf32, #tpu.memory_space<vmem>>, vector<1x1x128xf32>
    %584 = vector.shape_cast %583 : vector<1x1x128xf32> to vector<1x128xf32>
    %cst_577 = arith.constant 1.000000e+00 : f32
    %585 = vector.broadcast %cst_577 : f32 to vector<1x128xf32>
    %586 = arith.mulf %585, %584 : vector<1x128xf32>
    %c6_578 = arith.constant 6 : index
    %c0_579 = arith.constant 0 : index
    %c0_580 = arith.constant 0 : index
    %587 = vector.load %arg3[%c6_578, %c0_579, %c0_580] : memref<9x8x128xf32, #tpu.memory_space<vmem>>, vector<1x8x128xf32>
    %588 = vector.shape_cast %587 : vector<1x8x128xf32> to vector<8x128xf32>
    %589 = vector.broadcast %586 : vector<1x128xf32> to vector<8x128xf32>
    %590 = arith.mulf %589, %588 : vector<8x128xf32>
    %c6_581 = arith.constant 6 : index
    %c5_582 = arith.constant 5 : index
    %c0_583 = arith.constant 0 : index
    %c0_584 = arith.constant 0 : index
    %591 = vector.load %arg4[%c6_581, %c5_582, %c0_583, %c0_584] : memref<9x8x8x128xf32, #tpu.memory_space<vmem>>, vector<1x1x8x128xf32>
    %592 = vector.shape_cast %591 : vector<1x1x8x128xf32> to vector<8x128xf32>
    %593 = vector.shape_cast %590 : vector<8x128xf32> to vector<1x1x8x128xf32>
    tpu.vector_store %arg4[%c6_581, %c5_582, %c0_583, %c0_584], %593 {strides = array<i32>} : memref<9x8x8x128xf32, #tpu.memory_space<vmem>>, vector<1x1x8x128xf32>,
    %c0_585 = arith.constant 0 : index
    %c6_586 = arith.constant 6 : index
    %c0_587 = arith.constant 0 : index
    %594 = vector.load %arg2[%c0_585, %c6_586, %c0_587] : memref<1x8x128xf32, #tpu.memory_space<vmem>>, vector<1x1x128xf32>
    %595 = vector.shape_cast %594 : vector<1x1x128xf32> to vector<1x128xf32>
    %cst_588 = arith.constant 1.000000e+00 : f32
    %596 = vector.broadcast %cst_588 : f32 to vector<1x128xf32>
    %597 = arith.mulf %596, %595 : vector<1x128xf32>
    %c6_589 = arith.constant 6 : index
    %c0_590 = arith.constant 0 : index
    %c0_591 = arith.constant 0 : index
    %598 = vector.load %arg3[%c6_589, %c0_590, %c0_591] : memref<9x8x128xf32, #tpu.memory_space<vmem>>, vector<1x8x128xf32>
    %599 = vector.shape_cast %598 : vector<1x8x128xf32> to vector<8x128xf32>
    %600 = vector.broadcast %597 : vector<1x128xf32> to vector<8x128xf32>
    %601 = arith.mulf %600, %599 : vector<8x128xf32>
    %c6_592 = arith.constant 6 : index
    %c6_593 = arith.constant 6 : index
    %c0_594 = arith.constant 0 : index
    %c0_595 = arith.constant 0 : index
    %602 = vector.load %arg4[%c6_592, %c6_593, %c0_594, %c0_595] : memref<9x8x8x128xf32, #tpu.memory_space<vmem>>, vector<1x1x8x128xf32>
    %603 = vector.shape_cast %602 : vector<1x1x8x128xf32> to vector<8x128xf32>
    %604 = vector.shape_cast %601 : vector<8x128xf32> to vector<1x1x8x128xf32>
    tpu.vector_store %arg4[%c6_592, %c6_593, %c0_594, %c0_595], %604 {strides = array<i32>} : memref<9x8x8x128xf32, #tpu.memory_space<vmem>>, vector<1x1x8x128xf32>,
    %c0_596 = arith.constant 0 : index
    %c7_597 = arith.constant 7 : index
    %c0_598 = arith.constant 0 : index
    %605 = vector.load %arg2[%c0_596, %c7_597, %c0_598] : memref<1x8x128xf32, #tpu.memory_space<vmem>>, vector<1x1x128xf32>
    %606 = vector.shape_cast %605 : vector<1x1x128xf32> to vector<1x128xf32>
    %cst_599 = arith.constant 1.000000e+00 : f32
    %607 = vector.broadcast %cst_599 : f32 to vector<1x128xf32>
    %608 = arith.mulf %607, %606 : vector<1x128xf32>
    %c6_600 = arith.constant 6 : index
    %c0_601 = arith.constant 0 : index
    %c0_602 = arith.constant 0 : index
    %609 = vector.load %arg3[%c6_600, %c0_601, %c0_602] : memref<9x8x128xf32, #tpu.memory_space<vmem>>, vector<1x8x128xf32>
    %610 = vector.shape_cast %609 : vector<1x8x128xf32> to vector<8x128xf32>
    %611 = vector.broadcast %608 : vector<1x128xf32> to vector<8x128xf32>
    %612 = arith.mulf %611, %610 : vector<8x128xf32>
    %c6_603 = arith.constant 6 : index
    %c7_604 = arith.constant 7 : index
    %c0_605 = arith.constant 0 : index
    %c0_606 = arith.constant 0 : index
    %613 = vector.load %arg4[%c6_603, %c7_604, %c0_605, %c0_606] : memref<9x8x8x128xf32, #tpu.memory_space<vmem>>, vector<1x1x8x128xf32>
    %614 = vector.shape_cast %613 : vector<1x1x8x128xf32> to vector<8x128xf32>
    %615 = vector.shape_cast %612 : vector<8x128xf32> to vector<1x1x8x128xf32>
    tpu.vector_store %arg4[%c6_603, %c7_604, %c0_605, %c0_606], %615 {strides = array<i32>} : memref<9x8x8x128xf32, #tpu.memory_space<vmem>>, vector<1x1x8x128xf32>,
    %c0_607 = arith.constant 0 : index
    %c0_608 = arith.constant 0 : index
    %c0_609 = arith.constant 0 : index
    %616 = vector.load %arg2[%c0_607, %c0_608, %c0_609] : memref<1x8x128xf32, #tpu.memory_space<vmem>>, vector<1x1x128xf32>
    %617 = vector.shape_cast %616 : vector<1x1x128xf32> to vector<1x128xf32>
    %cst_610 = arith.constant 1.000000e+00 : f32
    %618 = vector.broadcast %cst_610 : f32 to vector<1x128xf32>
    %619 = arith.mulf %618, %617 : vector<1x128xf32>
    %c7_611 = arith.constant 7 : index
    %c0_612 = arith.constant 0 : index
    %c0_613 = arith.constant 0 : index
    %620 = vector.load %arg3[%c7_611, %c0_612, %c0_613] : memref<9x8x128xf32, #tpu.memory_space<vmem>>, vector<1x8x128xf32>
    %621 = vector.shape_cast %620 : vector<1x8x128xf32> to vector<8x128xf32>
    %622 = vector.broadcast %619 : vector<1x128xf32> to vector<8x128xf32>
    %623 = arith.mulf %622, %621 : vector<8x128xf32>
    %c7_614 = arith.constant 7 : index
    %c0_615 = arith.constant 0 : index
    %c0_616 = arith.constant 0 : index
    %c0_617 = arith.constant 0 : index
    %624 = vector.load %arg4[%c7_614, %c0_615, %c0_616, %c0_617] : memref<9x8x8x128xf32, #tpu.memory_space<vmem>>, vector<1x1x8x128xf32>
    %625 = vector.shape_cast %624 : vector<1x1x8x128xf32> to vector<8x128xf32>
    %626 = vector.shape_cast %623 : vector<8x128xf32> to vector<1x1x8x128xf32>
    tpu.vector_store %arg4[%c7_614, %c0_615, %c0_616, %c0_617], %626 {strides = array<i32>} : memref<9x8x8x128xf32, #tpu.memory_space<vmem>>, vector<1x1x8x128xf32>,
    %c0_618 = arith.constant 0 : index
    %c1_619 = arith.constant 1 : index
    %c0_620 = arith.constant 0 : index
    %627 = vector.load %arg2[%c0_618, %c1_619, %c0_620] : memref<1x8x128xf32, #tpu.memory_space<vmem>>, vector<1x1x128xf32>
    %628 = vector.shape_cast %627 : vector<1x1x128xf32> to vector<1x128xf32>
    %cst_621 = arith.constant 1.000000e+00 : f32
    %629 = vector.broadcast %cst_621 : f32 to vector<1x128xf32>
    %630 = arith.mulf %629, %628 : vector<1x128xf32>
    %c7_622 = arith.constant 7 : index
    %c0_623 = arith.constant 0 : index
    %c0_624 = arith.constant 0 : index
    %631 = vector.load %arg3[%c7_622, %c0_623, %c0_624] : memref<9x8x128xf32, #tpu.memory_space<vmem>>, vector<1x8x128xf32>
    %632 = vector.shape_cast %631 : vector<1x8x128xf32> to vector<8x128xf32>
    %633 = vector.broadcast %630 : vector<1x128xf32> to vector<8x128xf32>
    %634 = arith.mulf %633, %632 : vector<8x128xf32>
    %c7_625 = arith.constant 7 : index
    %c1_626 = arith.constant 1 : index
    %c0_627 = arith.constant 0 : index
    %c0_628 = arith.constant 0 : index
    %635 = vector.load %arg4[%c7_625, %c1_626, %c0_627, %c0_628] : memref<9x8x8x128xf32, #tpu.memory_space<vmem>>, vector<1x1x8x128xf32>
    %636 = vector.shape_cast %635 : vector<1x1x8x128xf32> to vector<8x128xf32>
    %637 = vector.shape_cast %634 : vector<8x128xf32> to vector<1x1x8x128xf32>
    tpu.vector_store %arg4[%c7_625, %c1_626, %c0_627, %c0_628], %637 {strides = array<i32>} : memref<9x8x8x128xf32, #tpu.memory_space<vmem>>, vector<1x1x8x128xf32>,
    %c0_629 = arith.constant 0 : index
    %c2_630 = arith.constant 2 : index
    %c0_631 = arith.constant 0 : index
    %638 = vector.load %arg2[%c0_629, %c2_630, %c0_631] : memref<1x8x128xf32, #tpu.memory_space<vmem>>, vector<1x1x128xf32>
    %639 = vector.shape_cast %638 : vector<1x1x128xf32> to vector<1x128xf32>
    %cst_632 = arith.constant 1.000000e+00 : f32
    %640 = vector.broadcast %cst_632 : f32 to vector<1x128xf32>
    %641 = arith.mulf %640, %639 : vector<1x128xf32>
    %c7_633 = arith.constant 7 : index
    %c0_634 = arith.constant 0 : index
    %c0_635 = arith.constant 0 : index
    %642 = vector.load %arg3[%c7_633, %c0_634, %c0_635] : memref<9x8x128xf32, #tpu.memory_space<vmem>>, vector<1x8x128xf32>
    %643 = vector.shape_cast %642 : vector<1x8x128xf32> to vector<8x128xf32>
    %644 = vector.broadcast %641 : vector<1x128xf32> to vector<8x128xf32>
    %645 = arith.mulf %644, %643 : vector<8x128xf32>
    %c7_636 = arith.constant 7 : index
    %c2_637 = arith.constant 2 : index
    %c0_638 = arith.constant 0 : index
    %c0_639 = arith.constant 0 : index
    %646 = vector.load %arg4[%c7_636, %c2_637, %c0_638, %c0_639] : memref<9x8x8x128xf32, #tpu.memory_space<vmem>>, vector<1x1x8x128xf32>
    %647 = vector.shape_cast %646 : vector<1x1x8x128xf32> to vector<8x128xf32>
    %648 = vector.shape_cast %645 : vector<8x128xf32> to vector<1x1x8x128xf32>
    tpu.vector_store %arg4[%c7_636, %c2_637, %c0_638, %c0_639], %648 {strides = array<i32>} : memref<9x8x8x128xf32, #tpu.memory_space<vmem>>, vector<1x1x8x128xf32>,
    %c0_640 = arith.constant 0 : index
    %c3_641 = arith.constant 3 : index
    %c0_642 = arith.constant 0 : index
    %649 = vector.load %arg2[%c0_640, %c3_641, %c0_642] : memref<1x8x128xf32, #tpu.memory_space<vmem>>, vector<1x1x128xf32>
    %650 = vector.shape_cast %649 : vector<1x1x128xf32> to vector<1x128xf32>
    %cst_643 = arith.constant 1.000000e+00 : f32
    %651 = vector.broadcast %cst_643 : f32 to vector<1x128xf32>
    %652 = arith.mulf %651, %650 : vector<1x128xf32>
    %c7_644 = arith.constant 7 : index
    %c0_645 = arith.constant 0 : index
    %c0_646 = arith.constant 0 : index
    %653 = vector.load %arg3[%c7_644, %c0_645, %c0_646] : memref<9x8x128xf32, #tpu.memory_space<vmem>>, vector<1x8x128xf32>
    %654 = vector.shape_cast %653 : vector<1x8x128xf32> to vector<8x128xf32>
    %655 = vector.broadcast %652 : vector<1x128xf32> to vector<8x128xf32>
    %656 = arith.mulf %655, %654 : vector<8x128xf32>
    %c7_647 = arith.constant 7 : index
    %c3_648 = arith.constant 3 : index
    %c0_649 = arith.constant 0 : index
    %c0_650 = arith.constant 0 : index
    %657 = vector.load %arg4[%c7_647, %c3_648, %c0_649, %c0_650] : memref<9x8x8x128xf32, #tpu.memory_space<vmem>>, vector<1x1x8x128xf32>
    %658 = vector.shape_cast %657 : vector<1x1x8x128xf32> to vector<8x128xf32>
    %659 = vector.shape_cast %656 : vector<8x128xf32> to vector<1x1x8x128xf32>
    tpu.vector_store %arg4[%c7_647, %c3_648, %c0_649, %c0_650], %659 {strides = array<i32>} : memref<9x8x8x128xf32, #tpu.memory_space<vmem>>, vector<1x1x8x128xf32>,
    %c0_651 = arith.constant 0 : index
    %c4_652 = arith.constant 4 : index
    %c0_653 = arith.constant 0 : index
    %660 = vector.load %arg2[%c0_651, %c4_652, %c0_653] : memref<1x8x128xf32, #tpu.memory_space<vmem>>, vector<1x1x128xf32>
    %661 = vector.shape_cast %660 : vector<1x1x128xf32> to vector<1x128xf32>
    %cst_654 = arith.constant 1.000000e+00 : f32
    %662 = vector.broadcast %cst_654 : f32 to vector<1x128xf32>
    %663 = arith.mulf %662, %661 : vector<1x128xf32>
    %c7_655 = arith.constant 7 : index
    %c0_656 = arith.constant 0 : index
    %c0_657 = arith.constant 0 : index
    %664 = vector.load %arg3[%c7_655, %c0_656, %c0_657] : memref<9x8x128xf32, #tpu.memory_space<vmem>>, vector<1x8x128xf32>
    %665 = vector.shape_cast %664 : vector<1x8x128xf32> to vector<8x128xf32>
    %666 = vector.broadcast %663 : vector<1x128xf32> to vector<8x128xf32>
    %667 = arith.mulf %666, %665 : vector<8x128xf32>
    %c7_658 = arith.constant 7 : index
    %c4_659 = arith.constant 4 : index
    %c0_660 = arith.constant 0 : index
    %c0_661 = arith.constant 0 : index
    %668 = vector.load %arg4[%c7_658, %c4_659, %c0_660, %c0_661] : memref<9x8x8x128xf32, #tpu.memory_space<vmem>>, vector<1x1x8x128xf32>
    %669 = vector.shape_cast %668 : vector<1x1x8x128xf32> to vector<8x128xf32>
    %670 = vector.shape_cast %667 : vector<8x128xf32> to vector<1x1x8x128xf32>
    tpu.vector_store %arg4[%c7_658, %c4_659, %c0_660, %c0_661], %670 {strides = array<i32>} : memref<9x8x8x128xf32, #tpu.memory_space<vmem>>, vector<1x1x8x128xf32>,
    %c0_662 = arith.constant 0 : index
    %c5_663 = arith.constant 5 : index
    %c0_664 = arith.constant 0 : index
    %671 = vector.load %arg2[%c0_662, %c5_663, %c0_664] : memref<1x8x128xf32, #tpu.memory_space<vmem>>, vector<1x1x128xf32>
    %672 = vector.shape_cast %671 : vector<1x1x128xf32> to vector<1x128xf32>
    %cst_665 = arith.constant 1.000000e+00 : f32
    %673 = vector.broadcast %cst_665 : f32 to vector<1x128xf32>
    %674 = arith.mulf %673, %672 : vector<1x128xf32>
    %c7_666 = arith.constant 7 : index
    %c0_667 = arith.constant 0 : index
    %c0_668 = arith.constant 0 : index
    %675 = vector.load %arg3[%c7_666, %c0_667, %c0_668] : memref<9x8x128xf32, #tpu.memory_space<vmem>>, vector<1x8x128xf32>
    %676 = vector.shape_cast %675 : vector<1x8x128xf32> to vector<8x128xf32>
    %677 = vector.broadcast %674 : vector<1x128xf32> to vector<8x128xf32>
    %678 = arith.mulf %677, %676 : vector<8x128xf32>
    %c7_669 = arith.constant 7 : index
    %c5_670 = arith.constant 5 : index
    %c0_671 = arith.constant 0 : index
    %c0_672 = arith.constant 0 : index
    %679 = vector.load %arg4[%c7_669, %c5_670, %c0_671, %c0_672] : memref<9x8x8x128xf32, #tpu.memory_space<vmem>>, vector<1x1x8x128xf32>
    %680 = vector.shape_cast %679 : vector<1x1x8x128xf32> to vector<8x128xf32>
    %681 = vector.shape_cast %678 : vector<8x128xf32> to vector<1x1x8x128xf32>
    tpu.vector_store %arg4[%c7_669, %c5_670, %c0_671, %c0_672], %681 {strides = array<i32>} : memref<9x8x8x128xf32, #tpu.memory_space<vmem>>, vector<1x1x8x128xf32>,
    %c0_673 = arith.constant 0 : index
    %c6_674 = arith.constant 6 : index
    %c0_675 = arith.constant 0 : index
    %682 = vector.load %arg2[%c0_673, %c6_674, %c0_675] : memref<1x8x128xf32, #tpu.memory_space<vmem>>, vector<1x1x128xf32>
    %683 = vector.shape_cast %682 : vector<1x1x128xf32> to vector<1x128xf32>
    %cst_676 = arith.constant 1.000000e+00 : f32
    %684 = vector.broadcast %cst_676 : f32 to vector<1x128xf32>
    %685 = arith.mulf %684, %683 : vector<1x128xf32>
    %c7_677 = arith.constant 7 : index
    %c0_678 = arith.constant 0 : index
    %c0_679 = arith.constant 0 : index
    %686 = vector.load %arg3[%c7_677, %c0_678, %c0_679] : memref<9x8x128xf32, #tpu.memory_space<vmem>>, vector<1x8x128xf32>
    %687 = vector.shape_cast %686 : vector<1x8x128xf32> to vector<8x128xf32>
    %688 = vector.broadcast %685 : vector<1x128xf32> to vector<8x128xf32>
    %689 = arith.mulf %688, %687 : vector<8x128xf32>
    %c7_680 = arith.constant 7 : index
    %c6_681 = arith.constant 6 : index
    %c0_682 = arith.constant 0 : index
    %c0_683 = arith.constant 0 : index
    %690 = vector.load %arg4[%c7_680, %c6_681, %c0_682, %c0_683] : memref<9x8x8x128xf32, #tpu.memory_space<vmem>>, vector<1x1x8x128xf32>
    %691 = vector.shape_cast %690 : vector<1x1x8x128xf32> to vector<8x128xf32>
    %692 = vector.shape_cast %689 : vector<8x128xf32> to vector<1x1x8x128xf32>
    tpu.vector_store %arg4[%c7_680, %c6_681, %c0_682, %c0_683], %692 {strides = array<i32>} : memref<9x8x8x128xf32, #tpu.memory_space<vmem>>, vector<1x1x8x128xf32>,
    %c0_684 = arith.constant 0 : index
    %c7_685 = arith.constant 7 : index
    %c0_686 = arith.constant 0 : index
    %693 = vector.load %arg2[%c0_684, %c7_685, %c0_686] : memref<1x8x128xf32, #tpu.memory_space<vmem>>, vector<1x1x128xf32>
    %694 = vector.shape_cast %693 : vector<1x1x128xf32> to vector<1x128xf32>
    %cst_687 = arith.constant 1.000000e+00 : f32
    %695 = vector.broadcast %cst_687 : f32 to vector<1x128xf32>
    %696 = arith.mulf %695, %694 : vector<1x128xf32>
    %c7_688 = arith.constant 7 : index
    %c0_689 = arith.constant 0 : index
    %c0_690 = arith.constant 0 : index
    %697 = vector.load %arg3[%c7_688, %c0_689, %c0_690] : memref<9x8x128xf32, #tpu.memory_space<vmem>>, vector<1x8x128xf32>
    %698 = vector.shape_cast %697 : vector<1x8x128xf32> to vector<8x128xf32>
    %699 = vector.broadcast %696 : vector<1x128xf32> to vector<8x128xf32>
    %700 = arith.mulf %699, %698 : vector<8x128xf32>
    %c7_691 = arith.constant 7 : index
    %c7_692 = arith.constant 7 : index
    %c0_693 = arith.constant 0 : index
    %c0_694 = arith.constant 0 : index
    %701 = vector.load %arg4[%c7_691, %c7_692, %c0_693, %c0_694] : memref<9x8x8x128xf32, #tpu.memory_space<vmem>>, vector<1x1x8x128xf32>
    %702 = vector.shape_cast %701 : vector<1x1x8x128xf32> to vector<8x128xf32>
    %703 = vector.shape_cast %700 : vector<8x128xf32> to vector<1x1x8x128xf32>
    tpu.vector_store %arg4[%c7_691, %c7_692, %c0_693, %c0_694], %703 {strides = array<i32>} : memref<9x8x8x128xf32, #tpu.memory_space<vmem>>, vector<1x1x8x128xf32>,
    %c0_695 = arith.constant 0 : index
    %c0_696 = arith.constant 0 : index
    %c0_697 = arith.constant 0 : index
    %704 = vector.load %arg2[%c0_695, %c0_696, %c0_697] : memref<1x8x128xf32, #tpu.memory_space<vmem>>, vector<1x1x128xf32>
    %705 = vector.shape_cast %704 : vector<1x1x128xf32> to vector<1x128xf32>
    %cst_698 = arith.constant 1.000000e+00 : f32
    %706 = vector.broadcast %cst_698 : f32 to vector<1x128xf32>
    %707 = arith.mulf %706, %705 : vector<1x128xf32>
    %c8 = arith.constant 8 : index
    %c0_699 = arith.constant 0 : index
    %c0_700 = arith.constant 0 : index
    %708 = vector.load %arg3[%c8, %c0_699, %c0_700] : memref<9x8x128xf32, #tpu.memory_space<vmem>>, vector<1x8x128xf32>
    %709 = vector.shape_cast %708 : vector<1x8x128xf32> to vector<8x128xf32>
    %710 = vector.broadcast %707 : vector<1x128xf32> to vector<8x128xf32>
    %711 = arith.mulf %710, %709 : vector<8x128xf32>
    %c8_701 = arith.constant 8 : index
    %c0_702 = arith.constant 0 : index
    %c0_703 = arith.constant 0 : index
    %c0_704 = arith.constant 0 : index
    %712 = vector.load %arg4[%c8_701, %c0_702, %c0_703, %c0_704] : memref<9x8x8x128xf32, #tpu.memory_space<vmem>>, vector<1x1x8x128xf32>
    %713 = vector.shape_cast %712 : vector<1x1x8x128xf32> to vector<8x128xf32>
    %714 = vector.shape_cast %711 : vector<8x128xf32> to vector<1x1x8x128xf32>
    tpu.vector_store %arg4[%c8_701, %c0_702, %c0_703, %c0_704], %714 {strides = array<i32>} : memref<9x8x8x128xf32, #tpu.memory_space<vmem>>, vector<1x1x8x128xf32>,
    %c0_705 = arith.constant 0 : index
    %c1_706 = arith.constant 1 : index
    %c0_707 = arith.constant 0 : index
    %715 = vector.load %arg2[%c0_705, %c1_706, %c0_707] : memref<1x8x128xf32, #tpu.memory_space<vmem>>, vector<1x1x128xf32>
    %716 = vector.shape_cast %715 : vector<1x1x128xf32> to vector<1x128xf32>
    %cst_708 = arith.constant 1.000000e+00 : f32
    %717 = vector.broadcast %cst_708 : f32 to vector<1x128xf32>
    %718 = arith.mulf %717, %716 : vector<1x128xf32>
    %c8_709 = arith.constant 8 : index
    %c0_710 = arith.constant 0 : index
    %c0_711 = arith.constant 0 : index
    %719 = vector.load %arg3[%c8_709, %c0_710, %c0_711] : memref<9x8x128xf32, #tpu.memory_space<vmem>>, vector<1x8x128xf32>
    %720 = vector.shape_cast %719 : vector<1x8x128xf32> to vector<8x128xf32>
    %721 = vector.broadcast %718 : vector<1x128xf32> to vector<8x128xf32>
    %722 = arith.mulf %721, %720 : vector<8x128xf32>
    %c8_712 = arith.constant 8 : index
    %c1_713 = arith.constant 1 : index
    %c0_714 = arith.constant 0 : index
    %c0_715 = arith.constant 0 : index
    %723 = vector.load %arg4[%c8_712, %c1_713, %c0_714, %c0_715] : memref<9x8x8x128xf32, #tpu.memory_space<vmem>>, vector<1x1x8x128xf32>
    %724 = vector.shape_cast %723 : vector<1x1x8x128xf32> to vector<8x128xf32>
    %725 = vector.shape_cast %722 : vector<8x128xf32> to vector<1x1x8x128xf32>
    tpu.vector_store %arg4[%c8_712, %c1_713, %c0_714, %c0_715], %725 {strides = array<i32>} : memref<9x8x8x128xf32, #tpu.memory_space<vmem>>, vector<1x1x8x128xf32>,
    %c0_716 = arith.constant 0 : index
    %c2_717 = arith.constant 2 : index
    %c0_718 = arith.constant 0 : index
    %726 = vector.load %arg2[%c0_716, %c2_717, %c0_718] : memref<1x8x128xf32, #tpu.memory_space<vmem>>, vector<1x1x128xf32>
    %727 = vector.shape_cast %726 : vector<1x1x128xf32> to vector<1x128xf32>
    %cst_719 = arith.constant 1.000000e+00 : f32
    %728 = vector.broadcast %cst_719 : f32 to vector<1x128xf32>
    %729 = arith.mulf %728, %727 : vector<1x128xf32>
    %c8_720 = arith.constant 8 : index
    %c0_721 = arith.constant 0 : index
    %c0_722 = arith.constant 0 : index
    %730 = vector.load %arg3[%c8_720, %c0_721, %c0_722] : memref<9x8x128xf32, #tpu.memory_space<vmem>>, vector<1x8x128xf32>
    %731 = vector.shape_cast %730 : vector<1x8x128xf32> to vector<8x128xf32>
    %732 = vector.broadcast %729 : vector<1x128xf32> to vector<8x128xf32>
    %733 = arith.mulf %732, %731 : vector<8x128xf32>
    %c8_723 = arith.constant 8 : index
    %c2_724 = arith.constant 2 : index
    %c0_725 = arith.constant 0 : index
    %c0_726 = arith.constant 0 : index
    %734 = vector.load %arg4[%c8_723, %c2_724, %c0_725, %c0_726] : memref<9x8x8x128xf32, #tpu.memory_space<vmem>>, vector<1x1x8x128xf32>
    %735 = vector.shape_cast %734 : vector<1x1x8x128xf32> to vector<8x128xf32>
    %736 = vector.shape_cast %733 : vector<8x128xf32> to vector<1x1x8x128xf32>
    tpu.vector_store %arg4[%c8_723, %c2_724, %c0_725, %c0_726], %736 {strides = array<i32>} : memref<9x8x8x128xf32, #tpu.memory_space<vmem>>, vector<1x1x8x128xf32>,
    %c0_727 = arith.constant 0 : index
    %c3_728 = arith.constant 3 : index
    %c0_729 = arith.constant 0 : index
    %737 = vector.load %arg2[%c0_727, %c3_728, %c0_729] : memref<1x8x128xf32, #tpu.memory_space<vmem>>, vector<1x1x128xf32>
    %738 = vector.shape_cast %737 : vector<1x1x128xf32> to vector<1x128xf32>
    %cst_730 = arith.constant 1.000000e+00 : f32
    %739 = vector.broadcast %cst_730 : f32 to vector<1x128xf32>
    %740 = arith.mulf %739, %738 : vector<1x128xf32>
    %c8_731 = arith.constant 8 : index
    %c0_732 = arith.constant 0 : index
    %c0_733 = arith.constant 0 : index
    %741 = vector.load %arg3[%c8_731, %c0_732, %c0_733] : memref<9x8x128xf32, #tpu.memory_space<vmem>>, vector<1x8x128xf32>
    %742 = vector.shape_cast %741 : vector<1x8x128xf32> to vector<8x128xf32>
    %743 = vector.broadcast %740 : vector<1x128xf32> to vector<8x128xf32>
    %744 = arith.mulf %743, %742 : vector<8x128xf32>
    %c8_734 = arith.constant 8 : index
    %c3_735 = arith.constant 3 : index
    %c0_736 = arith.constant 0 : index
    %c0_737 = arith.constant 0 : index
    %745 = vector.load %arg4[%c8_734, %c3_735, %c0_736, %c0_737] : memref<9x8x8x128xf32, #tpu.memory_space<vmem>>, vector<1x1x8x128xf32>
    %746 = vector.shape_cast %745 : vector<1x1x8x128xf32> to vector<8x128xf32>
    %747 = vector.shape_cast %744 : vector<8x128xf32> to vector<1x1x8x128xf32>
    tpu.vector_store %arg4[%c8_734, %c3_735, %c0_736, %c0_737], %747 {strides = array<i32>} : memref<9x8x8x128xf32, #tpu.memory_space<vmem>>, vector<1x1x8x128xf32>,
    %c0_738 = arith.constant 0 : index
    %c4_739 = arith.constant 4 : index
    %c0_740 = arith.constant 0 : index
    %748 = vector.load %arg2[%c0_738, %c4_739, %c0_740] : memref<1x8x128xf32, #tpu.memory_space<vmem>>, vector<1x1x128xf32>
    %749 = vector.shape_cast %748 : vector<1x1x128xf32> to vector<1x128xf32>
    %cst_741 = arith.constant 1.000000e+00 : f32
    %750 = vector.broadcast %cst_741 : f32 to vector<1x128xf32>
    %751 = arith.mulf %750, %749 : vector<1x128xf32>
    %c8_742 = arith.constant 8 : index
    %c0_743 = arith.constant 0 : index
    %c0_744 = arith.constant 0 : index
    %752 = vector.load %arg3[%c8_742, %c0_743, %c0_744] : memref<9x8x128xf32, #tpu.memory_space<vmem>>, vector<1x8x128xf32>
    %753 = vector.shape_cast %752 : vector<1x8x128xf32> to vector<8x128xf32>
    %754 = vector.broadcast %751 : vector<1x128xf32> to vector<8x128xf32>
    %755 = arith.mulf %754, %753 : vector<8x128xf32>
    %c8_745 = arith.constant 8 : index
    %c4_746 = arith.constant 4 : index
    %c0_747 = arith.constant 0 : index
    %c0_748 = arith.constant 0 : index
    %756 = vector.load %arg4[%c8_745, %c4_746, %c0_747, %c0_748] : memref<9x8x8x128xf32, #tpu.memory_space<vmem>>, vector<1x1x8x128xf32>
    %757 = vector.shape_cast %756 : vector<1x1x8x128xf32> to vector<8x128xf32>
    %758 = vector.shape_cast %755 : vector<8x128xf32> to vector<1x1x8x128xf32>
    tpu.vector_store %arg4[%c8_745, %c4_746, %c0_747, %c0_748], %758 {strides = array<i32>} : memref<9x8x8x128xf32, #tpu.memory_space<vmem>>, vector<1x1x8x128xf32>,
    %c0_749 = arith.constant 0 : index
    %c5_750 = arith.constant 5 : index
    %c0_751 = arith.constant 0 : index
    %759 = vector.load %arg2[%c0_749, %c5_750, %c0_751] : memref<1x8x128xf32, #tpu.memory_space<vmem>>, vector<1x1x128xf32>
    %760 = vector.shape_cast %759 : vector<1x1x128xf32> to vector<1x128xf32>
    %cst_752 = arith.constant 1.000000e+00 : f32
    %761 = vector.broadcast %cst_752 : f32 to vector<1x128xf32>
    %762 = arith.mulf %761, %760 : vector<1x128xf32>
    %c8_753 = arith.constant 8 : index
    %c0_754 = arith.constant 0 : index
    %c0_755 = arith.constant 0 : index
    %763 = vector.load %arg3[%c8_753, %c0_754, %c0_755] : memref<9x8x128xf32, #tpu.memory_space<vmem>>, vector<1x8x128xf32>
    %764 = vector.shape_cast %763 : vector<1x8x128xf32> to vector<8x128xf32>
    %765 = vector.broadcast %762 : vector<1x128xf32> to vector<8x128xf32>
    %766 = arith.mulf %765, %764 : vector<8x128xf32>
    %c8_756 = arith.constant 8 : index
    %c5_757 = arith.constant 5 : index
    %c0_758 = arith.constant 0 : index
    %c0_759 = arith.constant 0 : index
    %767 = vector.load %arg4[%c8_756, %c5_757, %c0_758, %c0_759] : memref<9x8x8x128xf32, #tpu.memory_space<vmem>>, vector<1x1x8x128xf32>
    %768 = vector.shape_cast %767 : vector<1x1x8x128xf32> to vector<8x128xf32>
    %769 = vector.shape_cast %766 : vector<8x128xf32> to vector<1x1x8x128xf32>
    tpu.vector_store %arg4[%c8_756, %c5_757, %c0_758, %c0_759], %769 {strides = array<i32>} : memref<9x8x8x128xf32, #tpu.memory_space<vmem>>, vector<1x1x8x128xf32>,
    %c0_760 = arith.constant 0 : index
    %c6_761 = arith.constant 6 : index
    %c0_762 = arith.constant 0 : index
    %770 = vector.load %arg2[%c0_760, %c6_761, %c0_762] : memref<1x8x128xf32, #tpu.memory_space<vmem>>, vector<1x1x128xf32>
    %771 = vector.shape_cast %770 : vector<1x1x128xf32> to vector<1x128xf32>
    %cst_763 = arith.constant 1.000000e+00 : f32
    %772 = vector.broadcast %cst_763 : f32 to vector<1x128xf32>
    %773 = arith.mulf %772, %771 : vector<1x128xf32>
    %c8_764 = arith.constant 8 : index
    %c0_765 = arith.constant 0 : index
    %c0_766 = arith.constant 0 : index
    %774 = vector.load %arg3[%c8_764, %c0_765, %c0_766] : memref<9x8x128xf32, #tpu.memory_space<vmem>>, vector<1x8x128xf32>
    %775 = vector.shape_cast %774 : vector<1x8x128xf32> to vector<8x128xf32>
    %776 = vector.broadcast %773 : vector<1x128xf32> to vector<8x128xf32>
    %777 = arith.mulf %776, %775 : vector<8x128xf32>
    %c8_767 = arith.constant 8 : index
    %c6_768 = arith.constant 6 : index
    %c0_769 = arith.constant 0 : index
    %c0_770 = arith.constant 0 : index
    %778 = vector.load %arg4[%c8_767, %c6_768, %c0_769, %c0_770] : memref<9x8x8x128xf32, #tpu.memory_space<vmem>>, vector<1x1x8x128xf32>
    %779 = vector.shape_cast %778 : vector<1x1x8x128xf32> to vector<8x128xf32>
    %780 = vector.shape_cast %777 : vector<8x128xf32> to vector<1x1x8x128xf32>
    tpu.vector_store %arg4[%c8_767, %c6_768, %c0_769, %c0_770], %780 {strides = array<i32>} : memref<9x8x8x128xf32, #tpu.memory_space<vmem>>, vector<1x1x8x128xf32>,
    %c0_771 = arith.constant 0 : index
    %c7_772 = arith.constant 7 : index
    %c0_773 = arith.constant 0 : index
    %781 = vector.load %arg2[%c0_771, %c7_772, %c0_773] : memref<1x8x128xf32, #tpu.memory_space<vmem>>, vector<1x1x128xf32>
    %782 = vector.shape_cast %781 : vector<1x1x128xf32> to vector<1x128xf32>
    %cst_774 = arith.constant 1.000000e+00 : f32
    %783 = vector.broadcast %cst_774 : f32 to vector<1x128xf32>
    %784 = arith.mulf %783, %782 : vector<1x128xf32>
    %c8_775 = arith.constant 8 : index
    %c0_776 = arith.constant 0 : index
    %c0_777 = arith.constant 0 : index
    %785 = vector.load %arg3[%c8_775, %c0_776, %c0_777] : memref<9x8x128xf32, #tpu.memory_space<vmem>>, vector<1x8x128xf32>
    %786 = vector.shape_cast %785 : vector<1x8x128xf32> to vector<8x128xf32>
    %787 = vector.broadcast %784 : vector<1x128xf32> to vector<8x128xf32>
    %788 = arith.mulf %787, %786 : vector<8x128xf32>
    %c8_778 = arith.constant 8 : index
    %c7_779 = arith.constant 7 : index
    %c0_780 = arith.constant 0 : index
    %c0_781 = arith.constant 0 : index
    %789 = vector.load %arg4[%c8_778, %c7_779, %c0_780, %c0_781] : memref<9x8x8x128xf32, #tpu.memory_space<vmem>>, vector<1x1x8x128xf32>
    %790 = vector.shape_cast %789 : vector<1x1x8x128xf32> to vector<8x128xf32>
    %791 = vector.shape_cast %788 : vector<8x128xf32> to vector<1x1x8x128xf32>
    tpu.vector_store %arg4[%c8_778, %c7_779, %c0_780, %c0_781], %791 {strides = array<i32>} : memref<9x8x8x128xf32, #tpu.memory_space<vmem>>, vector<1x1x8x128xf32>,
    return
  }
  func.func @transform_0(%arg0: i32, %arg1: i32) -> (i32, i32, i32) {
    %c0_i32 = arith.constant 0 : i32
    %c0_i32_0 = arith.constant 0 : i32
    %c0_i32_1 = arith.constant 0 : i32
    return %c0_i32, %c0_i32_0, %arg0 : i32, i32, i32
  }
  func.func @transform_1(%arg0: i32, %arg1: i32) -> (i32, i32, i32) {
    %c0_i32 = arith.constant 0 : i32
    %c0_i32_0 = arith.constant 0 : i32
    return %c0_i32, %arg1, %arg0 : i32, i32, i32
  }
  func.func @transform_2(%arg0: i32, %arg1: i32) -> (i32, i32, i32, i32) {
    %c0_i32 = arith.constant 0 : i32
    %c0_i32_0 = arith.constant 0 : i32
    %c0_i32_1 = arith.constant 0 : i32
    return %c0_i32, %c0_i32_0, %arg1, %arg0 : i32, i32, i32, i32
  }
}

</mosaic_0001>

<llo_original>
// kernel: tpu_custom_call.1
$region0: #{tpu_custom_call.1}
  #allocation0 [shape = 'u32[]', space=smem, size = 0x4, offset = 0x4, fixed_abs, tag = 'smem constant byte address 0x4 - core index']
  #allocation1 [shape = 'u32[144,128]{1,0:T(1,128)}', space=vmem, size = 0x12000, scoped, tag = 'internal scratch']
  %s0 = inlined_call_operand.hbm [shape: f32[1,8,128], index: 0, kind: input, shape index: {}]
  %s1 = inlined_call_operand.hbm [shape: f32[9,8,128], index: 1, kind: input, shape index: {}]
  %s2 = inlined_call_operand.hbm [shape: f32[9,8,8,128], index: 2, kind: output, shape index: {}]
  %s3 = sld [smem:[#allocation0]]
  $region26: #{tpu_custom_call.1} parent=0
    _
  %s5 = ssub.s32 1, %s3
  %s6 = scalar_select 0, %s5, %s3
  $region1: #{tpu_custom_call.1} parent=0
    #allocation2 [shape = 'u8[4096]{0}', space=vmem, size = 0x1000, scoped, tag = 'input window, operand 0, single buffered']
    #allocation3 [shape = 's32[1]{0}', space=sflag, size = 0x4, scoped, tag = 'scoped memory for tpu_custom_call.1']
    #allocation4 [shape = 's32[1]{0}', space=sflag, size = 0x4, scoped, tag = 'scoped memory for tpu_custom_call.1']
    #allocation5 [shape = 'u8[36864]{0}', space=vmem, size = 0x9000, scoped, tag = 'input window, operand 1, single buffered']
    #allocation6 [shape = 's32[1]{0}', space=sflag, size = 0x4, scoped, tag = 'scoped memory for tpu_custom_call.1']
    #allocation7 [shape = 'u8[294912]{0}', space=vmem, size = 0x48000, scoped, tag = 'output window, operand 0, single buffered']
    %7 = vsyncpa [#allocation3], 0
    %8 = vsyncpa [#allocation6], 0
    %9 = vsyncpa [#allocation4], 0
    // Predicated region
    $region2: #{tpu_custom_call.1} parent=1 // pred_check
      _
    $region3: #{tpu_custom_call.1} parent=1 // pred_check_branch
      %11 = sbr.rel (0) target = $region5
    $region4: #{tpu_custom_call.1} parent=1 // pred_region
      %s13 = ssub.s32 128, 128
      %14 = vsyncadd [#allocation3], %s13
      %s16 = sshll.u32 [#allocation2], 4
      %s17 = int_to_ptr.vmem [resolvable:$true] %s16
      %19 = dma.hbm_to_vmem [thread:$0]  %s0, 128, %s17, [#allocation3]
    $region5: #{tpu_custom_call.1} parent=1 // pred_fallthru
      _
    // Predicated region
    $region6: #{tpu_custom_call.1} parent=1 // pred_check
      _
    $region7: #{tpu_custom_call.1} parent=1 // pred_check_branch
      %21 = sbr.rel (0) target = $region9
    $region8: #{tpu_custom_call.1} parent=1 // pred_region
      %s23 = ssub.s32 1152, 1152
      %24 = vsyncadd [#allocation6], %s23
      %s25 = sshll.u32 [#allocation5], 4
      %s26 = int_to_ptr.vmem [resolvable:$true] %s25
      %31 = dma.hbm_to_vmem [thread:$0]  %s1, 1152, %s26, [#allocation6], 128, 128, 8
    $region9: #{tpu_custom_call.1} parent=1 // pred_fallthru
      _
    // Predicated region
    $region10: #{tpu_custom_call.1} parent=1 // pred_check
      _
    $region11: #{tpu_custom_call.1} parent=1 // pred_check_branch
      %33 = sbr.rel (0) target = $region13
    $region12: #{tpu_custom_call.1} parent=1 // pred_region
      %34 = dma.done [#allocation3], 128
    $region13: #{tpu_custom_call.1} parent=1 // pred_fallthru
      _
    // Predicated region
    $region14: #{tpu_custom_call.1} parent=1 // pred_check
      _
    $region15: #{tpu_custom_call.1} parent=1 // pred_check_branch
      %36 = sbr.rel (0) target = $region17
    $region16: #{tpu_custom_call.1} parent=1 // pred_region
      %37 = dma.done [#allocation6], 1152
    $region17: #{tpu_custom_call.1} parent=1 // pred_fallthru
      _
    %v38 = vld [vmem:[#allocation2] sm:$0x1]
    %v39 = vld [vmem:[#allocation5] sm:$0xff]
    %v40 = vlaneseq
    %v41 = vshrl.u32 %v40, 7
    %v42 = vsub.s32 0, %v41
    %v43 = vrot.slane %v38, %v42
    %v44 = vmul.f32 %v43, %v39
    %45 = vst [vmem:[#allocation7] sm:$0xff] %v44
    %v46 = vld [vmem:[#allocation2 + $0x1] sm:$0x1]
    %v47 = vld [vmem:[#allocation5] sm:$0xff]
    %v48 = vlaneseq
    %v49 = vshrl.u32 %v48, 7
    %v50 = vsub.s32 0, %v49
    %v51 = vrot.slane %v46, %v50
    %v52 = vmul.f32 %v51, %v47
    %s53 = scalar_lea.vmem [#allocation7], 8
    %54 = vst [vmem:[%s53] sm:$0xff] %v52
    %v55 = vld [vmem:[#allocation2 + $0x2] sm:$0x1]
    %v56 = vld [vmem:[#allocation5] sm:$0xff]
    %v57 = vlaneseq
    %v58 = vshrl.u32 %v57, 7
    %v59 = vsub.s32 0, %v58
    %v60 = vrot.slane %v55, %v59
    %v61 = vmul.f32 %v60, %v56
    %s62 = scalar_lea.vmem [#allocation7], 16
    %63 = vst [vmem:[%s62] sm:$0xff] %v61
    %v64 = vld [vmem:[#allocation2 + $0x3] sm:$0x1]
    %v65 = vld [vmem:[#allocation5] sm:$0xff]
    %v66 = vlaneseq
    %v67 = vshrl.u32 %v66, 7
    %v68 = vsub.s32 0, %v67
    %v69 = vrot.slane %v64, %v68
    %v70 = vmul.f32 %v69, %v65
    %s71 = scalar_lea.vmem [#allocation7], 24
    %72 = vst [vmem:[%s71] sm:$0xff] %v70
    %v73 = vld [vmem:[#allocation2 + $0x4] sm:$0x1]
    %v74 = vld [vmem:[#allocation5] sm:$0xff]
    %v75 = vlaneseq
    %v76 = vshrl.u32 %v75, 7
    %v77 = vsub.s32 0, %v76
    %v78 = vrot.slane %v73, %v77
    %v79 = vmul.f32 %v78, %v74
    %s80 = scalar_lea.vmem [#allocation7], 32
    %81 = vst [vmem:[%s80] sm:$0xff] %v79
    %v82 = vld [vmem:[#allocation2 + $0x5] sm:$0x1]
    %v83 = vld [vmem:[#allocation5] sm:$0xff]
    %v84 = vlaneseq
    %v85 = vshrl.u32 %v84, 7
    %v86 = vsub.s32 0, %v85
    %v87 = vrot.slane %v82, %v86
    %v88 = vmul.f32 %v87, %v83
    %s89 = scalar_lea.vmem [#allocation7], 40
    %90 = vst [vmem:[%s89] sm:$0xff] %v88
    %v91 = vld [vmem:[#allocation2 + $0x6] sm:$0x1]
    %v92 = vld [vmem:[#allocation5] sm:$0xff]
    %v93 = vlaneseq
    %v94 = vshrl.u32 %v93, 7
    %v95 = vsub.s32 0, %v94
    %v96 = vrot.slane %v91, %v95
    %v97 = vmul.f32 %v96, %v92
    %s98 = scalar_lea.vmem [#allocation7], 48
    %99 = vst [vmem:[%s98] sm:$0xff] %v97
    %v100 = vld [vmem:[#allocation2 + $0x7] sm:$0x1]
    %v101 = vld [vmem:[#allocation5] sm:$0xff]
    %v102 = vlaneseq
    %v103 = vshrl.u32 %v102, 7
    %v104 = vsub.s32 0, %v103
    %v105 = vrot.slane %v100, %v104
    %v106 = vmul.f32 %v105, %v101
    %s107 = scalar_lea.vmem [#allocation7], 56
    %108 = vst [vmem:[%s107] sm:$0xff] %v106
    %v109 = vld [vmem:[#allocation2] sm:$0x1]
    %s110 = scalar_lea.vmem [#allocation5], 8
    %v111 = vld [vmem:[%s110] sm:$0xff]
    %v112 = vlaneseq
    %v113 = vshrl.u32 %v112, 7
    %v114 = vsub.s32 0, %v113
    %v115 = vrot.slane %v109, %v114
    %v116 = vmul.f32 %v115, %v111
    %s117 = scalar_lea.vmem [#allocation7], 64
    %118 = vst [vmem:[%s117] sm:$0xff] %v116
    %v119 = vld [vmem:[#allocation2 + $0x1] sm:$0x1]
    %v120 = vld [vmem:[%s110] sm:$0xff]
    %v121 = vlaneseq
    %v122 = vshrl.u32 %v121, 7
    %v123 = vsub.s32 0, %v122
    %v124 = vrot.slane %v119, %v123
    %v125 = vmul.f32 %v124, %v120
    %s126 = scalar_lea.vmem [#allocation7], 72
    %127 = vst [vmem:[%s126] sm:$0xff] %v125
    %v128 = vld [vmem:[#allocation2 + $0x2] sm:$0x1]
    %v129 = vld [vmem:[%s110] sm:$0xff]
    %v130 = vlaneseq
    %v131 = vshrl.u32 %v130, 7
    %v132 = vsub.s32 0, %v131
    %v133 = vrot.slane %v128, %v132
    %v134 = vmul.f32 %v133, %v129
    %s135 = scalar_lea.vmem [#allocation7], 80
    %136 = vst [vmem:[%s135] sm:$0xff] %v134
    %v137 = vld [vmem:[#allocation2 + $0x3] sm:$0x1]
    %v138 = vld [vmem:[%s110] sm:$0xff]
    %v139 = vlaneseq
    %v140 = vshrl.u32 %v139, 7
    %v141 = vsub.s32 0, %v140
    %v142 = vrot.slane %v137, %v141
    %v143 = vmul.f32 %v142, %v138
    %s144 = scalar_lea.vmem [#allocation7], 88
    %145 = vst [vmem:[%s144] sm:$0xff] %v143
    %v146 = vld [vmem:[#allocation2 + $0x4] sm:$0x1]
    %v147 = vld [vmem:[%s110] sm:$0xff]
    %v148 = vlaneseq
    %v149 = vshrl.u32 %v148, 7
    %v150 = vsub.s32 0, %v149
    %v151 = vrot.slane %v146, %v150
    %v152 = vmul.f32 %v151, %v147
    %s153 = scalar_lea.vmem [#allocation7], 96
    %154 = vst [vmem:[%s153] sm:$0xff] %v152
    %v155 = vld [vmem:[#allocation2 + $0x5] sm:$0x1]
    %v156 = vld [vmem:[%s110] sm:$0xff]
    %v157 = vlaneseq
    %v158 = vshrl.u32 %v157, 7
    %v159 = vsub.s32 0, %v158
    %v160 = vrot.slane %v155, %v159
    %v161 = vmul.f32 %v160, %v156
    %s162 = scalar_lea.vmem [#allocation7], 104
    %163 = vst [vmem:[%s162] sm:$0xff] %v161
    %v164 = vld [vmem:[#allocation2 + $0x6] sm:$0x1]
    %v165 = vld [vmem:[%s110] sm:$0xff]
    %v166 = vlaneseq
    %v167 = vshrl.u32 %v166, 7
    %v168 = vsub.s32 0, %v167
    %v169 = vrot.slane %v164, %v168
    %v170 = vmul.f32 %v169, %v165
    %s171 = scalar_lea.vmem [#allocation7], 112
    %172 = vst [vmem:[%s171] sm:$0xff] %v170
    %v173 = vld [vmem:[#allocation2 + $0x7] sm:$0x1]
    %v174 = vld [vmem:[%s110] sm:$0xff]
    %v175 = vlaneseq
    %v176 = vshrl.u32 %v175, 7
    %v177 = vsub.s32 0, %v176
    %v178 = vrot.slane %v173, %v177
    %v179 = vmul.f32 %v178, %v174
    %s180 = scalar_lea.vmem [#allocation7], 120
    %181 = vst [vmem:[%s180] sm:$0xff] %v179
    %v182 = vld [vmem:[#allocation2] sm:$0x1]
    %s183 = scalar_lea.vmem [#allocation5], 16
    %v184 = vld [vmem:[%s183] sm:$0xff]
    %v185 = vlaneseq
    %v186 = vshrl.u32 %v185, 7
    %v187 = vsub.s32 0, %v186
    %v188 = vrot.slane %v182, %v187
    %v189 = vmul.f32 %v188, %v184
    %s190 = scalar_lea.vmem [#allocation7], 128
    %191 = vst [vmem:[%s190] sm:$0xff] %v189
    %v192 = vld [vmem:[#allocation2 + $0x1] sm:$0x1]
    %v193 = vld [vmem:[%s183] sm:$0xff]
    %v194 = vlaneseq
    %v195 = vshrl.u32 %v194, 7
    %v196 = vsub.s32 0, %v195
    %v197 = vrot.slane %v192, %v196
    %v198 = vmul.f32 %v197, %v193
    %s199 = scalar_lea.vmem [#allocation7], 136
    %200 = vst [vmem:[%s199] sm:$0xff] %v198
    %v201 = vld [vmem:[#allocation2 + $0x2] sm:$0x1]
    %v202 = vld [vmem:[%s183] sm:$0xff]
    %v203 = vlaneseq
    %v204 = vshrl.u32 %v203, 7
    %v205 = vsub.s32 0, %v204
    %v206 = vrot.slane %v201, %v205
    %v207 = vmul.f32 %v206, %v202
    %s208 = scalar_lea.vmem [#allocation7], 144
    %209 = vst [vmem:[%s208] sm:$0xff] %v207
    %v210 = vld [vmem:[#allocation2 + $0x3] sm:$0x1]
    %v211 = vld [vmem:[%s183] sm:$0xff]
    %v212 = vlaneseq
    %v213 = vshrl.u32 %v212, 7
    %v214 = vsub.s32 0, %v213
    %v215 = vrot.slane %v210, %v214
    %v216 = vmul.f32 %v215, %v211
    %s217 = scalar_lea.vmem [#allocation7], 152
    %218 = vst [vmem:[%s217] sm:$0xff] %v216
    %v219 = vld [vmem:[#allocation2 + $0x4] sm:$0x1]
    %v220 = vld [vmem:[%s183] sm:$0xff]
    %v221 = vlaneseq
    %v222 = vshrl.u32 %v221, 7
    %v223 = vsub.s32 0, %v222
    %v224 = vrot.slane %v219, %v223
    %v225 = vmul.f32 %v224, %v220
    %s226 = scalar_lea.vmem [#allocation7], 160
    %227 = vst [vmem:[%s226] sm:$0xff] %v225
    %v228 = vld [vmem:[#allocation2 + $0x5] sm:$0x1]
    %v229 = vld [vmem:[%s183] sm:$0xff]
    %v230 = vlaneseq
    %v231 = vshrl.u32 %v230, 7
    %v232 = vsub.s32 0, %v231
    %v233 = vrot.slane %v228, %v232
    %v234 = vmul.f32 %v233, %v229
    %s235 = scalar_lea.vmem [#allocation7], 168
    %236 = vst [vmem:[%s235] sm:$0xff] %v234
    %v237 = vld [vmem:[#allocation2 + $0x6] sm:$0x1]
    %v238 = vld [vmem:[%s183] sm:$0xff]
    %v239 = vlaneseq
    %v240 = vshrl.u32 %v239, 7
    %v241 = vsub.s32 0, %v240
    %v242 = vrot.slane %v237, %v241
    %v243 = vmul.f32 %v242, %v238
    %s244 = scalar_lea.vmem [#allocation7], 176
    %245 = vst [vmem:[%s244] sm:$0xff] %v243
    %v246 = vld [vmem:[#allocation2 + $0x7] sm:$0x1]
    %v247 = vld [vmem:[%s183] sm:$0xff]
    %v248 = vlaneseq
    %v249 = vshrl.u32 %v248, 7
    %v250 = vsub.s32 0, %v249
    %v251 = vrot.slane %v246, %v250
    %v252 = vmul.f32 %v251, %v247
    %s253 = scalar_lea.vmem [#allocation7], 184
    %254 = vst [vmem:[%s253] sm:$0xff] %v252
    %v255 = vld [vmem:[#allocation2] sm:$0x1]
    %s256 = scalar_lea.vmem [#allocation5], 24
    %v257 = vld [vmem:[%s256] sm:$0xff]
    %v258 = vlaneseq
    %v259 = vshrl.u32 %v258, 7
    %v260 = vsub.s32 0, %v259
    %v261 = vrot.slane %v255, %v260
    %v262 = vmul.f32 %v261, %v257
    %s263 = scalar_lea.vmem [#allocation7], 192
    %264 = vst [vmem:[%s263] sm:$0xff] %v262
    %v265 = vld [vmem:[#allocation2 + $0x1] sm:$0x1]
    %v266 = vld [vmem:[%s256] sm:$0xff]
    %v267 = vlaneseq
    %v268 = vshrl.u32 %v267, 7
    %v269 = vsub.s32 0, %v268
    %v270 = vrot.slane %v265, %v269
    %v271 = vmul.f32 %v270, %v266
    %s272 = scalar_lea.vmem [#allocation7], 200
    %273 = vst [vmem:[%s272] sm:$0xff] %v271
    %v274 = vld [vmem:[#allocation2 + $0x2] sm:$0x1]
    %v275 = vld [vmem:[%s256] sm:$0xff]
    %v276 = vlaneseq
    %v277 = vshrl.u32 %v276, 7
    %v278 = vsub.s32 0, %v277
    %v279 = vrot.slane %v274, %v278
    %v280 = vmul.f32 %v279, %v275
    %s281 = scalar_lea.vmem [#allocation7], 208
    %282 = vst [vmem:[%s281] sm:$0xff] %v280
    %v283 = vld [vmem:[#allocation2 + $0x3] sm:$0x1]
    %v284 = vld [vmem:[%s256] sm:$0xff]
    %v285 = vlaneseq
    %v286 = vshrl.u32 %v285, 7
    %v287 = vsub.s32 0, %v286
    %v288 = vrot.slane %v283, %v287
    %v289 = vmul.f32 %v288, %v284
    %s290 = scalar_lea.vmem [#allocation7], 216
    %291 = vst [vmem:[%s290] sm:$0xff] %v289
    %v292 = vld [vmem:[#allocation2 + $0x4] sm:$0x1]
    %v293 = vld [vmem:[%s256] sm:$0xff]
    %v294 = vlaneseq
    %v295 = vshrl.u32 %v294, 7
    %v296 = vsub.s32 0, %v295
    %v297 = vrot.slane %v292, %v296
    %v298 = vmul.f32 %v297, %v293
    %s299 = scalar_lea.vmem [#allocation7], 224
    %300 = vst [vmem:[%s299] sm:$0xff] %v298
    %v301 = vld [vmem:[#allocation2 + $0x5] sm:$0x1]
    %v302 = vld [vmem:[%s256] sm:$0xff]
    %v303 = vlaneseq
    %v304 = vshrl.u32 %v303, 7
    %v305 = vsub.s32 0, %v304
    %v306 = vrot.slane %v301, %v305
    %v307 = vmul.f32 %v306, %v302
    %s308 = scalar_lea.vmem [#allocation7], 232
    %309 = vst [vmem:[%s308] sm:$0xff] %v307
    %v310 = vld [vmem:[#allocation2 + $0x6] sm:$0x1]
    %v311 = vld [vmem:[%s256] sm:$0xff]
    %v312 = vlaneseq
    %v313 = vshrl.u32 %v312, 7
    %v314 = vsub.s32 0, %v313
    %v315 = vrot.slane %v310, %v314
    %v316 = vmul.f32 %v315, %v311
    %s317 = scalar_lea.vmem [#allocation7], 240
    %318 = vst [vmem:[%s317] sm:$0xff] %v316
    %v319 = vld [vmem:[#allocation2 + $0x7] sm:$0x1]
    %v320 = vld [vmem:[%s256] sm:$0xff]
    %v321 = vlaneseq
    %v322 = vshrl.u32 %v321, 7
    %v323 = vsub.s32 0, %v322
    %v324 = vrot.slane %v319, %v323
    %v325 = vmul.f32 %v324, %v320
    %s326 = scalar_lea.vmem [#allocation7], 248
    %327 = vst [vmem:[%s326] sm:$0xff] %v325
    %v328 = vld [vmem:[#allocation2] sm:$0x1]
    %s329 = scalar_lea.vmem [#allocation5], 32
    %v330 = vld [vmem:[%s329] sm:$0xff]
    %v331 = vlaneseq
    %v332 = vshrl.u32 %v331, 7
    %v333 = vsub.s32 0, %v332
    %v334 = vrot.slane %v328, %v333
    %v335 = vmul.f32 %v334, %v330
    %s336 = scalar_lea.vmem [#allocation7], 256
    %337 = vst [vmem:[%s336] sm:$0xff] %v335
    %v338 = vld [vmem:[#allocation2 + $0x1] sm:$0x1]
    %v339 = vld [vmem:[%s329] sm:$0xff]
    %v340 = vlaneseq
    %v341 = vshrl.u32 %v340, 7
    %v342 = vsub.s32 0, %v341
    %v343 = vrot.slane %v338, %v342
    %v344 = vmul.f32 %v343, %v339
    %s345 = scalar_lea.vmem [#allocation7], 264
    %346 = vst [vmem:[%s345] sm:$0xff] %v344
    %v347 = vld [vmem:[#allocation2 + $0x2] sm:$0x1]
    %v348 = vld [vmem:[%s329] sm:$0xff]
    %v349 = vlaneseq
    %v350 = vshrl.u32 %v349, 7
    %v351 = vsub.s32 0, %v350
    %v352 = vrot.slane %v347, %v351
    %v353 = vmul.f32 %v352, %v348
    %s354 = scalar_lea.vmem [#allocation7], 272
    %355 = vst [vmem:[%s354] sm:$0xff] %v353
    %v356 = vld [vmem:[#allocation2 + $0x3] sm:$0x1]
    %v357 = vld [vmem:[%s329] sm:$0xff]
    %v358 = vlaneseq
    %v359 = vshrl.u32 %v358, 7
    %v360 = vsub.s32 0, %v359
    %v361 = vrot.slane %v356, %v360
    %v362 = vmul.f32 %v361, %v357
    %s363 = scalar_lea.vmem [#allocation7], 280
    %364 = vst [vmem:[%s363] sm:$0xff] %v362
    %v365 = vld [vmem:[#allocation2 + $0x4] sm:$0x1]
    %v366 = vld [vmem:[%s329] sm:$0xff]
    %v367 = vlaneseq
    %v368 = vshrl.u32 %v367, 7
    %v369 = vsub.s32 0, %v368
    %v370 = vrot.slane %v365, %v369
    %v371 = vmul.f32 %v370, %v366
    %s372 = scalar_lea.vmem [#allocation7], 288
    %373 = vst [vmem:[%s372] sm:$0xff] %v371
    %v374 = vld [vmem:[#allocation2 + $0x5] sm:$0x1]
    %v375 = vld [vmem:[%s329] sm:$0xff]
    %v376 = vlaneseq
    %v377 = vshrl.u32 %v376, 7
    %v378 = vsub.s32 0, %v377
    %v379 = vrot.slane %v374, %v378
    %v380 = vmul.f32 %v379, %v375
    %s381 = scalar_lea.vmem [#allocation7], 296
    %382 = vst [vmem:[%s381] sm:$0xff] %v380
    %v383 = vld [vmem:[#allocation2 + $0x6] sm:$0x1]
    %v384 = vld [vmem:[%s329] sm:$0xff]
    %v385 = vlaneseq
    %v386 = vshrl.u32 %v385, 7
    %v387 = vsub.s32 0, %v386
    %v388 = vrot.slane %v383, %v387
    %v389 = vmul.f32 %v388, %v384
    %s390 = scalar_lea.vmem [#allocation7], 304
    %391 = vst [vmem:[%s390] sm:$0xff] %v389
    %v392 = vld [vmem:[#allocation2 + $0x7] sm:$0x1]
    %v393 = vld [vmem:[%s329] sm:$0xff]
    %v394 = vlaneseq
    %v395 = vshrl.u32 %v394, 7
    %v396 = vsub.s32 0, %v395
    %v397 = vrot.slane %v392, %v396
    %v398 = vmul.f32 %v397, %v393
    %s399 = scalar_lea.vmem [#allocation7], 312
    %400 = vst [vmem:[%s399] sm:$0xff] %v398
    %v401 = vld [vmem:[#allocation2] sm:$0x1]
    %s402 = scalar_lea.vmem [#allocation5], 40
    %v403 = vld [vmem:[%s402] sm:$0xff]
    %v404 = vlaneseq
    %v405 = vshrl.u32 %v404, 7
    %v406 = vsub.s32 0, %v405
    %v407 = vrot.slane %v401, %v406
    %v408 = vmul.f32 %v407, %v403
    %s409 = scalar_lea.vmem [#allocation7], 320
    %410 = vst [vmem:[%s409] sm:$0xff] %v408
    %v411 = vld [vmem:[#allocation2 + $0x1] sm:$0x1]
    %v412 = vld [vmem:[%s402] sm:$0xff]
    %v413 = vlaneseq
    %v414 = vshrl.u32 %v413, 7
    %v415 = vsub.s32 0, %v414
    %v416 = vrot.slane %v411, %v415
    %v417 = vmul.f32 %v416, %v412
    %s418 = scalar_lea.vmem [#allocation7], 328
    %419 = vst [vmem:[%s418] sm:$0xff] %v417
    %v420 = vld [vmem:[#allocation2 + $0x2] sm:$0x1]
    %v421 = vld [vmem:[%s402] sm:$0xff]
    %v422 = vlaneseq
    %v423 = vshrl.u32 %v422, 7
    %v424 = vsub.s32 0, %v423
    %v425 = vrot.slane %v420, %v424
    %v426 = vmul.f32 %v425, %v421
    %s427 = scalar_lea.vmem [#allocation7], 336
    %428 = vst [vmem:[%s427] sm:$0xff] %v426
    %v429 = vld [vmem:[#allocation2 + $0x3] sm:$0x1]
    %v430 = vld [vmem:[%s402] sm:$0xff]
    %v431 = vlaneseq
    %v432 = vshrl.u32 %v431, 7
    %v433 = vsub.s32 0, %v432
    %v434 = vrot.slane %v429, %v433
    %v435 = vmul.f32 %v434, %v430
    %s436 = scalar_lea.vmem [#allocation7], 344
    %437 = vst [vmem:[%s436] sm:$0xff] %v435
    %v438 = vld [vmem:[#allocation2 + $0x4] sm:$0x1]
    %v439 = vld [vmem:[%s402] sm:$0xff]
    %v440 = vlaneseq
    %v441 = vshrl.u32 %v440, 7
    %v442 = vsub.s32 0, %v441
    %v443 = vrot.slane %v438, %v442
    %v444 = vmul.f32 %v443, %v439
    %s445 = scalar_lea.vmem [#allocation7], 352
    %446 = vst [vmem:[%s445] sm:$0xff] %v444
    %v447 = vld [vmem:[#allocation2 + $0x5] sm:$0x1]
    %v448 = vld [vmem:[%s402] sm:$0xff]
    %v449 = vlaneseq
    %v450 = vshrl.u32 %v449, 7
    %v451 = vsub.s32 0, %v450
    %v452 = vrot.slane %v447, %v451
    %v453 = vmul.f32 %v452, %v448
    %s454 = scalar_lea.vmem [#allocation7], 360
    %455 = vst [vmem:[%s454] sm:$0xff] %v453
    %v456 = vld [vmem:[#allocation2 + $0x6] sm:$0x1]
    %v457 = vld [vmem:[%s402] sm:$0xff]
    %v458 = vlaneseq
    %v459 = vshrl.u32 %v458, 7
    %v460 = vsub.s32 0, %v459
    %v461 = vrot.slane %v456, %v460
    %v462 = vmul.f32 %v461, %v457
    %s463 = scalar_lea.vmem [#allocation7], 368
    %464 = vst [vmem:[%s463] sm:$0xff] %v462
    %v465 = vld [vmem:[#allocation2 + $0x7] sm:$0x1]
    %v466 = vld [vmem:[%s402] sm:$0xff]
    %v467 = vlaneseq
    %v468 = vshrl.u32 %v467, 7
    %v469 = vsub.s32 0, %v468
    %v470 = vrot.slane %v465, %v469
    %v471 = vmul.f32 %v470, %v466
    %s472 = scalar_lea.vmem [#allocation7], 376
    %473 = vst [vmem:[%s472] sm:$0xff] %v471
    %v474 = vld [vmem:[#allocation2] sm:$0x1]
    %s475 = scalar_lea.vmem [#allocation5], 48
    %v476 = vld [vmem:[%s475] sm:$0xff]
    %v477 = vlaneseq
    %v478 = vshrl.u32 %v477, 7
    %v479 = vsub.s32 0, %v478
    %v480 = vrot.slane %v474, %v479
    %v481 = vmul.f32 %v480, %v476
    %s482 = scalar_lea.vmem [#allocation7], 384
    %483 = vst [vmem:[%s482] sm:$0xff] %v481
    %v484 = vld [vmem:[#allocation2 + $0x1] sm:$0x1]
    %v485 = vld [vmem:[%s475] sm:$0xff]
    %v486 = vlaneseq
    %v487 = vshrl.u32 %v486, 7
    %v488 = vsub.s32 0, %v487
    %v489 = vrot.slane %v484, %v488
    %v490 = vmul.f32 %v489, %v485
    %s491 = scalar_lea.vmem [#allocation7], 392
    %492 = vst [vmem:[%s491] sm:$0xff] %v490
    %v493 = vld [vmem:[#allocation2 + $0x2] sm:$0x1]
    %v494 = vld [vmem:[%s475] sm:$0xff]
    %v495 = vlaneseq
    %v496 = vshrl.u32 %v495, 7
    %v497 = vsub.s32 0, %v496
    %v498 = vrot.slane %v493, %v497
    %v499 = vmul.f32 %v498, %v494
    %s500 = scalar_lea.vmem [#allocation7], 400
    %501 = vst [vmem:[%s500] sm:$0xff] %v499
    %v502 = vld [vmem:[#allocation2 + $0x3] sm:$0x1]
    %v503 = vld [vmem:[%s475] sm:$0xff]
    %v504 = vlaneseq
    %v505 = vshrl.u32 %v504, 7
    %v506 = vsub.s32 0, %v505
    %v507 = vrot.slane %v502, %v506
    %v508 = vmul.f32 %v507, %v503
    %s509 = scalar_lea.vmem [#allocation7], 408
    %510 = vst [vmem:[%s509] sm:$0xff] %v508
    %v511 = vld [vmem:[#allocation2 + $0x4] sm:$0x1]
    %v512 = vld [vmem:[%s475] sm:$0xff]
    %v513 = vlaneseq
    %v514 = vshrl.u32 %v513, 7
    %v515 = vsub.s32 0, %v514
    %v516 = vrot.slane %v511, %v515
    %v517 = vmul.f32 %v516, %v512
    %s518 = scalar_lea.vmem [#allocation7], 416
    %519 = vst [vmem:[%s518] sm:$0xff] %v517
    %v520 = vld [vmem:[#allocation2 + $0x5] sm:$0x1]
    %v521 = vld [vmem:[%s475] sm:$0xff]
    %v522 = vlaneseq
    %v523 = vshrl.u32 %v522, 7
    %v524 = vsub.s32 0, %v523
    %v525 = vrot.slane %v520, %v524
    %v526 = vmul.f32 %v525, %v521
    %s527 = scalar_lea.vmem [#allocation7], 424
    %528 = vst [vmem:[%s527] sm:$0xff] %v526
    %v529 = vld [vmem:[#allocation2 + $0x6] sm:$0x1]
    %v530 = vld [vmem:[%s475] sm:$0xff]
    %v531 = vlaneseq
    %v532 = vshrl.u32 %v531, 7
    %v533 = vsub.s32 0, %v532
    %v534 = vrot.slane %v529, %v533
    %v535 = vmul.f32 %v534, %v530
    %s536 = scalar_lea.vmem [#allocation7], 432
    %537 = vst [vmem:[%s536] sm:$0xff] %v535
    %v538 = vld [vmem:[#allocation2 + $0x7] sm:$0x1]
    %v539 = vld [vmem:[%s475] sm:$0xff]
    %v540 = vlaneseq
    %v541 = vshrl.u32 %v540, 7
    %v542 = vsub.s32 0, %v541
    %v543 = vrot.slane %v538, %v542
    %v544 = vmul.f32 %v543, %v539
    %s545 = scalar_lea.vmem [#allocation7], 440
    %546 = vst [vmem:[%s545] sm:$0xff] %v544
    %v547 = vld [vmem:[#allocation2] sm:$0x1]
    %s548 = scalar_lea.vmem [#allocation5], 56
    %v549 = vld [vmem:[%s548] sm:$0xff]
    %v550 = vlaneseq
    %v551 = vshrl.u32 %v550, 7
    %v552 = vsub.s32 0, %v551
    %v553 = vrot.slane %v547, %v552
    %v554 = vmul.f32 %v553, %v549
    %s555 = scalar_lea.vmem [#allocation7], 448
    %556 = vst [vmem:[%s555] sm:$0xff] %v554
    %v557 = vld [vmem:[#allocation2 + $0x1] sm:$0x1]
    %v558 = vld [vmem:[%s548] sm:$0xff]
    %v559 = vlaneseq
    %v560 = vshrl.u32 %v559, 7
    %v561 = vsub.s32 0, %v560
    %v562 = vrot.slane %v557, %v561
    %v563 = vmul.f32 %v562, %v558
    %s564 = scalar_lea.vmem [#allocation7], 456
    %565 = vst [vmem:[%s564] sm:$0xff] %v563
    %v566 = vld [vmem:[#allocation2 + $0x2] sm:$0x1]
    %v567 = vld [vmem:[%s548] sm:$0xff]
    %v568 = vlaneseq
    %v569 = vshrl.u32 %v568, 7
    %v570 = vsub.s32 0, %v569
    %v571 = vrot.slane %v566, %v570
    %v572 = vmul.f32 %v571, %v567
    %s573 = scalar_lea.vmem [#allocation7], 464
    %574 = vst [vmem:[%s573] sm:$0xff] %v572
    %v575 = vld [vmem:[#allocation2 + $0x3] sm:$0x1]
    %v576 = vld [vmem:[%s548] sm:$0xff]
    %v577 = vlaneseq
    %v578 = vshrl.u32 %v577, 7
    %v579 = vsub.s32 0, %v578
    %v580 = vrot.slane %v575, %v579
    %v581 = vmul.f32 %v580, %v576
    %s582 = scalar_lea.vmem [#allocation7], 472
    %583 = vst [vmem:[%s582] sm:$0xff] %v581
    %v584 = vld [vmem:[#allocation2 + $0x4] sm:$0x1]
    %v585 = vld [vmem:[%s548] sm:$0xff]
    %v586 = vlaneseq
    %v587 = vshrl.u32 %v586, 7
    %v588 = vsub.s32 0, %v587
    %v589 = vrot.slane %v584, %v588
    %v590 = vmul.f32 %v589, %v585
    %s591 = scalar_lea.vmem [#allocation7], 480
    %592 = vst [vmem:[%s591] sm:$0xff] %v590
    %v593 = vld [vmem:[#allocation2 + $0x5] sm:$0x1]
    %v594 = vld [vmem:[%s548] sm:$0xff]
    %v595 = vlaneseq
    %v596 = vshrl.u32 %v595, 7
    %v597 = vsub.s32 0, %v596
    %v598 = vrot.slane %v593, %v597
    %v599 = vmul.f32 %v598, %v594
    %s600 = scalar_lea.vmem [#allocation7], 488
    %601 = vst [vmem:[%s600] sm:$0xff] %v599
    %v602 = vld [vmem:[#allocation2 + $0x6] sm:$0x1]
    %v603 = vld [vmem:[%s548] sm:$0xff]
    %v604 = vlaneseq
    %v605 = vshrl.u32 %v604, 7
    %v606 = vsub.s32 0, %v605
    %v607 = vrot.slane %v602, %v606
    %v608 = vmul.f32 %v607, %v603
    %s609 = scalar_lea.vmem [#allocation7], 496
    %610 = vst [vmem:[%s609] sm:$0xff] %v608
    %v611 = vld [vmem:[#allocation2 + $0x7] sm:$0x1]
    %v612 = vld [vmem:[%s548] sm:$0xff]
    %v613 = vlaneseq
    %v614 = vshrl.u32 %v613, 7
    %v615 = vsub.s32 0, %v614
    %v616 = vrot.slane %v611, %v615
    %v617 = vmul.f32 %v616, %v612
    %s618 = scalar_lea.vmem [#allocation7], 504
    %619 = vst [vmem:[%s618] sm:$0xff] %v617
    %v620 = vld [vmem:[#allocation2] sm:$0x1]
    %s621 = scalar_lea.vmem [#allocation5], 64
    %v622 = vld [vmem:[%s621] sm:$0xff]
    %v623 = vlaneseq
    %v624 = vshrl.u32 %v623, 7
    %v625 = vsub.s32 0, %v624
    %v626 = vrot.slane %v620, %v625
    %v627 = vmul.f32 %v626, %v622
    %s628 = scalar_lea.vmem [#allocation7], 512
    %629 = vst [vmem:[%s628] sm:$0xff] %v627
    %v630 = vld [vmem:[#allocation2 + $0x1] sm:$0x1]
    %v631 = vld [vmem:[%s621] sm:$0xff]
    %v632 = vlaneseq
    %v633 = vshrl.u32 %v632, 7
    %v634 = vsub.s32 0, %v633
    %v635 = vrot.slane %v630, %v634
    %v636 = vmul.f32 %v635, %v631
    %s637 = scalar_lea.vmem [#allocation7], 520
    %638 = vst [vmem:[%s637] sm:$0xff] %v636
    %v639 = vld [vmem:[#allocation2 + $0x2] sm:$0x1]
    %v640 = vld [vmem:[%s621] sm:$0xff]
    %v641 = vlaneseq
    %v642 = vshrl.u32 %v641, 7
    %v643 = vsub.s32 0, %v642
    %v644 = vrot.slane %v639, %v643
    %v645 = vmul.f32 %v644, %v640
    %s646 = scalar_lea.vmem [#allocation7], 528
    %647 = vst [vmem:[%s646] sm:$0xff] %v645
    %v648 = vld [vmem:[#allocation2 + $0x3] sm:$0x1]
    %v649 = vld [vmem:[%s621] sm:$0xff]
    %v650 = vlaneseq
    %v651 = vshrl.u32 %v650, 7
    %v652 = vsub.s32 0, %v651
    %v653 = vrot.slane %v648, %v652
    %v654 = vmul.f32 %v653, %v649
    %s655 = scalar_lea.vmem [#allocation7], 536
    %656 = vst [vmem:[%s655] sm:$0xff] %v654
    %v657 = vld [vmem:[#allocation2 + $0x4] sm:$0x1]
    %v658 = vld [vmem:[%s621] sm:$0xff]
    %v659 = vlaneseq
    %v660 = vshrl.u32 %v659, 7
    %v661 = vsub.s32 0, %v660
    %v662 = vrot.slane %v657, %v661
    %v663 = vmul.f32 %v662, %v658
    %s664 = scalar_lea.vmem [#allocation7], 544
    %665 = vst [vmem:[%s664] sm:$0xff] %v663
    %v666 = vld [vmem:[#allocation2 + $0x5] sm:$0x1]
    %v667 = vld [vmem:[%s621] sm:$0xff]
    %v668 = vlaneseq
    %v669 = vshrl.u32 %v668, 7
    %v670 = vsub.s32 0, %v669
    %v671 = vrot.slane %v666, %v670
    %v672 = vmul.f32 %v671, %v667
    %s673 = scalar_lea.vmem [#allocation7], 552
    %674 = vst [vmem:[%s673] sm:$0xff] %v672
    %v675 = vld [vmem:[#allocation2 + $0x6] sm:$0x1]
    %v676 = vld [vmem:[%s621] sm:$0xff]
    %v677 = vlaneseq
    %v678 = vshrl.u32 %v677, 7
    %v679 = vsub.s32 0, %v678
    %v680 = vrot.slane %v675, %v679
    %v681 = vmul.f32 %v680, %v676
    %s682 = scalar_lea.vmem [#allocation7], 560
    %683 = vst [vmem:[%s682] sm:$0xff] %v681
    %v684 = vld [vmem:[#allocation2 + $0x7] sm:$0x1]
    %v685 = vld [vmem:[%s621] sm:$0xff]
    %v686 = vlaneseq
    %v687 = vshrl.u32 %v686, 7
    %v688 = vsub.s32 0, %v687
    %v689 = vrot.slane %v684, %v688
    %v690 = vmul.f32 %v689, %v685
    %s691 = scalar_lea.vmem [#allocation7], 568
    %692 = vst [vmem:[%s691] sm:$0xff] %v690
    // Predicated region
    $region18: #{tpu_custom_call.1} parent=1 // pred_check
      _
    $region19: #{tpu_custom_call.1} parent=1 // pred_check_branch
      %694 = sbr.rel (0) target = $region21
    $region20: #{tpu_custom_call.1} parent=1 // pred_region
      %s696 = ssub.s32 9216, 9216
      %697 = vsyncadd [#allocation4], %s696
      %s698 = sshll.u32 [#allocation7], 4
      %s699 = int_to_ptr.vmem [resolvable:$true] %s698
      %704 = dma.vmem_to_hbm [thread:$0]  %s699, 9216, %s2, [#allocation4], 128, 128, 8
    $region21: #{tpu_custom_call.1} parent=1 // pred_fallthru
      _
    // Predicated region
    $region22: #{tpu_custom_call.1} parent=1 // pred_check
      _
    $region23: #{tpu_custom_call.1} parent=1 // pred_check_branch
      %706 = sbr.rel (0) target = $region25
    $region24: #{tpu_custom_call.1} parent=1 // pred_region
      %707 = dma.done [#allocation4], 9216
    $region25: #{tpu_custom_call.1} parent=1 // pred_fallthru
      _
    %708 = vsyncpa [#allocation3], 1
    %709 = vsyncpa [#allocation6], 1
    %710 = vsyncpa [#allocation4], 1

</llo_original>
